<compile_context>
chip_gen: v6e
topology: v6e:2x2x1
jax: 0.10.0
libtpu: 0.0.40
codegen_flags: <defaults>
</compile_context>

<pallas_src>
import functools

import jax
import jax.numpy as jnp
from jax import lax
from jax.experimental import pallas as pl
from jax.experimental.pallas import tpu as pltpu

NEG_SLOPE = 0.2
BN_EPS = 1e-5
BIG = 1e30


def _leaky_relu(x):
    return jnp.where(x >= 0, x, NEG_SLOPE * x)


# --------------------------------------------------------------------------- #
# EdgeConv body (one batch element):
#   X (N, Cin) f32  ->  packed max/min planes (2N, Cout) bf16 + BN partials (2, Cout)
# --------------------------------------------------------------------------- #
def _edge_body(X, wcat_ref, planes_ref, stats_ref, *, k, cout):
    N = X.shape[0]

    # Pairwise squared distances (kept in f32 for stable kNN selection).
    # Gram via dot_general contracting axis 1 of both operands -> no X.T copy.
    sq = jnp.sum(X * X, axis=-1, keepdims=True)                         # (N, 1)
    gram = lax.dot_general(X, X, (((1,), (1,)), ((), ())),
                           preferred_element_type=jnp.float32)          # (N, N)
    D = sq + sq.T - 2.0 * gram

    # Feature transform: ONE bf16 MXU call,  [G | S] = X @ [Wd | Ws - Wd].
    GS = jnp.dot(X.astype(jnp.bfloat16), wcat_ref[...],
                 preferred_element_type=jnp.float32)                    # (N, 2*cout)
    G = GS[:, :cout]
    S = GS[:, cout:]

    # kNN selection loop (cheap VPU/XLU): only k tiny (N,1) index vectors are kept
    # across iterations; the (N,N) one-hot of each step feeds only its Dw update.
    col = lax.broadcasted_iota(jnp.int32, (N, N), 1)
    sels = []
    Dw = D
    for _ in range(k):                        # k is small & static
        mnv = jnp.min(Dw, axis=-1, keepdims=True)
        # deterministic tie-break: smallest index among equal distances
        sel = jnp.min(jnp.where(Dw <= mnv, col, N), axis=-1, keepdims=True)
        Dw = jnp.where(col == sel, jnp.float32(BIG), Dw)
        sels.append(sel)
    sel_all = jnp.concatenate(sels, axis=0)                             # (k*N, 1)

    # Single stacked gather matmul: (k*N, N) @ (N, cout) on the MXU (bf16, f32 acc).
    col_k = lax.broadcasted_iota(jnp.int32, (k * N, N), 1)
    onehot = (col_k == sel_all).astype(jnp.bfloat16)
    gath = jnp.dot(onehot, G.astype(jnp.bfloat16),
                   preferred_element_type=jnp.float32)                  # (k*N, cout)
    full = gath + jnp.concatenate([S] * k, axis=0)                      # (k*N, cout)

    # BN2d partial statistics: 2 cross-sublane reductions total (packed output).
    stats_ref[0, 0:1, :] = jnp.sum(full, axis=0, keepdims=True)
    stats_ref[0, 1:2, :] = jnp.sum(full * full, axis=0, keepdims=True)

    # Running max / min over the k neighbors via static sublane-aligned slices.
    run_max = full[0:N]
    run_min = full[0:N]
    for j in range(1, k):
        blk = full[j * N:(j + 1) * N]
        run_max = jnp.maximum(run_max, blk)
        run_min = jnp.minimum(run_min, blk)

    planes_ref[0, 0:N, :] = run_max.astype(jnp.bfloat16)
    planes_ref[0, N:2 * N, :] = run_min.astype(jnp.bfloat16)


def edge_kernel_first(x_ref, wcat_ref, planes_ref, stats_ref, *, k, cout):
    _edge_body(x_ref[0], wcat_ref, planes_ref, stats_ref, k=k, cout=cout)


def edge_kernel_next(pin_ref, scale_ref, shift_ref, wcat_ref, planes_ref, stats_ref,
                     *, k, cout):
    # Previous layer's BN + LeakyReLU + max-over-k are fused here (sign-aware
    # max/min plane selection), so no intermediate activation hits HBM.
    P = pin_ref[0]                        # (2N, Cin) bf16 packed [max ; min] planes
    N = P.shape[0] // 2
    sc = scale_ref[...]                   # (1, Cin)
    sh = shift_ref[...]
    X = _leaky_relu(jnp.where(sc >= 0.0, sc * P[0:N], sc * P[N:2 * N]) + sh)
    _edge_body(X, wcat_ref, planes_ref, stats_ref, k=k, cout=cout)


# --------------------------------------------------------------------------- #
# Head: (fused EdgeConv3 BN+ReLU+max) -> Conv1d(1x1) -> LeakyReLU, emitting only
# per-batch sum / sumsq / max / min over N as ONE packed (4, half) block.
# --------------------------------------------------------------------------- #
def head_kernel(pin_ref, scale_ref, shift_ref, w_ref, b_ref, out_ref):
    P = pin_ref[0]
    N = P.shape[0] // 2
    sc = scale_ref[...]
    sh = shift_ref[...]
    X = _leaky_relu(jnp.where(sc >= 0.0, sc * P[0:N], sc * P[N:2 * N]) + sh)
    y = jnp.dot(X.astype(jnp.bfloat16), w_ref[...],
                preferred_element_type=jnp.float32) + b_ref[...]
    y = _leaky_relu(y)
    out_ref[0, 0:1, :] = jnp.sum(y, axis=0, keepdims=True)
    out_ref[0, 1:2, :] = jnp.sum(y * y, axis=0, keepdims=True)
    out_ref[0, 2:3, :] = jnp.max(y, axis=0, keepdims=True)
    out_ref[0, 3:4, :] = jnp.min(y, axis=0, keepdims=True)


# --------------------------------------------------------------------------- #
# Wrappers
# --------------------------------------------------------------------------- #
def _edgeconv(x_or_planes, wcat, k, cout, scale=None, shift=None):
    first = scale is None
    if first:
        B, N, C = x_or_planes.shape
        kern = functools.partial(edge_kernel_first, k=k, cout=cout)
        in_specs = [
            pl.BlockSpec((1, N, C), lambda b: (b, 0, 0)),
            pl.BlockSpec((C, 2 * cout), lambda b: (0, 0)),
        ]
        args = (x_or_planes, wcat)
    else:
        B, twoN, C = x_or_planes.shape
        N = twoN // 2
        kern = functools.partial(edge_kernel_next, k=k, cout=cout)
        in_specs = [
            pl.BlockSpec((1, 2 * N, C), lambda b: (b, 0, 0)),
            pl.BlockSpec((1, C), lambda b: (0, 0)),
            pl.BlockSpec((1, C), lambda b: (0, 0)),
            pl.BlockSpec((C, 2 * cout), lambda b: (0, 0)),
        ]
        args = (x_or_planes, scale, shift, wcat)

    planes, stats = pl.pallas_call(
        kern,
        grid=(B,),
        in_specs=in_specs,
        out_specs=[
            pl.BlockSpec((1, 2 * N, cout), lambda b: (b, 0, 0)),
            pl.BlockSpec((1, 2, cout), lambda b: (b, 0, 0)),
        ],
        out_shape=[
            jax.ShapeDtypeStruct((B, 2 * N, cout), jnp.bfloat16),
            jax.ShapeDtypeStruct((B, 2, cout), jnp.float32),
        ],
        compiler_params=pltpu.CompilerParams(dimension_semantics=("parallel",)),
    )(*args)
    return planes, stats


def _head(planes, scale, shift, w_bf16, bias):
    B, twoN, C = planes.shape
    half = w_bf16.shape[1]
    return pl.pallas_call(
        head_kernel,
        grid=(B,),
        in_specs=[
            pl.BlockSpec((1, twoN, C), lambda b: (b, 0, 0)),
            pl.BlockSpec((1, C), lambda b: (0, 0)),
            pl.BlockSpec((1, C), lambda b: (0, 0)),
            pl.BlockSpec((C, half), lambda b: (0, 0)),
            pl.BlockSpec((1, half), lambda b: (0, 0)),
        ],
        out_specs=pl.BlockSpec((1, 4, half), lambda b: (b, 0, 0)),
        out_shape=jax.ShapeDtypeStruct((B, 4, half), jnp.float32),
        compiler_params=pltpu.CompilerParams(dimension_semantics=("parallel",)),
    )(planes, scale, shift, w_bf16, bias[None, :])


def _bn_affine(stats, count, gamma, beta):
    """Per-channel scale/shift from packed (B, 2, C) partial sums (training-mode BN)."""
    tot = jnp.sum(stats, axis=0)                                  # (2, C)
    mean = tot[0] / count
    var = jnp.maximum(tot[1] / count - mean * mean, 0.0)          # guard f32 cancellation
    scale = gamma * lax.rsqrt(var + BN_EPS)
    shift = beta - mean * scale
    return scale[None, :], shift[None, :]


def motion_detect_module(x_bcn, params, k=5):
    """x_bcn: (B, in_channel, N) like the PyTorch module. Returns (B, out_channel, 1)."""
    x = jnp.transpose(x_bcn, (0, 2, 1)).astype(jnp.float32)       # -> (B, N, C)
    B, N, _ = x.shape
    assert N % 8 == 0 and k <= N

    planes = None
    scale = shift = None
    for li, p in enumerate(params["edge"]):
        cout = p["wd"].shape[1]
        wcat = jnp.concatenate([p["wd"], p["ws"] - p["wd"]], axis=1).astype(jnp.bfloat16)
        if li == 0:
            planes, stats = _edgeconv(x, wcat, k, cout)
        else:
            planes, stats = _edgeconv(planes, wcat, k, cout, scale, shift)
        scale, shift = _bn_affine(stats, float(B * N * k), p["gamma"], p["beta"])

    hp = params["head"]
    hstats = _head(planes, scale, shift, hp["w"].astype(jnp.bfloat16), hp["b"])

    # Head epilogue: BN1d (training batch stats) on y = LReLU(conv) + adaptive pools.
    # BN is a per-channel affine, so max_n BN(y) = sc*max(y) (sc>=0) else sc*min(y),
    # and mean_n BN(y) = sc*mean(y) + sh -- exact reconstruction from the partials.
    count = float(B * N)
    ysum, yssq = hstats[:, 0], hstats[:, 1]
    ymax, ymin = hstats[:, 2], hstats[:, 3]
    mean = jnp.sum(ysum, axis=0) / count
    var = jnp.maximum(jnp.sum(yssq, axis=0) / count - mean * mean, 0.0)
    sc = hp["gamma"] * lax.rsqrt(var + BN_EPS)
    sh = hp["beta"] - mean * sc
    max_pool = jnp.where(sc >= 0.0, sc * ymax, sc * ymin) + sh    # (B, half)
    avg_pool = sc * (ysum / float(N)) + sh                        # (B, half)
    # cat((maxpool, avgpool), dim=1) -> (B, out_channel, 1)
    return jnp.concatenate([max_pool, avg_pool], axis=1)[..., None]


def init_params(key, in_channel, out_channel, k):
    dims = [(in_channel, 128), (128, 256), (256, 256)]
    params = {"edge": []}
    for cin, cout in dims:
        key, k1, k2 = jax.random.split(key, 3)
        params["edge"].append(dict(
            wd=0.1 * jax.random.normal(k1, (cin, cout), jnp.float32),
            ws=0.1 * jax.random.normal(k2, (cin, cout), jnp.float32),
            gamma=jnp.ones((cout,), jnp.float32),
            beta=jnp.zeros((cout,), jnp.float32),
        ))
    key, k1, k2 = jax.random.split(key, 3)
    half = out_channel // 2
    params["head"] = dict(
        w=0.1 * jax.random.normal(k1, (256, half), jnp.float32),
        b=0.01 * jax.random.normal(k2, (half,), jnp.float32),
        gamma=jnp.ones((half,), jnp.float32),
        beta=jnp.zeros((half,), jnp.float32),
    )
    return params


if __name__ == "__main__":
    B, in_channel, N = 2, 4, 16
    out_channel, k = 1024, 5

    key = jax.random.PRNGKey(0)
    key, xkey = jax.random.split(key)
    x = jax.random.normal(xkey, (B, in_channel, N), jnp.float32)   # (B, C_in, N)

    params = init_params(key, in_channel, out_channel, k)

    out = jax.jit(functools.partial(motion_detect_module, k=k))(x, params)
    out = jax.block_until_ready(out)

    assert out.shape == (B, out_channel, 1), out.shape
    assert bool(jnp.all(jnp.isfinite(out)))
    print("KERNEL_OK")
</pallas_src>

<mosaic_0001>
module attributes {stable_mosaic.version = 11 : i64} {
  func.func @edge_kernel_first(%arg0: i32, %arg1: memref<1x16x4xf32, #tpu.memory_space<vmem>>, %arg2: memref<4x256xbf16, #tpu.memory_space<vmem>>, %arg3: memref<1x32x128xbf16, #tpu.memory_space<vmem>>, %arg4: memref<1x2x128xf32, #tpu.memory_space<vmem>>) attributes {dimension_semantics = [#tpu.dimension_semantics<parallel>], iteration_bounds = array<i64: 2>, scalar_prefetch = 0 : i64, scratch_operands = 0 : i64, tpu.core_type = #tpu.core_type<tc>, window_params = [{transform_indices = @transform_0, window_bounds = array<i64: 1, 16, 4>}, {pipeline_mode = #tpu.pipeline_mode<synchronous>, transform_indices = @transform_1, window_bounds = array<i64: 4, 256>}, {transform_indices = @transform_2, window_bounds = array<i64: 1, 32, 128>}, {transform_indices = @transform_3, window_bounds = array<i64: 1, 2, 128>}]} {
    %c0 = arith.constant 0 : index
    %c0_0 = arith.constant 0 : index
    %c0_1 = arith.constant 0 : index
    %0 = vector.load %arg1[%c0, %c0_0, %c0_1] : memref<1x16x4xf32, #tpu.memory_space<vmem>>, vector<1x16x4xf32>
    %1 = vector.shape_cast %0 : vector<1x16x4xf32> to vector<16x4xf32>
    %2 = arith.mulf %1, %1 : vector<16x4xf32>
    %cst = arith.constant dense<0.000000e+00> : vector<16xf32>
    %3 = vector.multi_reduction <add>, %2, %cst [1] : vector<16x4xf32> to vector<16xf32>
    %4 = vector.shape_cast %3 : vector<16xf32> to vector<16x1xf32>
    %cst_2 = arith.constant dense<0.000000e+00> : vector<16x16xf32>
    %5 = tpu.matmul %1, %1, %cst_2 {dimension_numbers = #tpu.dot_dimension_numbers<[1], [1], [0], [0], [0, 0, 1, 0], [], []>} : vector<16x4xf32>, vector<16x4xf32>, vector<16x16xf32> -> vector<16x16xf32>
    %6 = tpu.transpose %4, [1, 0] : vector<16x1xf32> -> vector<1x16xf32>
    %7 = vector.broadcast %4 : vector<16x1xf32> to vector<16x16xf32>
    %8 = vector.broadcast %6 : vector<1x16xf32> to vector<16x16xf32>
    %9 = arith.addf %7, %8 : vector<16x16xf32>
    %cst_3 = arith.constant 2.000000e+00 : f32
    %10 = vector.broadcast %cst_3 : f32 to vector<16x16xf32>
    %11 = arith.mulf %10, %5 : vector<16x16xf32>
    %12 = arith.subf %9, %11 : vector<16x16xf32>
    %13 = arith.truncf %1 : vector<16x4xf32> to vector<16x4xbf16>
    %c0_4 = arith.constant 0 : index
    %c0_5 = arith.constant 0 : index
    %14 = vector.load %arg2[%c0_4, %c0_5] : memref<4x256xbf16, #tpu.memory_space<vmem>>, vector<4x256xbf16>
    %cst_6 = arith.constant dense<0.000000e+00> : vector<16x256xf32>
    %15 = tpu.matmul %13, %14, %cst_6 {dimension_numbers = #tpu.dot_dimension_numbers<[1], [0], [0], [1], [0, 0, 1, 1], [], []>} : vector<16x4xbf16>, vector<4x256xbf16>, vector<16x256xf32> -> vector<16x256xf32>
    %16 = vector.extract_strided_slice %15 {offsets = [0, 0], sizes = [16, 128], strides = [1, 1]} : vector<16x256xf32> to vector<16x128xf32>
    %17 = vector.extract_strided_slice %15 {offsets = [0, 128], sizes = [16, 128], strides = [1, 1]} : vector<16x256xf32> to vector<16x128xf32>
    %18 = tpu.iota {dimensions = array<i32: 1>} : vector<16x16xi32>
    %cst_7 = arith.constant dense<0x7F800000> : vector<16xf32>
    %19 = vector.multi_reduction <minimumf>, %12, %cst_7 [1] : vector<16x16xf32> to vector<16xf32>
    %20 = vector.shape_cast %19 : vector<16xf32> to vector<16x1xf32>
    %21 = vector.broadcast %20 : vector<16x1xf32> to vector<16x16xf32>
    %22 = arith.cmpf ole, %12, %21 : vector<16x16xf32>
    %c16_i32 = arith.constant 16 : i32
    %23 = vector.broadcast %c16_i32 : i32 to vector<16x16xi32>
    %24 = arith.select %22, %18, %23 : vector<16x16xi1>, vector<16x16xi32>
    %cst_8 = arith.constant dense<2147483647> : vector<16xi32>
    %25 = vector.multi_reduction <minsi>, %24, %cst_8 [1] : vector<16x16xi32> to vector<16xi32>
    %26 = vector.shape_cast %25 : vector<16xi32> to vector<16x1xi32>
    %27 = vector.broadcast %26 : vector<16x1xi32> to vector<16x16xi32>
    %28 = arith.cmpi eq, %18, %27 : vector<16x16xi32>
    %cst_9 = arith.constant 1.000000e+30 : f32
    %29 = vector.broadcast %cst_9 : f32 to vector<16x16xf32>
    %30 = arith.select %28, %29, %12 : vector<16x16xi1>, vector<16x16xf32>
    %cst_10 = arith.constant dense<0x7F800000> : vector<16xf32>
    %31 = vector.multi_reduction <minimumf>, %30, %cst_10 [1] : vector<16x16xf32> to vector<16xf32>
    %32 = vector.shape_cast %31 : vector<16xf32> to vector<16x1xf32>
    %33 = vector.broadcast %32 : vector<16x1xf32> to vector<16x16xf32>
    %34 = arith.cmpf ole, %30, %33 : vector<16x16xf32>
    %c16_i32_11 = arith.constant 16 : i32
    %35 = vector.broadcast %c16_i32_11 : i32 to vector<16x16xi32>
    %36 = arith.select %34, %18, %35 : vector<16x16xi1>, vector<16x16xi32>
    %cst_12 = arith.constant dense<2147483647> : vector<16xi32>
    %37 = vector.multi_reduction <minsi>, %36, %cst_12 [1] : vector<16x16xi32> to vector<16xi32>
    %38 = vector.shape_cast %37 : vector<16xi32> to vector<16x1xi32>
    %39 = vector.broadcast %38 : vector<16x1xi32> to vector<16x16xi32>
    %40 = arith.cmpi eq, %18, %39 : vector<16x16xi32>
    %cst_13 = arith.constant 1.000000e+30 : f32
    %41 = vector.broadcast %cst_13 : f32 to vector<16x16xf32>
    %42 = arith.select %40, %41, %30 : vector<16x16xi1>, vector<16x16xf32>
    %cst_14 = arith.constant dense<0x7F800000> : vector<16xf32>
    %43 = vector.multi_reduction <minimumf>, %42, %cst_14 [1] : vector<16x16xf32> to vector<16xf32>
    %44 = vector.shape_cast %43 : vector<16xf32> to vector<16x1xf32>
    %45 = vector.broadcast %44 : vector<16x1xf32> to vector<16x16xf32>
    %46 = arith.cmpf ole, %42, %45 : vector<16x16xf32>
    %c16_i32_15 = arith.constant 16 : i32
    %47 = vector.broadcast %c16_i32_15 : i32 to vector<16x16xi32>
    %48 = arith.select %46, %18, %47 : vector<16x16xi1>, vector<16x16xi32>
    %cst_16 = arith.constant dense<2147483647> : vector<16xi32>
    %49 = vector.multi_reduction <minsi>, %48, %cst_16 [1] : vector<16x16xi32> to vector<16xi32>
    %50 = vector.shape_cast %49 : vector<16xi32> to vector<16x1xi32>
    %51 = vector.broadcast %50 : vector<16x1xi32> to vector<16x16xi32>
    %52 = arith.cmpi eq, %18, %51 : vector<16x16xi32>
    %cst_17 = arith.constant 1.000000e+30 : f32
    %53 = vector.broadcast %cst_17 : f32 to vector<16x16xf32>
    %54 = arith.select %52, %53, %42 : vector<16x16xi1>, vector<16x16xf32>
    %cst_18 = arith.constant dense<0x7F800000> : vector<16xf32>
    %55 = vector.multi_reduction <minimumf>, %54, %cst_18 [1] : vector<16x16xf32> to vector<16xf32>
    %56 = vector.shape_cast %55 : vector<16xf32> to vector<16x1xf32>
    %57 = vector.broadcast %56 : vector<16x1xf32> to vector<16x16xf32>
    %58 = arith.cmpf ole, %54, %57 : vector<16x16xf32>
    %c16_i32_19 = arith.constant 16 : i32
    %59 = vector.broadcast %c16_i32_19 : i32 to vector<16x16xi32>
    %60 = arith.select %58, %18, %59 : vector<16x16xi1>, vector<16x16xi32>
    %cst_20 = arith.constant dense<2147483647> : vector<16xi32>
    %61 = vector.multi_reduction <minsi>, %60, %cst_20 [1] : vector<16x16xi32> to vector<16xi32>
    %62 = vector.shape_cast %61 : vector<16xi32> to vector<16x1xi32>
    %63 = vector.broadcast %62 : vector<16x1xi32> to vector<16x16xi32>
    %64 = arith.cmpi eq, %18, %63 : vector<16x16xi32>
    %cst_21 = arith.constant 1.000000e+30 : f32
    %65 = vector.broadcast %cst_21 : f32 to vector<16x16xf32>
    %66 = arith.select %64, %65, %54 : vector<16x16xi1>, vector<16x16xf32>
    %cst_22 = arith.constant dense<0x7F800000> : vector<16xf32>
    %67 = vector.multi_reduction <minimumf>, %66, %cst_22 [1] : vector<16x16xf32> to vector<16xf32>
    %68 = vector.shape_cast %67 : vector<16xf32> to vector<16x1xf32>
    %69 = vector.broadcast %68 : vector<16x1xf32> to vector<16x16xf32>
    %70 = arith.cmpf ole, %66, %69 : vector<16x16xf32>
    %c16_i32_23 = arith.constant 16 : i32
    %71 = vector.broadcast %c16_i32_23 : i32 to vector<16x16xi32>
    %72 = arith.select %70, %18, %71 : vector<16x16xi1>, vector<16x16xi32>
    %cst_24 = arith.constant dense<2147483647> : vector<16xi32>
    %73 = vector.multi_reduction <minsi>, %72, %cst_24 [1] : vector<16x16xi32> to vector<16xi32>
    %74 = vector.shape_cast %73 : vector<16xi32> to vector<16x1xi32>
    %75 = tpu.concatenate %26, %38, %50, %62, %74 in 0 : vector<16x1xi32>, vector<16x1xi32>, vector<16x1xi32>, vector<16x1xi32>, vector<16x1xi32> -> vector<80x1xi32>
    %76 = tpu.iota {dimensions = array<i32: 1>} : vector<80x16xi32>
    %77 = vector.broadcast %75 : vector<80x1xi32> to vector<80x16xi32>
    %78 = arith.cmpi eq, %76, %77 : vector<80x16xi32>
    %79 = arith.extui %78 : vector<80x16xi1> to vector<80x16xi32>
    %80 = arith.sitofp %79 : vector<80x16xi32> to vector<80x16xf32>
    %81 = arith.truncf %80 : vector<80x16xf32> to vector<80x16xbf16>
    %82 = arith.truncf %16 : vector<16x128xf32> to vector<16x128xbf16>
    %cst_25 = arith.constant dense<0.000000e+00> : vector<80x128xf32>
    %83 = tpu.matmul %81, %82, %cst_25 {dimension_numbers = #tpu.dot_dimension_numbers<[1], [0], [0], [1], [0, 0, 1, 1], [], []>} : vector<80x16xbf16>, vector<16x128xbf16>, vector<80x128xf32> -> vector<80x128xf32>
    %84 = tpu.concatenate %17, %17, %17, %17, %17 in 0 : vector<16x128xf32>, vector<16x128xf32>, vector<16x128xf32>, vector<16x128xf32>, vector<16x128xf32> -> vector<80x128xf32>
    %85 = arith.addf %83, %84 : vector<80x128xf32>
    %cst_26 = arith.constant dense<0.000000e+00> : vector<128xf32>
    %86 = vector.multi_reduction <add>, %85, %cst_26 [0] : vector<80x128xf32> to vector<128xf32>
    %87 = vector.shape_cast %86 : vector<128xf32> to vector<1x128xf32>
    %c0_27 = arith.constant 0 : index
    %c0_28 = arith.constant 0 : index
    %c0_29 = arith.constant 0 : index
    %88 = vector.load %arg4[%c0_27, %c0_28, %c0_29] : memref<1x2x128xf32, #tpu.memory_space<vmem>>, vector<1x1x128xf32>
    %89 = vector.shape_cast %88 : vector<1x1x128xf32> to vector<1x128xf32>
    %90 = vector.shape_cast %87 : vector<1x128xf32> to vector<1x1x128xf32>
    tpu.vector_store %arg4[%c0_27, %c0_28, %c0_29], %90 {strides = array<i32>} : memref<1x2x128xf32, #tpu.memory_space<vmem>>, vector<1x1x128xf32>,
    %91 = arith.mulf %85, %85 : vector<80x128xf32>
    %cst_30 = arith.constant dense<0.000000e+00> : vector<128xf32>
    %92 = vector.multi_reduction <add>, %91, %cst_30 [0] : vector<80x128xf32> to vector<128xf32>
    %93 = vector.shape_cast %92 : vector<128xf32> to vector<1x128xf32>
    %c0_31 = arith.constant 0 : index
    %c1 = arith.constant 1 : index
    %c0_32 = arith.constant 0 : index
    %94 = vector.load %arg4[%c0_31, %c1, %c0_32] : memref<1x2x128xf32, #tpu.memory_space<vmem>>, vector<1x1x128xf32>
    %95 = vector.shape_cast %94 : vector<1x1x128xf32> to vector<1x128xf32>
    %96 = vector.shape_cast %93 : vector<1x128xf32> to vector<1x1x128xf32>
    tpu.vector_store %arg4[%c0_31, %c1, %c0_32], %96 {strides = array<i32>} : memref<1x2x128xf32, #tpu.memory_space<vmem>>, vector<1x1x128xf32>,
    %97 = vector.extract_strided_slice %85 {offsets = [0, 0], sizes = [16, 128], strides = [1, 1]} : vector<80x128xf32> to vector<16x128xf32>
    %98 = vector.extract_strided_slice %85 {offsets = [0, 0], sizes = [16, 128], strides = [1, 1]} : vector<80x128xf32> to vector<16x128xf32>
    %99 = vector.extract_strided_slice %85 {offsets = [16, 0], sizes = [16, 128], strides = [1, 1]} : vector<80x128xf32> to vector<16x128xf32>
    %100 = arith.maximumf %97, %99 : vector<16x128xf32>
    %101 = arith.minimumf %98, %99 : vector<16x128xf32>
    %102 = vector.extract_strided_slice %85 {offsets = [32, 0], sizes = [16, 128], strides = [1, 1]} : vector<80x128xf32> to vector<16x128xf32>
    %103 = arith.maximumf %100, %102 : vector<16x128xf32>
    %104 = arith.minimumf %101, %102 : vector<16x128xf32>
    %105 = vector.extract_strided_slice %85 {offsets = [48, 0], sizes = [16, 128], strides = [1, 1]} : vector<80x128xf32> to vector<16x128xf32>
    %106 = arith.maximumf %103, %105 : vector<16x128xf32>
    %107 = arith.minimumf %104, %105 : vector<16x128xf32>
    %108 = vector.extract_strided_slice %85 {offsets = [64, 0], sizes = [16, 128], strides = [1, 1]} : vector<80x128xf32> to vector<16x128xf32>
    %109 = arith.maximumf %106, %108 : vector<16x128xf32>
    %110 = arith.minimumf %107, %108 : vector<16x128xf32>
    %111 = arith.truncf %109 : vector<16x128xf32> to vector<16x128xbf16>
    %c0_33 = arith.constant 0 : index
    %c0_34 = arith.constant 0 : index
    %c0_35 = arith.constant 0 : index
    %112 = vector.load %arg3[%c0_33, %c0_34, %c0_35] : memref<1x32x128xbf16, #tpu.memory_space<vmem>>, vector<1x16x128xbf16>
    %113 = vector.shape_cast %112 : vector<1x16x128xbf16> to vector<16x128xbf16>
    %114 = vector.shape_cast %111 : vector<16x128xbf16> to vector<1x16x128xbf16>
    tpu.vector_store %arg3[%c0_33, %c0_34, %c0_35], %114 {strides = array<i32>} : memref<1x32x128xbf16, #tpu.memory_space<vmem>>, vector<1x16x128xbf16>,
    %115 = arith.truncf %110 : vector<16x128xf32> to vector<16x128xbf16>
    %c0_36 = arith.constant 0 : index
    %c16 = arith.constant 16 : index
    %c0_37 = arith.constant 0 : index
    %116 = vector.load %arg3[%c0_36, %c16, %c0_37] : memref<1x32x128xbf16, #tpu.memory_space<vmem>>, vector<1x16x128xbf16>
    %117 = vector.shape_cast %116 : vector<1x16x128xbf16> to vector<16x128xbf16>
    %118 = vector.shape_cast %115 : vector<16x128xbf16> to vector<1x16x128xbf16>
    tpu.vector_store %arg3[%c0_36, %c16, %c0_37], %118 {strides = array<i32>} : memref<1x32x128xbf16, #tpu.memory_space<vmem>>, vector<1x16x128xbf16>,
    return
  }
  func.func @transform_0(%arg0: i32) -> (i32, i32, i32) {
    %c0_i32 = arith.constant 0 : i32
    %c0_i32_0 = arith.constant 0 : i32
    %c0_i32_1 = arith.constant 0 : i32
    return %arg0, %c0_i32, %c0_i32_0 : i32, i32, i32
  }
  func.func @transform_1(%arg0: i32) -> (i32, i32) {
    %c0_i32 = arith.constant 0 : i32
    %c0_i32_0 = arith.constant 0 : i32
    %c0_i32_1 = arith.constant 0 : i32
    return %c0_i32, %c0_i32_0 : i32, i32
  }
  func.func @transform_2(%arg0: i32) -> (i32, i32, i32) {
    %c0_i32 = arith.constant 0 : i32
    %c0_i32_0 = arith.constant 0 : i32
    %c0_i32_1 = arith.constant 0 : i32
    return %arg0, %c0_i32, %c0_i32_0 : i32, i32, i32
  }
  func.func @transform_3(%arg0: i32) -> (i32, i32, i32) {
    %c0_i32 = arith.constant 0 : i32
    %c0_i32_0 = arith.constant 0 : i32
    %c0_i32_1 = arith.constant 0 : i32
    return %arg0, %c0_i32, %c0_i32_0 : i32, i32, i32
  }
}

module attributes {stable_mosaic.version = 11 : i64} {
  func.func @edge_kernel_next(%arg0: i32, %arg1: memref<1x32x128xbf16, #tpu.memory_space<vmem>>, %arg2: memref<1x128xf32, #tpu.memory_space<vmem>>, %arg3: memref<1x128xf32, #tpu.memory_space<vmem>>, %arg4: memref<128x512xbf16, #tpu.memory_space<vmem>>, %arg5: memref<1x32x256xbf16, #tpu.memory_space<vmem>>, %arg6: memref<1x2x256xf32, #tpu.memory_space<vmem>>) attributes {dimension_semantics = [#tpu.dimension_semantics<parallel>], iteration_bounds = array<i64: 2>, scalar_prefetch = 0 : i64, scratch_operands = 0 : i64, tpu.core_type = #tpu.core_type<tc>, window_params = [{transform_indices = @transform_0, window_bounds = array<i64: 1, 32, 128>}, {pipeline_mode = #tpu.pipeline_mode<synchronous>, transform_indices = @transform_1, window_bounds = array<i64: 1, 128>}, {pipeline_mode = #tpu.pipeline_mode<synchronous>, transform_indices = @transform_2, window_bounds = array<i64: 1, 128>}, {pipeline_mode = #tpu.pipeline_mode<synchronous>, transform_indices = @transform_3, window_bounds = array<i64: 128, 512>}, {transform_indices = @transform_4, window_bounds = array<i64: 1, 32, 256>}, {transform_indices = @transform_5, window_bounds = array<i64: 1, 2, 256>}]} {
    %c0 = arith.constant 0 : index
    %c0_0 = arith.constant 0 : index
    %c0_1 = arith.constant 0 : index
    %0 = vector.load %arg1[%c0, %c0_0, %c0_1] : memref<1x32x128xbf16, #tpu.memory_space<vmem>>, vector<1x32x128xbf16>
    %1 = vector.shape_cast %0 : vector<1x32x128xbf16> to vector<32x128xbf16>
    %c0_2 = arith.constant 0 : index
    %c0_3 = arith.constant 0 : index
    %2 = vector.load %arg2[%c0_2, %c0_3] : memref<1x128xf32, #tpu.memory_space<vmem>>, vector<1x128xf32>
    %c0_4 = arith.constant 0 : index
    %c0_5 = arith.constant 0 : index
    %3 = vector.load %arg3[%c0_4, %c0_5] : memref<1x128xf32, #tpu.memory_space<vmem>>, vector<1x128xf32>
    %cst = arith.constant 0.000000e+00 : f32
    %4 = vector.broadcast %cst : f32 to vector<1x128xf32>
    %5 = arith.cmpf oge, %2, %4 : vector<1x128xf32>
    %6 = vector.extract_strided_slice %1 {offsets = [0, 0], sizes = [16, 128], strides = [1, 1]} : vector<32x128xbf16> to vector<16x128xbf16>
    %7 = arith.extf %6 : vector<16x128xbf16> to vector<16x128xf32>
    %8 = vector.broadcast %2 : vector<1x128xf32> to vector<16x128xf32>
    %9 = arith.mulf %8, %7 : vector<16x128xf32>
    %10 = vector.extract_strided_slice %1 {offsets = [16, 0], sizes = [16, 128], strides = [1, 1]} : vector<32x128xbf16> to vector<16x128xbf16>
    %11 = arith.extf %10 : vector<16x128xbf16> to vector<16x128xf32>
    %12 = vector.broadcast %2 : vector<1x128xf32> to vector<16x128xf32>
    %13 = arith.mulf %12, %11 : vector<16x128xf32>
    %14 = vector.shape_cast %5 : vector<1x128xi1> to vector<1x128xi1>
    %15 = vector.broadcast %14 : vector<1x128xi1> to vector<16x128xi1>
    %16 = arith.select %15, %9, %13 : vector<16x128xi1>, vector<16x128xf32>
    %17 = vector.broadcast %3 : vector<1x128xf32> to vector<16x128xf32>
    %18 = arith.addf %16, %17 : vector<16x128xf32>
    %cst_6 = arith.constant 0.000000e+00 : f32
    %19 = vector.broadcast %cst_6 : f32 to vector<16x128xf32>
    %20 = arith.cmpf oge, %18, %19 : vector<16x128xf32>
    %cst_7 = arith.constant 2.000000e-01 : f32
    %21 = vector.broadcast %cst_7 : f32 to vector<16x128xf32>
    %22 = arith.mulf %21, %18 : vector<16x128xf32>
    %23 = arith.select %20, %18, %22 : vector<16x128xi1>, vector<16x128xf32>
    %24 = arith.mulf %23, %23 : vector<16x128xf32>
    %cst_8 = arith.constant dense<0.000000e+00> : vector<16xf32>
    %25 = vector.multi_reduction <add>, %24, %cst_8 [1] : vector<16x128xf32> to vector<16xf32>
    %26 = vector.shape_cast %25 : vector<16xf32> to vector<16x1xf32>
    %cst_9 = arith.constant dense<0.000000e+00> : vector<16x16xf32>
    %27 = tpu.matmul %23, %23, %cst_9 {dimension_numbers = #tpu.dot_dimension_numbers<[1], [1], [0], [0], [0, 0, 1, 0], [], []>} : vector<16x128xf32>, vector<16x128xf32>, vector<16x16xf32> -> vector<16x16xf32>
    %28 = tpu.transpose %26, [1, 0] : vector<16x1xf32> -> vector<1x16xf32>
    %29 = vector.broadcast %26 : vector<16x1xf32> to vector<16x16xf32>
    %30 = vector.broadcast %28 : vector<1x16xf32> to vector<16x16xf32>
    %31 = arith.addf %29, %30 : vector<16x16xf32>
    %cst_10 = arith.constant 2.000000e+00 : f32
    %32 = vector.broadcast %cst_10 : f32 to vector<16x16xf32>
    %33 = arith.mulf %32, %27 : vector<16x16xf32>
    %34 = arith.subf %31, %33 : vector<16x16xf32>
    %35 = arith.truncf %23 : vector<16x128xf32> to vector<16x128xbf16>
    %c0_11 = arith.constant 0 : index
    %c0_12 = arith.constant 0 : index
    %36 = vector.load %arg4[%c0_11, %c0_12] : memref<128x512xbf16, #tpu.memory_space<vmem>>, vector<128x512xbf16>
    %cst_13 = arith.constant dense<0.000000e+00> : vector<16x512xf32>
    %37 = tpu.matmul %35, %36, %cst_13 {dimension_numbers = #tpu.dot_dimension_numbers<[1], [0], [0], [1], [0, 0, 1, 1], [], []>} : vector<16x128xbf16>, vector<128x512xbf16>, vector<16x512xf32> -> vector<16x512xf32>
    %38 = vector.extract_strided_slice %37 {offsets = [0, 0], sizes = [16, 256], strides = [1, 1]} : vector<16x512xf32> to vector<16x256xf32>
    %39 = vector.extract_strided_slice %37 {offsets = [0, 256], sizes = [16, 256], strides = [1, 1]} : vector<16x512xf32> to vector<16x256xf32>
    %40 = tpu.iota {dimensions = array<i32: 1>} : vector<16x16xi32>
    %cst_14 = arith.constant dense<0x7F800000> : vector<16xf32>
    %41 = vector.multi_reduction <minimumf>, %34, %cst_14 [1] : vector<16x16xf32> to vector<16xf32>
    %42 = vector.shape_cast %41 : vector<16xf32> to vector<16x1xf32>
    %43 = vector.broadcast %42 : vector<16x1xf32> to vector<16x16xf32>
    %44 = arith.cmpf ole, %34, %43 : vector<16x16xf32>
    %c16_i32 = arith.constant 16 : i32
    %45 = vector.broadcast %c16_i32 : i32 to vector<16x16xi32>
    %46 = arith.select %44, %40, %45 : vector<16x16xi1>, vector<16x16xi32>
    %cst_15 = arith.constant dense<2147483647> : vector<16xi32>
    %47 = vector.multi_reduction <minsi>, %46, %cst_15 [1] : vector<16x16xi32> to vector<16xi32>
    %48 = vector.shape_cast %47 : vector<16xi32> to vector<16x1xi32>
    %49 = vector.broadcast %48 : vector<16x1xi32> to vector<16x16xi32>
    %50 = arith.cmpi eq, %40, %49 : vector<16x16xi32>
    %cst_16 = arith.constant 1.000000e+30 : f32
    %51 = vector.broadcast %cst_16 : f32 to vector<16x16xf32>
    %52 = arith.select %50, %51, %34 : vector<16x16xi1>, vector<16x16xf32>
    %cst_17 = arith.constant dense<0x7F800000> : vector<16xf32>
    %53 = vector.multi_reduction <minimumf>, %52, %cst_17 [1] : vector<16x16xf32> to vector<16xf32>
    %54 = vector.shape_cast %53 : vector<16xf32> to vector<16x1xf32>
    %55 = vector.broadcast %54 : vector<16x1xf32> to vector<16x16xf32>
    %56 = arith.cmpf ole, %52, %55 : vector<16x16xf32>
    %c16_i32_18 = arith.constant 16 : i32
    %57 = vector.broadcast %c16_i32_18 : i32 to vector<16x16xi32>
    %58 = arith.select %56, %40, %57 : vector<16x16xi1>, vector<16x16xi32>
    %cst_19 = arith.constant dense<2147483647> : vector<16xi32>
    %59 = vector.multi_reduction <minsi>, %58, %cst_19 [1] : vector<16x16xi32> to vector<16xi32>
    %60 = vector.shape_cast %59 : vector<16xi32> to vector<16x1xi32>
    %61 = vector.broadcast %60 : vector<16x1xi32> to vector<16x16xi32>
    %62 = arith.cmpi eq, %40, %61 : vector<16x16xi32>
    %cst_20 = arith.constant 1.000000e+30 : f32
    %63 = vector.broadcast %cst_20 : f32 to vector<16x16xf32>
    %64 = arith.select %62, %63, %52 : vector<16x16xi1>, vector<16x16xf32>
    %cst_21 = arith.constant dense<0x7F800000> : vector<16xf32>
    %65 = vector.multi_reduction <minimumf>, %64, %cst_21 [1] : vector<16x16xf32> to vector<16xf32>
    %66 = vector.shape_cast %65 : vector<16xf32> to vector<16x1xf32>
    %67 = vector.broadcast %66 : vector<16x1xf32> to vector<16x16xf32>
    %68 = arith.cmpf ole, %64, %67 : vector<16x16xf32>
    %c16_i32_22 = arith.constant 16 : i32
    %69 = vector.broadcast %c16_i32_22 : i32 to vector<16x16xi32>
    %70 = arith.select %68, %40, %69 : vector<16x16xi1>, vector<16x16xi32>
    %cst_23 = arith.constant dense<2147483647> : vector<16xi32>
    %71 = vector.multi_reduction <minsi>, %70, %cst_23 [1] : vector<16x16xi32> to vector<16xi32>
    %72 = vector.shape_cast %71 : vector<16xi32> to vector<16x1xi32>
    %73 = vector.broadcast %72 : vector<16x1xi32> to vector<16x16xi32>
    %74 = arith.cmpi eq, %40, %73 : vector<16x16xi32>
    %cst_24 = arith.constant 1.000000e+30 : f32
    %75 = vector.broadcast %cst_24 : f32 to vector<16x16xf32>
    %76 = arith.select %74, %75, %64 : vector<16x16xi1>, vector<16x16xf32>
    %cst_25 = arith.constant dense<0x7F800000> : vector<16xf32>
    %77 = vector.multi_reduction <minimumf>, %76, %cst_25 [1] : vector<16x16xf32> to vector<16xf32>
    %78 = vector.shape_cast %77 : vector<16xf32> to vector<16x1xf32>
    %79 = vector.broadcast %78 : vector<16x1xf32> to vector<16x16xf32>
    %80 = arith.cmpf ole, %76, %79 : vector<16x16xf32>
    %c16_i32_26 = arith.constant 16 : i32
    %81 = vector.broadcast %c16_i32_26 : i32 to vector<16x16xi32>
    %82 = arith.select %80, %40, %81 : vector<16x16xi1>, vector<16x16xi32>
    %cst_27 = arith.constant dense<2147483647> : vector<16xi32>
    %83 = vector.multi_reduction <minsi>, %82, %cst_27 [1] : vector<16x16xi32> to vector<16xi32>
    %84 = vector.shape_cast %83 : vector<16xi32> to vector<16x1xi32>
    %85 = vector.broadcast %84 : vector<16x1xi32> to vector<16x16xi32>
    %86 = arith.cmpi eq, %40, %85 : vector<16x16xi32>
    %cst_28 = arith.constant 1.000000e+30 : f32
    %87 = vector.broadcast %cst_28 : f32 to vector<16x16xf32>
    %88 = arith.select %86, %87, %76 : vector<16x16xi1>, vector<16x16xf32>
    %cst_29 = arith.constant dense<0x7F800000> : vector<16xf32>
    %89 = vector.multi_reduction <minimumf>, %88, %cst_29 [1] : vector<16x16xf32> to vector<16xf32>
    %90 = vector.shape_cast %89 : vector<16xf32> to vector<16x1xf32>
    %91 = vector.broadcast %90 : vector<16x1xf32> to vector<16x16xf32>
    %92 = arith.cmpf ole, %88, %91 : vector<16x16xf32>
    %c16_i32_30 = arith.constant 16 : i32
    %93 = vector.broadcast %c16_i32_30 : i32 to vector<16x16xi32>
    %94 = arith.select %92, %40, %93 : vector<16x16xi1>, vector<16x16xi32>
    %cst_31 = arith.constant dense<2147483647> : vector<16xi32>
    %95 = vector.multi_reduction <minsi>, %94, %cst_31 [1] : vector<16x16xi32> to vector<16xi32>
    %96 = vector.shape_cast %95 : vector<16xi32> to vector<16x1xi32>
    %97 = tpu.concatenate %48, %60, %72, %84, %96 in 0 : vector<16x1xi32>, vector<16x1xi32>, vector<16x1xi32>, vector<16x1xi32>, vector<16x1xi32> -> vector<80x1xi32>
    %98 = tpu.iota {dimensions = array<i32: 1>} : vector<80x16xi32>
    %99 = vector.broadcast %97 : vector<80x1xi32> to vector<80x16xi32>
    %100 = arith.cmpi eq, %98, %99 : vector<80x16xi32>
    %101 = arith.extui %100 : vector<80x16xi1> to vector<80x16xi32>
    %102 = arith.sitofp %101 : vector<80x16xi32> to vector<80x16xf32>
    %103 = arith.truncf %102 : vector<80x16xf32> to vector<80x16xbf16>
    %104 = arith.truncf %38 : vector<16x256xf32> to vector<16x256xbf16>
    %cst_32 = arith.constant dense<0.000000e+00> : vector<80x256xf32>
    %105 = tpu.matmul %103, %104, %cst_32 {dimension_numbers = #tpu.dot_dimension_numbers<[1], [0], [0], [1], [0, 0, 1, 1], [], []>} : vector<80x16xbf16>, vector<16x256xbf16>, vector<80x256xf32> -> vector<80x256xf32>
    %106 = tpu.concatenate %39, %39, %39, %39, %39 in 0 : vector<16x256xf32>, vector<16x256xf32>, vector<16x256xf32>, vector<16x256xf32>, vector<16x256xf32> -> vector<80x256xf32>
    %107 = arith.addf %105, %106 : vector<80x256xf32>
    %cst_33 = arith.constant dense<0.000000e+00> : vector<256xf32>
    %108 = vector.multi_reduction <add>, %107, %cst_33 [0] : vector<80x256xf32> to vector<256xf32>
    %109 = vector.shape_cast %108 : vector<256xf32> to vector<1x256xf32>
    %c0_34 = arith.constant 0 : index
    %c0_35 = arith.constant 0 : index
    %c0_36 = arith.constant 0 : index
    %110 = vector.load %arg6[%c0_34, %c0_35, %c0_36] : memref<1x2x256xf32, #tpu.memory_space<vmem>>, vector<1x1x256xf32>
    %111 = vector.shape_cast %110 : vector<1x1x256xf32> to vector<1x256xf32>
    %112 = vector.shape_cast %109 : vector<1x256xf32> to vector<1x1x256xf32>
    tpu.vector_store %arg6[%c0_34, %c0_35, %c0_36], %112 {strides = array<i32>} : memref<1x2x256xf32, #tpu.memory_space<vmem>>, vector<1x1x256xf32>,
    %113 = arith.mulf %107, %107 : vector<80x256xf32>
    %cst_37 = arith.constant dense<0.000000e+00> : vector<256xf32>
    %114 = vector.multi_reduction <add>, %113, %cst_37 [0] : vector<80x256xf32> to vector<256xf32>
    %115 = vector.shape_cast %114 : vector<256xf32> to vector<1x256xf32>
    %c0_38 = arith.constant 0 : index
    %c1 = arith.constant 1 : index
    %c0_39 = arith.constant 0 : index
    %116 = vector.load %arg6[%c0_38, %c1, %c0_39] : memref<1x2x256xf32, #tpu.memory_space<vmem>>, vector<1x1x256xf32>
    %117 = vector.shape_cast %116 : vector<1x1x256xf32> to vector<1x256xf32>
    %118 = vector.shape_cast %115 : vector<1x256xf32> to vector<1x1x256xf32>
    tpu.vector_store %arg6[%c0_38, %c1, %c0_39], %118 {strides = array<i32>} : memref<1x2x256xf32, #tpu.memory_space<vmem>>, vector<1x1x256xf32>,
    %119 = vector.extract_strided_slice %107 {offsets = [0, 0], sizes = [16, 256], strides = [1, 1]} : vector<80x256xf32> to vector<16x256xf32>
    %120 = vector.extract_strided_slice %107 {offsets = [0, 0], sizes = [16, 256], strides = [1, 1]} : vector<80x256xf32> to vector<16x256xf32>
    %121 = vector.extract_strided_slice %107 {offsets = [16, 0], sizes = [16, 256], strides = [1, 1]} : vector<80x256xf32> to vector<16x256xf32>
    %122 = arith.maximumf %119, %121 : vector<16x256xf32>
    %123 = arith.minimumf %120, %121 : vector<16x256xf32>
    %124 = vector.extract_strided_slice %107 {offsets = [32, 0], sizes = [16, 256], strides = [1, 1]} : vector<80x256xf32> to vector<16x256xf32>
    %125 = arith.maximumf %122, %124 : vector<16x256xf32>
    %126 = arith.minimumf %123, %124 : vector<16x256xf32>
    %127 = vector.extract_strided_slice %107 {offsets = [48, 0], sizes = [16, 256], strides = [1, 1]} : vector<80x256xf32> to vector<16x256xf32>
    %128 = arith.maximumf %125, %127 : vector<16x256xf32>
    %129 = arith.minimumf %126, %127 : vector<16x256xf32>
    %130 = vector.extract_strided_slice %107 {offsets = [64, 0], sizes = [16, 256], strides = [1, 1]} : vector<80x256xf32> to vector<16x256xf32>
    %131 = arith.maximumf %128, %130 : vector<16x256xf32>
    %132 = arith.minimumf %129, %130 : vector<16x256xf32>
    %133 = arith.truncf %131 : vector<16x256xf32> to vector<16x256xbf16>
    %c0_40 = arith.constant 0 : index
    %c0_41 = arith.constant 0 : index
    %c0_42 = arith.constant 0 : index
    %134 = vector.load %arg5[%c0_40, %c0_41, %c0_42] : memref<1x32x256xbf16, #tpu.memory_space<vmem>>, vector<1x16x256xbf16>
    %135 = vector.shape_cast %134 : vector<1x16x256xbf16> to vector<16x256xbf16>
    %136 = vector.shape_cast %133 : vector<16x256xbf16> to vector<1x16x256xbf16>
    tpu.vector_store %arg5[%c0_40, %c0_41, %c0_42], %136 {strides = array<i32>} : memref<1x32x256xbf16, #tpu.memory_space<vmem>>, vector<1x16x256xbf16>,
    %137 = arith.truncf %132 : vector<16x256xf32> to vector<16x256xbf16>
    %c0_43 = arith.constant 0 : index
    %c16 = arith.constant 16 : index
    %c0_44 = arith.constant 0 : index
    %138 = vector.load %arg5[%c0_43, %c16, %c0_44] : memref<1x32x256xbf16, #tpu.memory_space<vmem>>, vector<1x16x256xbf16>
    %139 = vector.shape_cast %138 : vector<1x16x256xbf16> to vector<16x256xbf16>
    %140 = vector.shape_cast %137 : vector<16x256xbf16> to vector<1x16x256xbf16>
    tpu.vector_store %arg5[%c0_43, %c16, %c0_44], %140 {strides = array<i32>} : memref<1x32x256xbf16, #tpu.memory_space<vmem>>, vector<1x16x256xbf16>,
    return
  }
  func.func @transform_0(%arg0: i32) -> (i32, i32, i32) {
    %c0_i32 = arith.constant 0 : i32
    %c0_i32_0 = arith.constant 0 : i32
    %c0_i32_1 = arith.constant 0 : i32
    return %arg0, %c0_i32, %c0_i32_0 : i32, i32, i32
  }
  func.func @transform_1(%arg0: i32) -> (i32, i32) {
    %c0_i32 = arith.constant 0 : i32
    %c0_i32_0 = arith.constant 0 : i32
    %c0_i32_1 = arith.constant 0 : i32
    return %c0_i32, %c0_i32_0 : i32, i32
  }
  func.func @transform_2(%arg0: i32) -> (i32, i32) {
    %c0_i32 = arith.constant 0 : i32
    %c0_i32_0 = arith.constant 0 : i32
    %c0_i32_1 = arith.constant 0 : i32
    return %c0_i32, %c0_i32_0 : i32, i32
  }
  func.func @transform_3(%arg0: i32) -> (i32, i32) {
    %c0_i32 = arith.constant 0 : i32
    %c0_i32_0 = arith.constant 0 : i32
    %c0_i32_1 = arith.constant 0 : i32
    return %c0_i32, %c0_i32_0 : i32, i32
  }
  func.func @transform_4(%arg0: i32) -> (i32, i32, i32) {
    %c0_i32 = arith.constant 0 : i32
    %c0_i32_0 = arith.constant 0 : i32
    %c0_i32_1 = arith.constant 0 : i32
    return %arg0, %c0_i32, %c0_i32_0 : i32, i32, i32
  }
  func.func @transform_5(%arg0: i32) -> (i32, i32, i32) {
    %c0_i32 = arith.constant 0 : i32
    %c0_i32_0 = arith.constant 0 : i32
    %c0_i32_1 = arith.constant 0 : i32
    return %arg0, %c0_i32, %c0_i32_0 : i32, i32, i32
  }
}

module attributes {stable_mosaic.version = 11 : i64} {
  func.func @edge_kernel_next(%arg0: i32, %arg1: memref<1x32x256xbf16, #tpu.memory_space<vmem>>, %arg2: memref<1x256xf32, #tpu.memory_space<vmem>>, %arg3: memref<1x256xf32, #tpu.memory_space<vmem>>, %arg4: memref<256x512xbf16, #tpu.memory_space<vmem>>, %arg5: memref<1x32x256xbf16, #tpu.memory_space<vmem>>, %arg6: memref<1x2x256xf32, #tpu.memory_space<vmem>>) attributes {dimension_semantics = [#tpu.dimension_semantics<parallel>], iteration_bounds = array<i64: 2>, scalar_prefetch = 0 : i64, scratch_operands = 0 : i64, tpu.core_type = #tpu.core_type<tc>, window_params = [{transform_indices = @transform_0, window_bounds = array<i64: 1, 32, 256>}, {pipeline_mode = #tpu.pipeline_mode<synchronous>, transform_indices = @transform_1, window_bounds = array<i64: 1, 256>}, {pipeline_mode = #tpu.pipeline_mode<synchronous>, transform_indices = @transform_2, window_bounds = array<i64: 1, 256>}, {pipeline_mode = #tpu.pipeline_mode<synchronous>, transform_indices = @transform_3, window_bounds = array<i64: 256, 512>}, {transform_indices = @transform_4, window_bounds = array<i64: 1, 32, 256>}, {transform_indices = @transform_5, window_bounds = array<i64: 1, 2, 256>}]} {
    %c0 = arith.constant 0 : index
    %c0_0 = arith.constant 0 : index
    %c0_1 = arith.constant 0 : index
    %0 = vector.load %arg1[%c0, %c0_0, %c0_1] : memref<1x32x256xbf16, #tpu.memory_space<vmem>>, vector<1x32x256xbf16>
    %1 = vector.shape_cast %0 : vector<1x32x256xbf16> to vector<32x256xbf16>
    %c0_2 = arith.constant 0 : index
    %c0_3 = arith.constant 0 : index
    %2 = vector.load %arg2[%c0_2, %c0_3] : memref<1x256xf32, #tpu.memory_space<vmem>>, vector<1x256xf32>
    %c0_4 = arith.constant 0 : index
    %c0_5 = arith.constant 0 : index
    %3 = vector.load %arg3[%c0_4, %c0_5] : memref<1x256xf32, #tpu.memory_space<vmem>>, vector<1x256xf32>
    %cst = arith.constant 0.000000e+00 : f32
    %4 = vector.broadcast %cst : f32 to vector<1x256xf32>
    %5 = arith.cmpf oge, %2, %4 : vector<1x256xf32>
    %6 = vector.extract_strided_slice %1 {offsets = [0, 0], sizes = [16, 256], strides = [1, 1]} : vector<32x256xbf16> to vector<16x256xbf16>
    %7 = arith.extf %6 : vector<16x256xbf16> to vector<16x256xf32>
    %8 = vector.broadcast %2 : vector<1x256xf32> to vector<16x256xf32>
    %9 = arith.mulf %8, %7 : vector<16x256xf32>
    %10 = vector.extract_strided_slice %1 {offsets = [16, 0], sizes = [16, 256], strides = [1, 1]} : vector<32x256xbf16> to vector<16x256xbf16>
    %11 = arith.extf %10 : vector<16x256xbf16> to vector<16x256xf32>
    %12 = vector.broadcast %2 : vector<1x256xf32> to vector<16x256xf32>
    %13 = arith.mulf %12, %11 : vector<16x256xf32>
    %14 = vector.shape_cast %5 : vector<1x256xi1> to vector<1x256xi1>
    %15 = vector.broadcast %14 : vector<1x256xi1> to vector<16x256xi1>
    %16 = arith.select %15, %9, %13 : vector<16x256xi1>, vector<16x256xf32>
    %17 = vector.broadcast %3 : vector<1x256xf32> to vector<16x256xf32>
    %18 = arith.addf %16, %17 : vector<16x256xf32>
    %cst_6 = arith.constant 0.000000e+00 : f32
    %19 = vector.broadcast %cst_6 : f32 to vector<16x256xf32>
    %20 = arith.cmpf oge, %18, %19 : vector<16x256xf32>
    %cst_7 = arith.constant 2.000000e-01 : f32
    %21 = vector.broadcast %cst_7 : f32 to vector<16x256xf32>
    %22 = arith.mulf %21, %18 : vector<16x256xf32>
    %23 = arith.select %20, %18, %22 : vector<16x256xi1>, vector<16x256xf32>
    %24 = arith.mulf %23, %23 : vector<16x256xf32>
    %cst_8 = arith.constant dense<0.000000e+00> : vector<16xf32>
    %25 = vector.multi_reduction <add>, %24, %cst_8 [1] : vector<16x256xf32> to vector<16xf32>
    %26 = vector.shape_cast %25 : vector<16xf32> to vector<16x1xf32>
    %cst_9 = arith.constant dense<0.000000e+00> : vector<16x16xf32>
    %27 = tpu.matmul %23, %23, %cst_9 {dimension_numbers = #tpu.dot_dimension_numbers<[1], [1], [0], [0], [0, 0, 1, 0], [], []>} : vector<16x256xf32>, vector<16x256xf32>, vector<16x16xf32> -> vector<16x16xf32>
    %28 = tpu.transpose %26, [1, 0] : vector<16x1xf32> -> vector<1x16xf32>
    %29 = vector.broadcast %26 : vector<16x1xf32> to vector<16x16xf32>
    %30 = vector.broadcast %28 : vector<1x16xf32> to vector<16x16xf32>
    %31 = arith.addf %29, %30 : vector<16x16xf32>
    %cst_10 = arith.constant 2.000000e+00 : f32
    %32 = vector.broadcast %cst_10 : f32 to vector<16x16xf32>
    %33 = arith.mulf %32, %27 : vector<16x16xf32>
    %34 = arith.subf %31, %33 : vector<16x16xf32>
    %35 = arith.truncf %23 : vector<16x256xf32> to vector<16x256xbf16>
    %c0_11 = arith.constant 0 : index
    %c0_12 = arith.constant 0 : index
    %36 = vector.load %arg4[%c0_11, %c0_12] : memref<256x512xbf16, #tpu.memory_space<vmem>>, vector<256x512xbf16>
    %cst_13 = arith.constant dense<0.000000e+00> : vector<16x512xf32>
    %37 = tpu.matmul %35, %36, %cst_13 {dimension_numbers = #tpu.dot_dimension_numbers<[1], [0], [0], [1], [0, 0, 1, 1], [], []>} : vector<16x256xbf16>, vector<256x512xbf16>, vector<16x512xf32> -> vector<16x512xf32>
    %38 = vector.extract_strided_slice %37 {offsets = [0, 0], sizes = [16, 256], strides = [1, 1]} : vector<16x512xf32> to vector<16x256xf32>
    %39 = vector.extract_strided_slice %37 {offsets = [0, 256], sizes = [16, 256], strides = [1, 1]} : vector<16x512xf32> to vector<16x256xf32>
    %40 = tpu.iota {dimensions = array<i32: 1>} : vector<16x16xi32>
    %cst_14 = arith.constant dense<0x7F800000> : vector<16xf32>
    %41 = vector.multi_reduction <minimumf>, %34, %cst_14 [1] : vector<16x16xf32> to vector<16xf32>
    %42 = vector.shape_cast %41 : vector<16xf32> to vector<16x1xf32>
    %43 = vector.broadcast %42 : vector<16x1xf32> to vector<16x16xf32>
    %44 = arith.cmpf ole, %34, %43 : vector<16x16xf32>
    %c16_i32 = arith.constant 16 : i32
    %45 = vector.broadcast %c16_i32 : i32 to vector<16x16xi32>
    %46 = arith.select %44, %40, %45 : vector<16x16xi1>, vector<16x16xi32>
    %cst_15 = arith.constant dense<2147483647> : vector<16xi32>
    %47 = vector.multi_reduction <minsi>, %46, %cst_15 [1] : vector<16x16xi32> to vector<16xi32>
    %48 = vector.shape_cast %47 : vector<16xi32> to vector<16x1xi32>
    %49 = vector.broadcast %48 : vector<16x1xi32> to vector<16x16xi32>
    %50 = arith.cmpi eq, %40, %49 : vector<16x16xi32>
    %cst_16 = arith.constant 1.000000e+30 : f32
    %51 = vector.broadcast %cst_16 : f32 to vector<16x16xf32>
    %52 = arith.select %50, %51, %34 : vector<16x16xi1>, vector<16x16xf32>
    %cst_17 = arith.constant dense<0x7F800000> : vector<16xf32>
    %53 = vector.multi_reduction <minimumf>, %52, %cst_17 [1] : vector<16x16xf32> to vector<16xf32>
    %54 = vector.shape_cast %53 : vector<16xf32> to vector<16x1xf32>
    %55 = vector.broadcast %54 : vector<16x1xf32> to vector<16x16xf32>
    %56 = arith.cmpf ole, %52, %55 : vector<16x16xf32>
    %c16_i32_18 = arith.constant 16 : i32
    %57 = vector.broadcast %c16_i32_18 : i32 to vector<16x16xi32>
    %58 = arith.select %56, %40, %57 : vector<16x16xi1>, vector<16x16xi32>
    %cst_19 = arith.constant dense<2147483647> : vector<16xi32>
    %59 = vector.multi_reduction <minsi>, %58, %cst_19 [1] : vector<16x16xi32> to vector<16xi32>
    %60 = vector.shape_cast %59 : vector<16xi32> to vector<16x1xi32>
    %61 = vector.broadcast %60 : vector<16x1xi32> to vector<16x16xi32>
    %62 = arith.cmpi eq, %40, %61 : vector<16x16xi32>
    %cst_20 = arith.constant 1.000000e+30 : f32
    %63 = vector.broadcast %cst_20 : f32 to vector<16x16xf32>
    %64 = arith.select %62, %63, %52 : vector<16x16xi1>, vector<16x16xf32>
    %cst_21 = arith.constant dense<0x7F800000> : vector<16xf32>
    %65 = vector.multi_reduction <minimumf>, %64, %cst_21 [1] : vector<16x16xf32> to vector<16xf32>
    %66 = vector.shape_cast %65 : vector<16xf32> to vector<16x1xf32>
    %67 = vector.broadcast %66 : vector<16x1xf32> to vector<16x16xf32>
    %68 = arith.cmpf ole, %64, %67 : vector<16x16xf32>
    %c16_i32_22 = arith.constant 16 : i32
    %69 = vector.broadcast %c16_i32_22 : i32 to vector<16x16xi32>
    %70 = arith.select %68, %40, %69 : vector<16x16xi1>, vector<16x16xi32>
    %cst_23 = arith.constant dense<2147483647> : vector<16xi32>
    %71 = vector.multi_reduction <minsi>, %70, %cst_23 [1] : vector<16x16xi32> to vector<16xi32>
    %72 = vector.shape_cast %71 : vector<16xi32> to vector<16x1xi32>
    %73 = vector.broadcast %72 : vector<16x1xi32> to vector<16x16xi32>
    %74 = arith.cmpi eq, %40, %73 : vector<16x16xi32>
    %cst_24 = arith.constant 1.000000e+30 : f32
    %75 = vector.broadcast %cst_24 : f32 to vector<16x16xf32>
    %76 = arith.select %74, %75, %64 : vector<16x16xi1>, vector<16x16xf32>
    %cst_25 = arith.constant dense<0x7F800000> : vector<16xf32>
    %77 = vector.multi_reduction <minimumf>, %76, %cst_25 [1] : vector<16x16xf32> to vector<16xf32>
    %78 = vector.shape_cast %77 : vector<16xf32> to vector<16x1xf32>
    %79 = vector.broadcast %78 : vector<16x1xf32> to vector<16x16xf32>
    %80 = arith.cmpf ole, %76, %79 : vector<16x16xf32>
    %c16_i32_26 = arith.constant 16 : i32
    %81 = vector.broadcast %c16_i32_26 : i32 to vector<16x16xi32>
    %82 = arith.select %80, %40, %81 : vector<16x16xi1>, vector<16x16xi32>
    %cst_27 = arith.constant dense<2147483647> : vector<16xi32>
    %83 = vector.multi_reduction <minsi>, %82, %cst_27 [1] : vector<16x16xi32> to vector<16xi32>
    %84 = vector.shape_cast %83 : vector<16xi32> to vector<16x1xi32>
    %85 = vector.broadcast %84 : vector<16x1xi32> to vector<16x16xi32>
    %86 = arith.cmpi eq, %40, %85 : vector<16x16xi32>
    %cst_28 = arith.constant 1.000000e+30 : f32
    %87 = vector.broadcast %cst_28 : f32 to vector<16x16xf32>
    %88 = arith.select %86, %87, %76 : vector<16x16xi1>, vector<16x16xf32>
    %cst_29 = arith.constant dense<0x7F800000> : vector<16xf32>
    %89 = vector.multi_reduction <minimumf>, %88, %cst_29 [1] : vector<16x16xf32> to vector<16xf32>
    %90 = vector.shape_cast %89 : vector<16xf32> to vector<16x1xf32>
    %91 = vector.broadcast %90 : vector<16x1xf32> to vector<16x16xf32>
    %92 = arith.cmpf ole, %88, %91 : vector<16x16xf32>
    %c16_i32_30 = arith.constant 16 : i32
    %93 = vector.broadcast %c16_i32_30 : i32 to vector<16x16xi32>
    %94 = arith.select %92, %40, %93 : vector<16x16xi1>, vector<16x16xi32>
    %cst_31 = arith.constant dense<2147483647> : vector<16xi32>
    %95 = vector.multi_reduction <minsi>, %94, %cst_31 [1] : vector<16x16xi32> to vector<16xi32>
    %96 = vector.shape_cast %95 : vector<16xi32> to vector<16x1xi32>
    %97 = tpu.concatenate %48, %60, %72, %84, %96 in 0 : vector<16x1xi32>, vector<16x1xi32>, vector<16x1xi32>, vector<16x1xi32>, vector<16x1xi32> -> vector<80x1xi32>
    %98 = tpu.iota {dimensions = array<i32: 1>} : vector<80x16xi32>
    %99 = vector.broadcast %97 : vector<80x1xi32> to vector<80x16xi32>
    %100 = arith.cmpi eq, %98, %99 : vector<80x16xi32>
    %101 = arith.extui %100 : vector<80x16xi1> to vector<80x16xi32>
    %102 = arith.sitofp %101 : vector<80x16xi32> to vector<80x16xf32>
    %103 = arith.truncf %102 : vector<80x16xf32> to vector<80x16xbf16>
    %104 = arith.truncf %38 : vector<16x256xf32> to vector<16x256xbf16>
    %cst_32 = arith.constant dense<0.000000e+00> : vector<80x256xf32>
    %105 = tpu.matmul %103, %104, %cst_32 {dimension_numbers = #tpu.dot_dimension_numbers<[1], [0], [0], [1], [0, 0, 1, 1], [], []>} : vector<80x16xbf16>, vector<16x256xbf16>, vector<80x256xf32> -> vector<80x256xf32>
    %106 = tpu.concatenate %39, %39, %39, %39, %39 in 0 : vector<16x256xf32>, vector<16x256xf32>, vector<16x256xf32>, vector<16x256xf32>, vector<16x256xf32> -> vector<80x256xf32>
    %107 = arith.addf %105, %106 : vector<80x256xf32>
    %cst_33 = arith.constant dense<0.000000e+00> : vector<256xf32>
    %108 = vector.multi_reduction <add>, %107, %cst_33 [0] : vector<80x256xf32> to vector<256xf32>
    %109 = vector.shape_cast %108 : vector<256xf32> to vector<1x256xf32>
    %c0_34 = arith.constant 0 : index
    %c0_35 = arith.constant 0 : index
    %c0_36 = arith.constant 0 : index
    %110 = vector.load %arg6[%c0_34, %c0_35, %c0_36] : memref<1x2x256xf32, #tpu.memory_space<vmem>>, vector<1x1x256xf32>
    %111 = vector.shape_cast %110 : vector<1x1x256xf32> to vector<1x256xf32>
    %112 = vector.shape_cast %109 : vector<1x256xf32> to vector<1x1x256xf32>
    tpu.vector_store %arg6[%c0_34, %c0_35, %c0_36], %112 {strides = array<i32>} : memref<1x2x256xf32, #tpu.memory_space<vmem>>, vector<1x1x256xf32>,
    %113 = arith.mulf %107, %107 : vector<80x256xf32>
    %cst_37 = arith.constant dense<0.000000e+00> : vector<256xf32>
    %114 = vector.multi_reduction <add>, %113, %cst_37 [0] : vector<80x256xf32> to vector<256xf32>
    %115 = vector.shape_cast %114 : vector<256xf32> to vector<1x256xf32>
    %c0_38 = arith.constant 0 : index
    %c1 = arith.constant 1 : index
    %c0_39 = arith.constant 0 : index
    %116 = vector.load %arg6[%c0_38, %c1, %c0_39] : memref<1x2x256xf32, #tpu.memory_space<vmem>>, vector<1x1x256xf32>
    %117 = vector.shape_cast %116 : vector<1x1x256xf32> to vector<1x256xf32>
    %118 = vector.shape_cast %115 : vector<1x256xf32> to vector<1x1x256xf32>
    tpu.vector_store %arg6[%c0_38, %c1, %c0_39], %118 {strides = array<i32>} : memref<1x2x256xf32, #tpu.memory_space<vmem>>, vector<1x1x256xf32>,
    %119 = vector.extract_strided_slice %107 {offsets = [0, 0], sizes = [16, 256], strides = [1, 1]} : vector<80x256xf32> to vector<16x256xf32>
    %120 = vector.extract_strided_slice %107 {offsets = [0, 0], sizes = [16, 256], strides = [1, 1]} : vector<80x256xf32> to vector<16x256xf32>
    %121 = vector.extract_strided_slice %107 {offsets = [16, 0], sizes = [16, 256], strides = [1, 1]} : vector<80x256xf32> to vector<16x256xf32>
    %122 = arith.maximumf %119, %121 : vector<16x256xf32>
    %123 = arith.minimumf %120, %121 : vector<16x256xf32>
    %124 = vector.extract_strided_slice %107 {offsets = [32, 0], sizes = [16, 256], strides = [1, 1]} : vector<80x256xf32> to vector<16x256xf32>
    %125 = arith.maximumf %122, %124 : vector<16x256xf32>
    %126 = arith.minimumf %123, %124 : vector<16x256xf32>
    %127 = vector.extract_strided_slice %107 {offsets = [48, 0], sizes = [16, 256], strides = [1, 1]} : vector<80x256xf32> to vector<16x256xf32>
    %128 = arith.maximumf %125, %127 : vector<16x256xf32>
    %129 = arith.minimumf %126, %127 : vector<16x256xf32>
    %130 = vector.extract_strided_slice %107 {offsets = [64, 0], sizes = [16, 256], strides = [1, 1]} : vector<80x256xf32> to vector<16x256xf32>
    %131 = arith.maximumf %128, %130 : vector<16x256xf32>
    %132 = arith.minimumf %129, %130 : vector<16x256xf32>
    %133 = arith.truncf %131 : vector<16x256xf32> to vector<16x256xbf16>
    %c0_40 = arith.constant 0 : index
    %c0_41 = arith.constant 0 : index
    %c0_42 = arith.constant 0 : index
    %134 = vector.load %arg5[%c0_40, %c0_41, %c0_42] : memref<1x32x256xbf16, #tpu.memory_space<vmem>>, vector<1x16x256xbf16>
    %135 = vector.shape_cast %134 : vector<1x16x256xbf16> to vector<16x256xbf16>
    %136 = vector.shape_cast %133 : vector<16x256xbf16> to vector<1x16x256xbf16>
    tpu.vector_store %arg5[%c0_40, %c0_41, %c0_42], %136 {strides = array<i32>} : memref<1x32x256xbf16, #tpu.memory_space<vmem>>, vector<1x16x256xbf16>,
    %137 = arith.truncf %132 : vector<16x256xf32> to vector<16x256xbf16>
    %c0_43 = arith.constant 0 : index
    %c16 = arith.constant 16 : index
    %c0_44 = arith.constant 0 : index
    %138 = vector.load %arg5[%c0_43, %c16, %c0_44] : memref<1x32x256xbf16, #tpu.memory_space<vmem>>, vector<1x16x256xbf16>
    %139 = vector.shape_cast %138 : vector<1x16x256xbf16> to vector<16x256xbf16>
    %140 = vector.shape_cast %137 : vector<16x256xbf16> to vector<1x16x256xbf16>
    tpu.vector_store %arg5[%c0_43, %c16, %c0_44], %140 {strides = array<i32>} : memref<1x32x256xbf16, #tpu.memory_space<vmem>>, vector<1x16x256xbf16>,
    return
  }
  func.func @transform_0(%arg0: i32) -> (i32, i32, i32) {
    %c0_i32 = arith.constant 0 : i32
    %c0_i32_0 = arith.constant 0 : i32
    %c0_i32_1 = arith.constant 0 : i32
    return %arg0, %c0_i32, %c0_i32_0 : i32, i32, i32
  }
  func.func @transform_1(%arg0: i32) -> (i32, i32) {
    %c0_i32 = arith.constant 0 : i32
    %c0_i32_0 = arith.constant 0 : i32
    %c0_i32_1 = arith.constant 0 : i32
    return %c0_i32, %c0_i32_0 : i32, i32
  }
  func.func @transform_2(%arg0: i32) -> (i32, i32) {
    %c0_i32 = arith.constant 0 : i32
    %c0_i32_0 = arith.constant 0 : i32
    %c0_i32_1 = arith.constant 0 : i32
    return %c0_i32, %c0_i32_0 : i32, i32
  }
  func.func @transform_3(%arg0: i32) -> (i32, i32) {
    %c0_i32 = arith.constant 0 : i32
    %c0_i32_0 = arith.constant 0 : i32
    %c0_i32_1 = arith.constant 0 : i32
    return %c0_i32, %c0_i32_0 : i32, i32
  }
  func.func @transform_4(%arg0: i32) -> (i32, i32, i32) {
    %c0_i32 = arith.constant 0 : i32
    %c0_i32_0 = arith.constant 0 : i32
    %c0_i32_1 = arith.constant 0 : i32
    return %arg0, %c0_i32, %c0_i32_0 : i32, i32, i32
  }
  func.func @transform_5(%arg0: i32) -> (i32, i32, i32) {
    %c0_i32 = arith.constant 0 : i32
    %c0_i32_0 = arith.constant 0 : i32
    %c0_i32_1 = arith.constant 0 : i32
    return %arg0, %c0_i32, %c0_i32_0 : i32, i32, i32
  }
}

module attributes {stable_mosaic.version = 11 : i64} {
  func.func @head_kernel(%arg0: i32, %arg1: memref<1x32x256xbf16, #tpu.memory_space<vmem>>, %arg2: memref<1x256xf32, #tpu.memory_space<vmem>>, %arg3: memref<1x256xf32, #tpu.memory_space<vmem>>, %arg4: memref<256x512xbf16, #tpu.memory_space<vmem>>, %arg5: memref<1x512xf32, #tpu.memory_space<vmem>>, %arg6: memref<1x4x512xf32, #tpu.memory_space<vmem>>) attributes {dimension_semantics = [#tpu.dimension_semantics<parallel>], iteration_bounds = array<i64: 2>, scalar_prefetch = 0 : i64, scratch_operands = 0 : i64, tpu.core_type = #tpu.core_type<tc>, window_params = [{transform_indices = @transform_0, window_bounds = array<i64: 1, 32, 256>}, {pipeline_mode = #tpu.pipeline_mode<synchronous>, transform_indices = @transform_1, window_bounds = array<i64: 1, 256>}, {pipeline_mode = #tpu.pipeline_mode<synchronous>, transform_indices = @transform_2, window_bounds = array<i64: 1, 256>}, {pipeline_mode = #tpu.pipeline_mode<synchronous>, transform_indices = @transform_3, window_bounds = array<i64: 256, 512>}, {pipeline_mode = #tpu.pipeline_mode<synchronous>, transform_indices = @transform_4, window_bounds = array<i64: 1, 512>}, {transform_indices = @transform_5, window_bounds = array<i64: 1, 4, 512>}]} {
    %c0 = arith.constant 0 : index
    %c0_0 = arith.constant 0 : index
    %c0_1 = arith.constant 0 : index
    %0 = vector.load %arg1[%c0, %c0_0, %c0_1] : memref<1x32x256xbf16, #tpu.memory_space<vmem>>, vector<1x32x256xbf16>
    %1 = vector.shape_cast %0 : vector<1x32x256xbf16> to vector<32x256xbf16>
    %c0_2 = arith.constant 0 : index
    %c0_3 = arith.constant 0 : index
    %2 = vector.load %arg2[%c0_2, %c0_3] : memref<1x256xf32, #tpu.memory_space<vmem>>, vector<1x256xf32>
    %c0_4 = arith.constant 0 : index
    %c0_5 = arith.constant 0 : index
    %3 = vector.load %arg3[%c0_4, %c0_5] : memref<1x256xf32, #tpu.memory_space<vmem>>, vector<1x256xf32>
    %cst = arith.constant 0.000000e+00 : f32
    %4 = vector.broadcast %cst : f32 to vector<1x256xf32>
    %5 = arith.cmpf oge, %2, %4 : vector<1x256xf32>
    %6 = vector.extract_strided_slice %1 {offsets = [0, 0], sizes = [16, 256], strides = [1, 1]} : vector<32x256xbf16> to vector<16x256xbf16>
    %7 = arith.extf %6 : vector<16x256xbf16> to vector<16x256xf32>
    %8 = vector.broadcast %2 : vector<1x256xf32> to vector<16x256xf32>
    %9 = arith.mulf %8, %7 : vector<16x256xf32>
    %10 = vector.extract_strided_slice %1 {offsets = [16, 0], sizes = [16, 256], strides = [1, 1]} : vector<32x256xbf16> to vector<16x256xbf16>
    %11 = arith.extf %10 : vector<16x256xbf16> to vector<16x256xf32>
    %12 = vector.broadcast %2 : vector<1x256xf32> to vector<16x256xf32>
    %13 = arith.mulf %12, %11 : vector<16x256xf32>
    %14 = vector.shape_cast %5 : vector<1x256xi1> to vector<1x256xi1>
    %15 = vector.broadcast %14 : vector<1x256xi1> to vector<16x256xi1>
    %16 = arith.select %15, %9, %13 : vector<16x256xi1>, vector<16x256xf32>
    %17 = vector.broadcast %3 : vector<1x256xf32> to vector<16x256xf32>
    %18 = arith.addf %16, %17 : vector<16x256xf32>
    %cst_6 = arith.constant 0.000000e+00 : f32
    %19 = vector.broadcast %cst_6 : f32 to vector<16x256xf32>
    %20 = arith.cmpf oge, %18, %19 : vector<16x256xf32>
    %cst_7 = arith.constant 2.000000e-01 : f32
    %21 = vector.broadcast %cst_7 : f32 to vector<16x256xf32>
    %22 = arith.mulf %21, %18 : vector<16x256xf32>
    %23 = arith.select %20, %18, %22 : vector<16x256xi1>, vector<16x256xf32>
    %24 = arith.truncf %23 : vector<16x256xf32> to vector<16x256xbf16>
    %c0_8 = arith.constant 0 : index
    %c0_9 = arith.constant 0 : index
    %25 = vector.load %arg4[%c0_8, %c0_9] : memref<256x512xbf16, #tpu.memory_space<vmem>>, vector<256x512xbf16>
    %cst_10 = arith.constant dense<0.000000e+00> : vector<16x512xf32>
    %26 = tpu.matmul %24, %25, %cst_10 {dimension_numbers = #tpu.dot_dimension_numbers<[1], [0], [0], [1], [0, 0, 1, 1], [], []>} : vector<16x256xbf16>, vector<256x512xbf16>, vector<16x512xf32> -> vector<16x512xf32>
    %c0_11 = arith.constant 0 : index
    %c0_12 = arith.constant 0 : index
    %27 = vector.load %arg5[%c0_11, %c0_12] : memref<1x512xf32, #tpu.memory_space<vmem>>, vector<1x512xf32>
    %28 = vector.broadcast %27 : vector<1x512xf32> to vector<16x512xf32>
    %29 = arith.addf %26, %28 : vector<16x512xf32>
    %cst_13 = arith.constant 0.000000e+00 : f32
    %30 = vector.broadcast %cst_13 : f32 to vector<16x512xf32>
    %31 = arith.cmpf oge, %29, %30 : vector<16x512xf32>
    %cst_14 = arith.constant 2.000000e-01 : f32
    %32 = vector.broadcast %cst_14 : f32 to vector<16x512xf32>
    %33 = arith.mulf %32, %29 : vector<16x512xf32>
    %34 = arith.select %31, %29, %33 : vector<16x512xi1>, vector<16x512xf32>
    %cst_15 = arith.constant dense<0.000000e+00> : vector<512xf32>
    %35 = vector.multi_reduction <add>, %34, %cst_15 [0] : vector<16x512xf32> to vector<512xf32>
    %36 = vector.shape_cast %35 : vector<512xf32> to vector<1x512xf32>
    %c0_16 = arith.constant 0 : index
    %c0_17 = arith.constant 0 : index
    %c0_18 = arith.constant 0 : index
    %37 = vector.load %arg6[%c0_16, %c0_17, %c0_18] : memref<1x4x512xf32, #tpu.memory_space<vmem>>, vector<1x1x512xf32>
    %38 = vector.shape_cast %37 : vector<1x1x512xf32> to vector<1x512xf32>
    %39 = vector.shape_cast %36 : vector<1x512xf32> to vector<1x1x512xf32>
    tpu.vector_store %arg6[%c0_16, %c0_17, %c0_18], %39 {strides = array<i32>} : memref<1x4x512xf32, #tpu.memory_space<vmem>>, vector<1x1x512xf32>,
    %40 = arith.mulf %34, %34 : vector<16x512xf32>
    %cst_19 = arith.constant dense<0.000000e+00> : vector<512xf32>
    %41 = vector.multi_reduction <add>, %40, %cst_19 [0] : vector<16x512xf32> to vector<512xf32>
    %42 = vector.shape_cast %41 : vector<512xf32> to vector<1x512xf32>
    %c0_20 = arith.constant 0 : index
    %c1 = arith.constant 1 : index
    %c0_21 = arith.constant 0 : index
    %43 = vector.load %arg6[%c0_20, %c1, %c0_21] : memref<1x4x512xf32, #tpu.memory_space<vmem>>, vector<1x1x512xf32>
    %44 = vector.shape_cast %43 : vector<1x1x512xf32> to vector<1x512xf32>
    %45 = vector.shape_cast %42 : vector<1x512xf32> to vector<1x1x512xf32>
    tpu.vector_store %arg6[%c0_20, %c1, %c0_21], %45 {strides = array<i32>} : memref<1x4x512xf32, #tpu.memory_space<vmem>>, vector<1x1x512xf32>,
    %cst_22 = arith.constant dense<0xFF800000> : vector<512xf32>
    %46 = vector.multi_reduction <maximumf>, %34, %cst_22 [0] : vector<16x512xf32> to vector<512xf32>
    %47 = vector.shape_cast %46 : vector<512xf32> to vector<1x512xf32>
    %c0_23 = arith.constant 0 : index
    %c2 = arith.constant 2 : index
    %c0_24 = arith.constant 0 : index
    %48 = vector.load %arg6[%c0_23, %c2, %c0_24] : memref<1x4x512xf32, #tpu.memory_space<vmem>>, vector<1x1x512xf32>
    %49 = vector.shape_cast %48 : vector<1x1x512xf32> to vector<1x512xf32>
    %50 = vector.shape_cast %47 : vector<1x512xf32> to vector<1x1x512xf32>
    tpu.vector_store %arg6[%c0_23, %c2, %c0_24], %50 {strides = array<i32>} : memref<1x4x512xf32, #tpu.memory_space<vmem>>, vector<1x1x512xf32>,
    %cst_25 = arith.constant dense<0x7F800000> : vector<512xf32>
    %51 = vector.multi_reduction <minimumf>, %34, %cst_25 [0] : vector<16x512xf32> to vector<512xf32>
    %52 = vector.shape_cast %51 : vector<512xf32> to vector<1x512xf32>
    %c0_26 = arith.constant 0 : index
    %c3 = arith.constant 3 : index
    %c0_27 = arith.constant 0 : index
    %53 = vector.load %arg6[%c0_26, %c3, %c0_27] : memref<1x4x512xf32, #tpu.memory_space<vmem>>, vector<1x1x512xf32>
    %54 = vector.shape_cast %53 : vector<1x1x512xf32> to vector<1x512xf32>
    %55 = vector.shape_cast %52 : vector<1x512xf32> to vector<1x1x512xf32>
    tpu.vector_store %arg6[%c0_26, %c3, %c0_27], %55 {strides = array<i32>} : memref<1x4x512xf32, #tpu.memory_space<vmem>>, vector<1x1x512xf32>,
    return
  }
  func.func @transform_0(%arg0: i32) -> (i32, i32, i32) {
    %c0_i32 = arith.constant 0 : i32
    %c0_i32_0 = arith.constant 0 : i32
    %c0_i32_1 = arith.constant 0 : i32
    return %arg0, %c0_i32, %c0_i32_0 : i32, i32, i32
  }
  func.func @transform_1(%arg0: i32) -> (i32, i32) {
    %c0_i32 = arith.constant 0 : i32
    %c0_i32_0 = arith.constant 0 : i32
    %c0_i32_1 = arith.constant 0 : i32
    return %c0_i32, %c0_i32_0 : i32, i32
  }
  func.func @transform_2(%arg0: i32) -> (i32, i32) {
    %c0_i32 = arith.constant 0 : i32
    %c0_i32_0 = arith.constant 0 : i32
    %c0_i32_1 = arith.constant 0 : i32
    return %c0_i32, %c0_i32_0 : i32, i32
  }
  func.func @transform_3(%arg0: i32) -> (i32, i32) {
    %c0_i32 = arith.constant 0 : i32
    %c0_i32_0 = arith.constant 0 : i32
    %c0_i32_1 = arith.constant 0 : i32
    return %c0_i32, %c0_i32_0 : i32, i32
  }
  func.func @transform_4(%arg0: i32) -> (i32, i32) {
    %c0_i32 = arith.constant 0 : i32
    %c0_i32_0 = arith.constant 0 : i32
    %c0_i32_1 = arith.constant 0 : i32
    return %c0_i32, %c0_i32_0 : i32, i32
  }
  func.func @transform_5(%arg0: i32) -> (i32, i32, i32) {
    %c0_i32 = arith.constant 0 : i32
    %c0_i32_0 = arith.constant 0 : i32
    %c0_i32_1 = arith.constant 0 : i32
    return %arg0, %c0_i32, %c0_i32_0 : i32, i32, i32
  }
}

</mosaic_0001>

<llo_original>
// kernel: motion_detect_module.4
$region0: #{motion_detect_module.4}
  #allocation0 [shape = 'u32[]', space=smem, size = 0x4, offset = 0x4, fixed_abs, tag = 'smem constant byte address 0x4 - core index']
  #allocation1 [shape = 'u32[144,128]{1,0:T(1,128)}', space=vmem, size = 0x12000, scoped, tag = 'internal scratch']
  %s0 = inlined_call_operand.vmem [shape: f32[2,16,4], index: 0, kind: input, shape index: {}]
  %s1 = inlined_call_operand.vmem [shape: bf16[4,256], index: 1, kind: input, shape index: {}]
  %s2 = inlined_call_operand.vmem [shape: bf16[2,32,128], index: 2, kind: output, shape index: {0}]
  %s3 = inlined_call_operand.vmem [shape: f32[2,2,128], index: 3, kind: output, shape index: {1}]
  %4 = xla_tuple %s2, %s3
  %s5 = sld [smem:[#allocation0]]
  $region49: #{motion_detect_module.4} parent=0
    _
  %s7 = ssub.s32 1, %s5
  %s8 = scalar_select 0, %s7, %s5
  loop: start=0, step=1, limit=4
  $region2: #{motion_detect_module.4} parent=0 // loop_pre_header
    _
  $region3: #{motion_detect_module.4} parent=0 // loop_header
    %s10 = sphi 0, %s14
    %p11 = scmp.ge.s32.totalorder %s10, 4
    %s20 = sphi 0, %s22
    %s23 = sphi 0, %s20
    %s24 = sphi 0, %s23
    %s40 = sphi 0, %s24
    %s44 = sphi 0, %s44
    %s46 = sphi 0, %s44
    %s47 = sphi 0, %s46
    %s61 = sphi 0, %s47
    %s67 = sphi 0, %s69
    %s70 = sphi 0, %s67
    %s71 = sphi 0, %s70
    %s87 = sphi 0, %s71
    %s93 = sphi 0, %s95
    %s96 = sphi 0, %s93
    %s97 = sphi 0, %s96
    %s113 = sphi 0, %s97
  $region4: #{motion_detect_module.4} parent=0 // loop_header_branch
    %13 = sbr.rel (%p11) target = $region8
  $region5: #{motion_detect_module.4} parent=0 // loop_body
    %s15 = ssub.s32 %s10, 1
    %s16 = ssub.s32 %s10, 2
    %s17 = sadd.s32 %s10, 1
    %s18 = ssub.s32 %s10, %s17
    %p19 = scmp.eq.s32.totalorder %s18, 0
    %s21 = sadd.s32 %s20, 1
    %s22 = scalar_select %p19, %s20, %s21
    %p25 = pneg %p19
    %p26 = scmp.eq.s32.totalorder %s10, 1
    %p27 = por %p25, %p26
    %p28 = scmp.ne.s32.totalorder %s20, %s23
    %p29 = scmp.eq.s32.totalorder %s10, 0
    %p30 = por %p28, %p29
    %p31 = scmp.ne.s32.totalorder %s20, %s23
    %p32 = scmp.eq.s32.totalorder %s15, 1
    %p33 = por %p31, %p32
    %p34 = scmp.ne.s32.totalorder %s23, %s24
    %p35 = scmp.eq.s32.totalorder %s15, 0
    %p36 = por %p34, %p35
    %p37 = scmp.ne.s32.totalorder %s23, %s24
    %p38 = scmp.eq.s32.totalorder %s16, 1
    %p39 = por %p37, %p38
    %p41 = scmp.ne.s32.totalorder %s24, %s40
    %p42 = scmp.eq.s32.totalorder %s16, 0
    %p43 = por %p41, %p42
    %s45 = sadd.s32 %s44, 1
    %p48 = scmp.eq.s32.totalorder %s10, 1
    %p49 = scmp.ne.s32.totalorder %s44, %s46
    %p50 = scmp.eq.s32.totalorder %s10, 0
    %p51 = por %p49, %p50
    %p52 = scmp.ne.s32.totalorder %s44, %s46
    %p53 = scmp.eq.s32.totalorder %s15, 1
    %p54 = por %p52, %p53
    %p55 = scmp.ne.s32.totalorder %s46, %s47
    %p56 = scmp.eq.s32.totalorder %s15, 0
    %p57 = por %p55, %p56
    %p58 = scmp.ne.s32.totalorder %s46, %s47
    %p59 = scmp.eq.s32.totalorder %s16, 1
    %p60 = por %p58, %p59
    %p62 = scmp.ne.s32.totalorder %s47, %s61
    %p63 = scmp.eq.s32.totalorder %s16, 0
    %p64 = por %p62, %p63
    %s65 = ssub.s32 %s10, %s17
    %p66 = scmp.eq.s32.totalorder %s65, 0
    %s68 = sadd.s32 %s67, 1
    %s69 = scalar_select %p66, %s67, %s68
    %p72 = pneg %p66
    %p73 = scmp.eq.s32.totalorder %s10, 1
    %p74 = por %p72, %p73
    %p75 = scmp.ne.s32.totalorder %s67, %s70
    %p76 = scmp.eq.s32.totalorder %s10, 0
    %p77 = por %p75, %p76
    %p78 = scmp.ne.s32.totalorder %s67, %s70
    %p79 = scmp.eq.s32.totalorder %s15, 1
    %p80 = por %p78, %p79
    %p81 = scmp.ne.s32.totalorder %s70, %s71
    %p82 = scmp.eq.s32.totalorder %s15, 0
    %p83 = por %p81, %p82
    %p84 = scmp.ne.s32.totalorder %s70, %s71
    %p85 = scmp.eq.s32.totalorder %s16, 1
    %p86 = por %p84, %p85
    %p88 = scmp.ne.s32.totalorder %s71, %s87
    %p89 = scmp.eq.s32.totalorder %s16, 0
    %p90 = por %p88, %p89
    %s91 = ssub.s32 %s10, %s17
    %p92 = scmp.eq.s32.totalorder %s91, 0
    %s94 = sadd.s32 %s93, 1
    %s95 = scalar_select %p92, %s93, %s94
    %p98 = pneg %p92
    %p99 = scmp.eq.s32.totalorder %s10, 1
    %p100 = por %p98, %p99
    %p101 = scmp.ne.s32.totalorder %s93, %s96
    %p102 = scmp.eq.s32.totalorder %s10, 0
    %p103 = por %p101, %p102
    %p104 = scmp.ne.s32.totalorder %s93, %s96
    %p105 = scmp.eq.s32.totalorder %s15, 1
    %p106 = por %p104, %p105
    %p107 = scmp.ne.s32.totalorder %s96, %s97
    %p108 = scmp.eq.s32.totalorder %s15, 0
    %p109 = por %p107, %p108
    %p110 = scmp.ne.s32.totalorder %s96, %s97
    %p111 = scmp.eq.s32.totalorder %s16, 1
    %p112 = por %p110, %p111
    %p114 = scmp.ne.s32.totalorder %s97, %s113
    %p115 = scmp.eq.s32.totalorder %s16, 0
    %p116 = por %p114, %p115
    %p117 = scmp.le.s32.totalorder 1, %s10
    %p118 = scmp.lt.s32.totalorder %s10, 3
    %p119 = pnand %p117, %p118
    %p120 = pneg %p119
    // Predicated region
    $region9: #{motion_detect_module.4} parent=5 // pred_check
      _
    $region10: #{motion_detect_module.4} parent=5 // pred_check_branch
      %122 = sbr.rel (%p119) target = $region12
    $region11: #{motion_detect_module.4} parent=5 // pred_region
      %s123 = ssub.s32 %s10, 1
      // Predicated region
      $region13: #{motion_detect_module.4} parent=11 // pred_check
        %p124 = pneg %p57
      $region14: #{motion_detect_module.4} parent=11 // pred_check_branch
        %126 = sbr.rel (%p124) target = $region16
      $region15: #{motion_detect_module.4} parent=11 // pred_region
        _
      $region16: #{motion_detect_module.4} parent=11 // pred_fallthru
        _
    $region12: #{motion_detect_module.4} parent=5 // pred_fallthru
      _
    %p127 = scmp.lt.s32.totalorder %s10, 2
    // Predicated region
    $region17: #{motion_detect_module.4} parent=5 // pred_check
      %p128 = pneg %p127
    $region18: #{motion_detect_module.4} parent=5 // pred_check_branch
      %130 = sbr.rel (%p128) target = $region20
    $region19: #{motion_detect_module.4} parent=5 // pred_region
      // Predicated region
      $region21: #{motion_detect_module.4} parent=19 // pred_check
        %p131 = pneg %p30
      $region22: #{motion_detect_module.4} parent=19 // pred_check_branch
        %133 = sbr.rel (%p131) target = $region24
      $region23: #{motion_detect_module.4} parent=19 // pred_region
        %p134 = scmp.lt.s32.totalorder %s10, 1
        %s135 = scalar_select %p134, %s10, 1
        %s136 = smul.addr %s135, 2
        %s137 = smul.addr %s136, 8
        %s138 = scalar_lea.vmem %s0, %s137
      $region24: #{motion_detect_module.4} parent=19 // pred_fallthru
        _
    $region20: #{motion_detect_module.4} parent=5 // pred_fallthru
      _
    %p139 = scmp.le.s32.totalorder 1, %s10
    %p140 = scmp.lt.s32.totalorder %s10, 3
    %p141 = pnand %p139, %p140
    %p142 = pneg %p141
    // Predicated region
    $region25: #{motion_detect_module.4} parent=5 // pred_check
      _
    $region26: #{motion_detect_module.4} parent=5 // pred_check_branch
      %144 = sbr.rel (%p141) target = $region28
    $region27: #{motion_detect_module.4} parent=5 // pred_region
      %s145 = ssub.s32 %s10, 1
      %p146 = scmp.lt.s32.totalorder %s15, 1
      %s147 = scalar_select %p146, %s15, 1
      %s148 = smul.addr %s147, 2
      %s149 = smul.addr %s148, 8
      %s150 = scalar_lea.vmem %s0, %s149
      %p151 = pneg %p36
      %p152 = pneg %p33
      %p153 = pneg %p57
      %p154 = pneg %p54
      %p155 = pneg %p83
      %p156 = pneg %p80
      %p157 = scmp.lt.s32.totalorder %s15, 1
      %s158 = scalar_select %p157, %s15, 1
      %s159 = smul.addr %s158, 4
      %s160 = smul.addr %s159, 4
      %s161 = scalar_lea.vmem %s2, %s160
      %p162 = pneg %p109
      %p163 = pneg %p106
      %p164 = scmp.lt.s32.totalorder %s15, 1
      %s165 = scalar_select %p164, %s15, 1
      %s166 = smul.addr %s165, 2
      %s167 = scalar_lea.vmem %s3, %s166
      %p168 = scmp.lt.s32.totalorder %s15, 1
      %s169 = scalar_select %p168, %s15, 1
      %s170 = smul.addr %s169, 2
      %s171 = smul.addr %s170, 8
      %s172 = scalar_lea.vmem %s0, %s171
      %p173 = scmp.lt.s32.totalorder %s15, 1
      %s174 = scalar_select %p173, %s15, 1
      %s175 = smul.addr %s174, 4
      %s176 = smul.addr %s175, 4
      %s177 = scalar_lea.vmem %s2, %s176
      %p178 = scmp.lt.s32.totalorder %s15, 1
      %s179 = scalar_select %p178, %s15, 1
      %s180 = smul.addr %s179, 2
      %s181 = scalar_lea.vmem %s3, %s180
      %v183 = vld [vmem:[%s172] sm:$0xff]
      %v184 = vld [vmem:[%s172 + $0x8] sm:$0xff]
      %v185 = vmul.f32 %v183, %v183
      %v186 = vmul.f32 %v184, %v184
      %vm187 = vcmask 31744
      %v188 = vsel %vm187, %v185, 0.0
      %189 = vadd.xlane.f32.xlu0 %v188
      %v190 = vpop.xlane.xlu0 %189
      %v191 = vsel %vm187, %v186, 0.0
      %192 = vadd.xlane.f32.xlu0 %v191
      %v193 = vpop.xlane.xlu0 %192
      %v195 = vsel %vm187, %v183, 0
      %v198 = vsel %vm187, %v184, 0
      %200 = vmatprep.subr.mxu0 0.0
      %201 = vmatpush1.xpose.msra.mxu0 0.0
      %202 = vmatprep.subr.mxu0 0.0
      %203 = vmatpush1.xpose.msra.mxu0 0.0
      %204 = vmatprep.subr.mxu0 0.0
      %205 = vmatpush1.xpose.msra.mxu0 0.0
      %206 = vmatprep.subr.mxu0 0.0
      %207 = vmatpush1.xpose.msra.mxu0 0.0
      %208 = vmatprep.subr.mxu0 0.0
      %209 = vmatpush1.xpose.msra.mxu0 0.0
      %210 = vmatprep.subr.mxu0 0.0
      %211 = vmatpush1.xpose.msra.mxu0 0.0
      %212 = vmatprep.subr.mxu0 0.0
      %213 = vmatpush1.xpose.msra.mxu0 0.0
      %214 = vmatprep.subr.mxu0 0.0
      %215 = vmatpush1.xpose.msra.mxu0 0.0
      %216 = vmatprep.subr.mxu0 0.0
      %217 = vmatpush1.xpose.msra.mxu0 0.0
      %218 = vmatprep.subr.mxu0 0.0
      %219 = vmatpush1.xpose.msra.mxu0 0.0
      %220 = vmatprep.subr.mxu0 0.0
      %221 = vmatpush1.xpose.msra.mxu0 0.0
      %222 = vmatprep.subr.mxu0 0.0
      %223 = vmatpush1.xpose.msra.mxu0 0.0
      %224 = vmatprep.subr.mxu0 0.0
      %225 = vmatpush1.xpose.msra.mxu0 0.0
      %226 = vmatprep.subr.mxu0 0.0
      %227 = vmatpush1.xpose.msra.mxu0 0.0
      %228 = vmatprep.subr.mxu0 0.0
      %229 = vmatpush1.xpose.msra.mxu0 %v198
      %230 = vmatprep.subr.mxu0 0.0
      %231 = vmatpush1.xpose.msra.mxu0 %v195
      %232 = vmatprep.subr.mxu0 0.0
      %233 = vmatpush2.xpose.msra.mxu0 0.0
      %234 = vmatprep.subr.mxu0 0.0
      %235 = vmatpush2.xpose.msra.mxu0 0.0
      %236 = vmatprep.subr.mxu0 0.0
      %237 = vmatpush2.xpose.msra.mxu0 0.0
      %238 = vmatprep.subr.mxu0 0.0
      %239 = vmatpush2.xpose.msra.mxu0 0.0
      %240 = vmatprep.subr.mxu0 0.0
      %241 = vmatpush2.xpose.msra.mxu0 0.0
      %242 = vmatprep.subr.mxu0 0.0
      %243 = vmatpush2.xpose.msra.mxu0 0.0
      %244 = vmatprep.subr.mxu0 0.0
      %245 = vmatpush2.xpose.msra.mxu0 0.0
      %246 = vmatprep.subr.mxu0 0.0
      %247 = vmatpush2.xpose.msra.mxu0 0.0
      %248 = vmatprep.subr.mxu0 0.0
      %249 = vmatpush2.xpose.msra.mxu0 0.0
      %250 = vmatprep.subr.mxu0 0.0
      %251 = vmatpush2.xpose.msra.mxu0 0.0
      %252 = vmatprep.subr.mxu0 0.0
      %253 = vmatpush2.xpose.msra.mxu0 0.0
      %254 = vmatprep.subr.mxu0 0.0
      %255 = vmatpush2.xpose.msra.mxu0 0.0
      %256 = vmatprep.subr.mxu0 0.0
      %257 = vmatpush2.xpose.msra.mxu0 0.0
      %258 = vmatprep.subr.mxu0 0.0
      %259 = vmatpush2.xpose.msra.mxu0 0.0
      %260 = vmatprep.subr.mxu0 0.0
      %261 = vmatpush2.xpose.msra.mxu0 0.0
      %262 = vmatprep.subr.mxu0 0.0
      %263 = vmatpush2.xpose.msra.mxu0 0.0
      %264 = vmatprep.mubr.f32.mxu0 0.0
      %265 = vmatmul.mubr.f32.gmra.mxu0 %v195
      %v266 = vpop.f32.mrf.mxu0
      %v267 = vadd.f32 0.0, %v266
      %v268 = vpop.f32.mrf.mxu0
      %269 = vmatprep.mubr.f32.mxu0 0.0
      %270 = vmatmul.mubr.f32.gmra.mxu0 %v198
      %v271 = vpop.f32.mrf.mxu0
      %v272 = vadd.f32 0.0, %v271
      %v273 = vpop.f32.mrf.mxu0
      %274 = vdwg.mxu0
      %275 = vxpose.xlu0.b32.start [1/16] %v190, 128
      %276 = vxpose.xlu0.b32.cont [2/16] %v193, 128
      %277 = vxpose.xlu0.b32.cont [3/16] 0.0, 128
      %278 = vxpose.xlu0.b32.cont [4/16] 0.0, 128
      %279 = vxpose.xlu0.b32.cont [5/16] 0.0, 128
      %280 = vxpose.xlu0.b32.cont [6/16] 0.0, 128
      %281 = vxpose.xlu0.b32.cont [7/16] 0.0, 128
      %282 = vxpose.xlu0.b32.cont [8/16] 0.0, 128
      %283 = vxpose.xlu0.b32.cont [9/16] 0.0, 128
      %284 = vxpose.xlu0.b32.cont [10/16] 0.0, 128
      %285 = vxpose.xlu0.b32.cont [11/16] 0.0, 128
      %286 = vxpose.xlu0.b32.cont [12/16] 0.0, 128
      %287 = vxpose.xlu0.b32.cont [13/16] 0.0, 128
      %288 = vxpose.xlu0.b32.cont [14/16] 0.0, 128
      %289 = vxpose.xlu0.b32.cont [15/16] 0.0, 128
      %290 = vxpose.xlu0.b32.end [16/16] 0.0, 128
      %v291 = vpop.trf.xlu0
      %v292 = vpop.trf.xlu0
      %v293 = vpop.trf.xlu0
      %v294 = vpop.trf.xlu0
      %v295 = vpop.trf.xlu0
      %v296 = vpop.trf.xlu0
      %v297 = vpop.trf.xlu0
      %v298 = vpop.trf.xlu0
      %v299 = vpop.trf.xlu0
      %v300 = vpop.trf.xlu0
      %v301 = vpop.trf.xlu0
      %v302 = vpop.trf.xlu0
      %v303 = vpop.trf.xlu0
      %v304 = vpop.trf.xlu0
      %v305 = vpop.trf.xlu0
      %v306 = vpop.trf.xlu0
      %v307 = vlaneseq
      %v308 = vshrl.u32 %v307, 7
      %v309 = vsub.s32 0, %v308
      %v310 = vrot.slane %v291, %v309
      %v311 = vadd.f32 %v190, %v310
      %v312 = vadd.f32 %v193, %v310
      %v313 = vmul.f32 %v267, 2.0
      %v314 = vmul.f32 %v272, 2.0
      %v315 = vsub.f32 %v311, %v313
      %v316 = vsub.f32 %v312, %v314
      %v317 = vpack.c.bf16 %v184, %v183
      %v318 = vld [vmem:[%s1] sm:$0xf]
      %v321 = vunpack.c.l.s4 1983009808
      %v322 = vunpack.c.0.s8 %v321
      %v323 = vlaneseq
      %v324 = vshrl.u32 %v323, 7
      %v325 = vsub.s32 %v322, %v324
      %v326 = vrot.slane %v318, %v325
      %v327 = vcombine.high %v326, %v326
      %v329 = vsel %vm187, %v317, 0
      %vm331 = vcmask 1041408
      %v333 = vsel %vm331, %v326, 0
      %v336 = vsel %vm331, %v327, 0
      %338 = vmatprep.subr.bf16.mxu0 0
      %339 = vmatpush1.bf16.msra.mxu0 0
      %340 = vmatprep.subr.bf16.mxu0 0
      %341 = vmatpush1.bf16.msra.mxu0 0
      %342 = vmatprep.subr.bf16.mxu0 0
      %343 = vmatpush1.bf16.msra.mxu0 0
      %344 = vmatprep.subr.bf16.mxu0 0
      %345 = vmatpush1.bf16.msra.mxu0 0
      %346 = vmatprep.subr.bf16.mxu0 0
      %347 = vmatpush1.bf16.msra.mxu0 0
      %348 = vmatprep.subr.bf16.mxu0 0
      %349 = vmatpush1.bf16.msra.mxu0 0
      %350 = vmatprep.subr.bf16.mxu0 0
      %351 = vmatpush1.bf16.msra.mxu0 0
      %352 = vmatprep.subr.bf16.mxu0 %v336
      %353 = vmatpush1.bf16.msra.mxu0 %v333
      %354 = vmatprep.subr.bf16.mxu0 0
      %355 = vmatpush2.bf16.msra.mxu0 0
      %356 = vmatprep.subr.bf16.mxu0 0
      %357 = vmatpush2.bf16.msra.mxu0 0
      %358 = vmatprep.subr.bf16.mxu0 0
      %359 = vmatpush2.bf16.msra.mxu0 0
      %360 = vmatprep.subr.bf16.mxu0 0
      %361 = vmatpush2.bf16.msra.mxu0 0
      %362 = vmatprep.subr.bf16.mxu0 0
      %363 = vmatpush2.bf16.msra.mxu0 0
      %364 = vmatprep.subr.bf16.mxu0 0
      %365 = vmatpush2.bf16.msra.mxu0 0
      %366 = vmatprep.subr.bf16.mxu0 0
      %367 = vmatpush2.bf16.msra.mxu0 0
      %368 = vmatprep.subr.bf16.mxu0 0
      %369 = vmatpush2.bf16.msra.mxu0 0
      %370 = vmatprep.mubr.bf16.mxu0 0
      %371 = vmatmul.mubr.bf16.gmra.mxu0 %v329
      %v372 = vpop.f32.mrf.mxu0
      %v373 = vadd.f32 0.0, %v372
      %v374 = vpop.f32.mrf.mxu0
      %v375 = vadd.f32 0.0, %v374
      %v376 = vpop.f32.mrf.mxu0
      %v377 = vadd.f32 0.0, %v376
      %v378 = vpop.f32.mrf.mxu0
      %v379 = vadd.f32 0.0, %v378
      %380 = vdwg.mxu0
      %v381 = vlaneseq
      %v382 = vand.u32 %v381, 127
      %vm383 = vcmask 130048
      %v384 = vsel %vm383, %v315, inf
      %385 = vmin.xlane.f32.xlu0 %v384
      %v386 = vpop.xlane.xlu0 %385
      %v387 = vsel %vm383, %v316, inf
      %388 = vmin.xlane.f32.xlu0 %v387
      %v389 = vpop.xlane.xlu0 %388
      %vm390 = vcmp.le.f32.partialorder %v315, %v386
      %vm391 = vcmp.le.f32.partialorder %v316, %v389
      %v392 = vsel %vm390, %v382, 16
      %v393 = vsel %vm391, %v382, 16
      %v394 = vsel %vm383, %v392, 2147483647
      %v395 = vand.u32 %v394, 65535
      %v396 = vshra.s32 %v394, 16
      %v397 = vcvt.s32.f32 %v395
      %v398 = vcvt.s32.f32 %v396
      %399 = vmin.xlane.f32.xlu0 %v398
      %v400 = vpop.xlane.xlu0 %399
      %vm401 = vcmp.eq.f32.partialorder %v398, %v400
      %v402 = vsel %vm401, %v397, inf
      %403 = vmin.xlane.f32.xlu0 %v402
      %v404 = vpop.xlane.xlu0 %403
      %v405 = vcvt.f32.s32 %v404
      %v406 = vcvt.f32.s32 %v400
      %v407 = vshll.u32 %v406, 16
      %v408 = vadd.s32 %v407, %v405
      %v409 = vsel %vm383, %v393, 2147483647
      %v410 = vand.u32 %v409, 65535
      %v411 = vshra.s32 %v409, 16
      %v412 = vcvt.s32.f32 %v410
      %v413 = vcvt.s32.f32 %v411
      %414 = vmin.xlane.f32.xlu0 %v413
      %v415 = vpop.xlane.xlu0 %414
      %vm416 = vcmp.eq.f32.partialorder %v413, %v415
      %v417 = vsel %vm416, %v412, inf
      %418 = vmin.xlane.f32.xlu0 %v417
      %v419 = vpop.xlane.xlu0 %418
      %v420 = vcvt.f32.s32 %v419
      %v421 = vcvt.f32.s32 %v415
      %v422 = vshll.u32 %v421, 16
      %v423 = vadd.s32 %v422, %v420
      %vm424 = vcmp.eq.s32.totalorder %v382, %v408
      %vm425 = vcmp.eq.s32.totalorder %v382, %v423
      %v426 = vsel %vm424, 1e+30, %v315
      %v427 = vsel %vm425, 1e+30, %v316
      %v428 = vsel %vm383, %v426, inf
      %429 = vmin.xlane.f32.xlu0 %v428
      %v430 = vpop.xlane.xlu0 %429
      %v431 = vsel %vm383, %v427, inf
      %432 = vmin.xlane.f32.xlu0 %v431
      %v433 = vpop.xlane.xlu0 %432
      %vm434 = vcmp.le.f32.partialorder %v426, %v430
      %vm435 = vcmp.le.f32.partialorder %v427, %v433
      %v436 = vsel %vm434, %v382, 16
      %v437 = vsel %vm435, %v382, 16
      %v438 = vsel %vm383, %v436, 2147483647
      %v439 = vand.u32 %v438, 65535
      %v440 = vshra.s32 %v438, 16
      %v441 = vcvt.s32.f32 %v439
      %v442 = vcvt.s32.f32 %v440
      %443 = vmin.xlane.f32.xlu0 %v442
      %v444 = vpop.xlane.xlu0 %443
      %vm445 = vcmp.eq.f32.partialorder %v442, %v444
      %v446 = vsel %vm445, %v441, inf
      %447 = vmin.xlane.f32.xlu0 %v446
      %v448 = vpop.xlane.xlu0 %447
      %v449 = vcvt.f32.s32 %v448
      %v450 = vcvt.f32.s32 %v444
      %v451 = vshll.u32 %v450, 16
      %v452 = vadd.s32 %v451, %v449
      %v453 = vsel %vm383, %v437, 2147483647
      %v454 = vand.u32 %v453, 65535
      %v455 = vshra.s32 %v453, 16
      %v456 = vcvt.s32.f32 %v454
      %v457 = vcvt.s32.f32 %v455
      %458 = vmin.xlane.f32.xlu0 %v457
      %v459 = vpop.xlane.xlu0 %458
      %vm460 = vcmp.eq.f32.partialorder %v457, %v459
      %v461 = vsel %vm460, %v456, inf
      %462 = vmin.xlane.f32.xlu0 %v461
      %v463 = vpop.xlane.xlu0 %462
      %v464 = vcvt.f32.s32 %v463
      %v465 = vcvt.f32.s32 %v459
      %v466 = vshll.u32 %v465, 16
      %v467 = vadd.s32 %v466, %v464
      %vm468 = vcmp.eq.s32.totalorder %v382, %v452
      %vm469 = vcmp.eq.s32.totalorder %v382, %v467
      %v470 = vsel %vm468, 1e+30, %v426
      %v471 = vsel %vm469, 1e+30, %v427
      %v472 = vsel %vm383, %v470, inf
      %473 = vmin.xlane.f32.xlu0 %v472
      %v474 = vpop.xlane.xlu0 %473
      %v475 = vsel %vm383, %v471, inf
      %476 = vmin.xlane.f32.xlu0 %v475
      %v477 = vpop.xlane.xlu0 %476
      %vm478 = vcmp.le.f32.partialorder %v470, %v474
      %vm479 = vcmp.le.f32.partialorder %v471, %v477
      %v480 = vsel %vm478, %v382, 16
      %v481 = vsel %vm479, %v382, 16
      %v482 = vsel %vm383, %v480, 2147483647
      %v483 = vand.u32 %v482, 65535
      %v484 = vshra.s32 %v482, 16
      %v485 = vcvt.s32.f32 %v483
      %v486 = vcvt.s32.f32 %v484
      %487 = vmin.xlane.f32.xlu0 %v486
      %v488 = vpop.xlane.xlu0 %487
      %vm489 = vcmp.eq.f32.partialorder %v486, %v488
      %v490 = vsel %vm489, %v485, inf
      %491 = vmin.xlane.f32.xlu0 %v490
      %v492 = vpop.xlane.xlu0 %491
      %v493 = vcvt.f32.s32 %v492
      %v494 = vcvt.f32.s32 %v488
      %v495 = vshll.u32 %v494, 16
      %v496 = vadd.s32 %v495, %v493
      %v497 = vsel %vm383, %v481, 2147483647
      %v498 = vand.u32 %v497, 65535
      %v499 = vshra.s32 %v497, 16
      %v500 = vcvt.s32.f32 %v498
      %v501 = vcvt.s32.f32 %v499
      %502 = vmin.xlane.f32.xlu0 %v501
      %v503 = vpop.xlane.xlu0 %502
      %vm504 = vcmp.eq.f32.partialorder %v501, %v503
      %v505 = vsel %vm504, %v500, inf
      %506 = vmin.xlane.f32.xlu0 %v505
      %v507 = vpop.xlane.xlu0 %506
      %v508 = vcvt.f32.s32 %v507
      %v509 = vcvt.f32.s32 %v503
      %v510 = vshll.u32 %v509, 16
      %v511 = vadd.s32 %v510, %v508
      %vm512 = vcmp.eq.s32.totalorder %v382, %v496
      %vm513 = vcmp.eq.s32.totalorder %v382, %v511
      %v514 = vsel %vm512, 1e+30, %v470
      %v515 = vsel %vm513, 1e+30, %v471
      %v516 = vsel %vm383, %v514, inf
      %517 = vmin.xlane.f32.xlu0 %v516
      %v518 = vpop.xlane.xlu0 %517
      %v519 = vsel %vm383, %v515, inf
      %520 = vmin.xlane.f32.xlu0 %v519
      %v521 = vpop.xlane.xlu0 %520
      %vm522 = vcmp.le.f32.partialorder %v514, %v518
      %vm523 = vcmp.le.f32.partialorder %v515, %v521
      %v524 = vsel %vm522, %v382, 16
      %v525 = vsel %vm523, %v382, 16
      %v526 = vsel %vm383, %v524, 2147483647
      %v527 = vand.u32 %v526, 65535
      %v528 = vshra.s32 %v526, 16
      %v529 = vcvt.s32.f32 %v527
      %v530 = vcvt.s32.f32 %v528
      %531 = vmin.xlane.f32.xlu0 %v530
      %v532 = vpop.xlane.xlu0 %531
      %vm533 = vcmp.eq.f32.partialorder %v530, %v532
      %v534 = vsel %vm533, %v529, inf
      %535 = vmin.xlane.f32.xlu0 %v534
      %v536 = vpop.xlane.xlu0 %535
      %v537 = vcvt.f32.s32 %v536
      %v538 = vcvt.f32.s32 %v532
      %v539 = vshll.u32 %v538, 16
      %v540 = vadd.s32 %v539, %v537
      %v541 = vsel %vm383, %v525, 2147483647
      %v542 = vand.u32 %v541, 65535
      %v543 = vshra.s32 %v541, 16
      %v544 = vcvt.s32.f32 %v542
      %v545 = vcvt.s32.f32 %v543
      %546 = vmin.xlane.f32.xlu0 %v545
      %v547 = vpop.xlane.xlu0 %546
      %vm548 = vcmp.eq.f32.partialorder %v545, %v547
      %v549 = vsel %vm548, %v544, inf
      %550 = vmin.xlane.f32.xlu0 %v549
      %v551 = vpop.xlane.xlu0 %550
      %v552 = vcvt.f32.s32 %v551
      %v553 = vcvt.f32.s32 %v547
      %v554 = vshll.u32 %v553, 16
      %v555 = vadd.s32 %v554, %v552
      %vm556 = vcmp.eq.s32.totalorder %v382, %v540
      %vm557 = vcmp.eq.s32.totalorder %v382, %v555
      %v558 = vsel %vm556, 1e+30, %v514
      %v559 = vsel %vm557, 1e+30, %v515
      %v560 = vsel %vm383, %v558, inf
      %561 = vmin.xlane.f32.xlu0 %v560
      %v562 = vpop.xlane.xlu0 %561
      %v563 = vsel %vm383, %v559, inf
      %564 = vmin.xlane.f32.xlu0 %v563
      %v565 = vpop.xlane.xlu0 %564
      %vm566 = vcmp.le.f32.partialorder %v558, %v562
      %vm567 = vcmp.le.f32.partialorder %v559, %v565
      %v568 = vsel %vm566, %v382, 16
      %v569 = vsel %vm567, %v382, 16
      %v570 = vsel %vm383, %v568, 2147483647
      %v571 = vand.u32 %v570, 65535
      %v572 = vshra.s32 %v570, 16
      %v573 = vcvt.s32.f32 %v571
      %v574 = vcvt.s32.f32 %v572
      %575 = vmin.xlane.f32.xlu0 %v574
      %v576 = vpop.xlane.xlu0 %575
      %vm577 = vcmp.eq.f32.partialorder %v574, %v576
      %v578 = vsel %vm577, %v573, inf
      %579 = vmin.xlane.f32.xlu0 %v578
      %v580 = vpop.xlane.xlu0 %579
      %v581 = vcvt.f32.s32 %v580
      %v582 = vcvt.f32.s32 %v576
      %v583 = vshll.u32 %v582, 16
      %v584 = vadd.s32 %v583, %v581
      %v585 = vsel %vm383, %v569, 2147483647
      %v586 = vand.u32 %v585, 65535
      %v587 = vshra.s32 %v585, 16
      %v588 = vcvt.s32.f32 %v586
      %v589 = vcvt.s32.f32 %v587
      %590 = vmin.xlane.f32.xlu0 %v589
      %v591 = vpop.xlane.xlu0 %590
      %vm592 = vcmp.eq.f32.partialorder %v589, %v591
      %v593 = vsel %vm592, %v588, inf
      %594 = vmin.xlane.f32.xlu0 %v593
      %v595 = vpop.xlane.xlu0 %594
      %v596 = vcvt.f32.s32 %v595
      %v597 = vcvt.f32.s32 %v591
      %v598 = vshll.u32 %v597, 16
      %v599 = vadd.s32 %v598, %v596
      %600 = vset.pattern.permute.xlu0 0
      %601 = vperm.xlu0 %600, %v408
      %v602 = vpop.permute.xlu0 %601
      %603 = vset.pattern.permute.xlu0 0
      %604 = vperm.xlu0 %603, %v423
      %v605 = vpop.permute.xlu0 %604
      %606 = vset.pattern.permute.xlu0 0
      %607 = vperm.xlu0 %606, %v452
      %v608 = vpop.permute.xlu0 %607
      %609 = vset.pattern.permute.xlu0 0
      %610 = vperm.xlu0 %609, %v467
      %v611 = vpop.permute.xlu0 %610
      %612 = vset.pattern.permute.xlu0 0
      %613 = vperm.xlu0 %612, %v496
      %v614 = vpop.permute.xlu0 %613
      %615 = vset.pattern.permute.xlu0 0
      %616 = vperm.xlu0 %615, %v511
      %v617 = vpop.permute.xlu0 %616
      %618 = vset.pattern.permute.xlu0 0
      %619 = vperm.xlu0 %618, %v540
      %v620 = vpop.permute.xlu0 %619
      %621 = vset.pattern.permute.xlu0 0
      %622 = vperm.xlu0 %621, %v555
      %v623 = vpop.permute.xlu0 %622
      %624 = vset.pattern.permute.xlu0 0
      %625 = vperm.xlu0 %624, %v584
      %v626 = vpop.permute.xlu0 %625
      %627 = vset.pattern.permute.xlu0 0
      %628 = vperm.xlu0 %627, %v599
      %v629 = vpop.permute.xlu0 %628
      %vm630 = vcmp.eq.s32.totalorder %v382, %v602
      %vm631 = vcmp.eq.s32.totalorder %v382, %v605
      %vm632 = vcmp.eq.s32.totalorder %v382, %v608
      %vm633 = vcmp.eq.s32.totalorder %v382, %v611
      %vm634 = vcmp.eq.s32.totalorder %v382, %v614
      %vm635 = vcmp.eq.s32.totalorder %v382, %v617
      %vm636 = vcmp.eq.s32.totalorder %v382, %v620
      %vm637 = vcmp.eq.s32.totalorder %v382, %v623
      %vm638 = vcmp.eq.s32.totalorder %v382, %v626
      %vm639 = vcmp.eq.s32.totalorder %v382, %v629
      %v640 = vsel %vm630, 1, 0
      %v641 = vsel %vm631, 1, 0
      %v642 = vsel %vm632, 1, 0
      %v643 = vsel %vm633, 1, 0
      %v644 = vsel %vm634, 1, 0
      %v645 = vsel %vm635, 1, 0
      %v646 = vsel %vm636, 1, 0
      %v647 = vsel %vm637, 1, 0
      %v648 = vsel %vm638, 1, 0
      %v649 = vsel %vm639, 1, 0
      %v650 = vcvt.s32.f32 %v640
      %v651 = vcvt.s32.f32 %v641
      %v652 = vcvt.s32.f32 %v642
      %v653 = vcvt.s32.f32 %v643
      %v654 = vcvt.s32.f32 %v644
      %v655 = vcvt.s32.f32 %v645
      %v656 = vcvt.s32.f32 %v646
      %v657 = vcvt.s32.f32 %v647
      %v658 = vcvt.s32.f32 %v648
      %v659 = vcvt.s32.f32 %v649
      %v660 = vpack.c.bf16 %v651, %v650
      %v661 = vpack.c.bf16 %v653, %v652
      %v662 = vpack.c.bf16 %v655, %v654
      %v663 = vpack.c.bf16 %v657, %v656
      %v664 = vpack.c.bf16 %v659, %v658
      %v665 = vpack.c.bf16 %v377, %v373
      %v667 = vsel %vm383, %v660, 0
      %v670 = vsel %vm383, %v661, 0
      %v673 = vsel %vm383, %v662, 0
      %v676 = vsel %vm383, %v663, 0
      %v679 = vsel %vm383, %v664, 0
      %681 = vmatprep.subr.bf16.mxu0 0
      %682 = vmatpush1.bf16.msra.mxu0 0
      %683 = vmatprep.subr.bf16.mxu0 0
      %684 = vmatpush1.bf16.msra.mxu0 0
      %685 = vmatprep.subr.bf16.mxu0 0
      %686 = vmatpush1.bf16.msra.mxu0 0
      %687 = vmatprep.subr.bf16.mxu0 0
      %688 = vmatpush1.bf16.msra.mxu0 0
      %689 = vmatprep.subr.bf16.mxu0 0
      %690 = vmatpush1.bf16.msra.mxu0 0
      %691 = vmatprep.subr.bf16.mxu0 0
      %692 = vmatpush1.bf16.msra.mxu0 0
      %693 = vmatprep.subr.bf16.mxu0 0
      %694 = vmatpush1.bf16.msra.mxu0 0
      %695 = vmatprep.subr.bf16.mxu0 0
      %696 = vmatpush1.bf16.msra.mxu0 %v665
      %697 = vmatprep.subr.bf16.mxu0 0
      %698 = vmatpush2.bf16.msra.mxu0 0
      %699 = vmatprep.subr.bf16.mxu0 0
      %700 = vmatpush2.bf16.msra.mxu0 0
      %701 = vmatprep.subr.bf16.mxu0 0
      %702 = vmatpush2.bf16.msra.mxu0 0
      %703 = vmatprep.subr.bf16.mxu0 0
      %704 = vmatpush2.bf16.msra.mxu0 0
      %705 = vmatprep.subr.bf16.mxu0 0
      %706 = vmatpush2.bf16.msra.mxu0 0
      %707 = vmatprep.subr.bf16.mxu0 0
      %708 = vmatpush2.bf16.msra.mxu0 0
      %709 = vmatprep.subr.bf16.mxu0 0
      %710 = vmatpush2.bf16.msra.mxu0 0
      %711 = vmatprep.subr.bf16.mxu0 0
      %712 = vmatpush2.bf16.msra.mxu0 0
      %713 = vmatprep.mubr.bf16.mxu0 0
      %714 = vmatmul.mubr.bf16.gmra.mxu0 %v667
      %v715 = vpop.f32.mrf.mxu0
      %v716 = vadd.f32 %v375, %v715
      %v717 = vpop.f32.mrf.mxu0
      %v718 = vpop.f32.mrf.mxu0
      %v719 = vadd.f32 %v379, %v718
      %v720 = vpop.f32.mrf.mxu0
      %721 = vmatprep.mubr.bf16.mxu0 0
      %722 = vmatmul.mubr.bf16.gmra.mxu0 %v670
      %v723 = vpop.f32.mrf.mxu0
      %v724 = vadd.f32 %v375, %v723
      %v725 = vpop.f32.mrf.mxu0
      %v726 = vpop.f32.mrf.mxu0
      %v727 = vadd.f32 %v379, %v726
      %v728 = vpop.f32.mrf.mxu0
      %729 = vmatprep.mubr.bf16.mxu0 0
      %730 = vmatmul.mubr.bf16.gmra.mxu0 %v673
      %v731 = vpop.f32.mrf.mxu0
      %v732 = vadd.f32 %v375, %v731
      %v733 = vpop.f32.mrf.mxu0
      %v734 = vpop.f32.mrf.mxu0
      %v735 = vadd.f32 %v379, %v734
      %v736 = vpop.f32.mrf.mxu0
      %737 = vmatprep.mubr.bf16.mxu0 0
      %738 = vmatmul.mubr.bf16.gmra.mxu0 %v676
      %v739 = vpop.f32.mrf.mxu0
      %v740 = vadd.f32 %v375, %v739
      %v741 = vpop.f32.mrf.mxu0
      %v742 = vpop.f32.mrf.mxu0
      %v743 = vadd.f32 %v379, %v742
      %v744 = vpop.f32.mrf.mxu0
      %745 = vmatprep.mubr.bf16.mxu0 0
      %746 = vmatmul.mubr.bf16.gmra.mxu0 %v679
      %v747 = vpop.f32.mrf.mxu0
      %v748 = vadd.f32 %v375, %v747
      %v749 = vpop.f32.mrf.mxu0
      %v750 = vpop.f32.mrf.mxu0
      %v751 = vadd.f32 %v379, %v750
      %v752 = vpop.f32.mrf.mxu0
      %753 = vdwg.mxu0
      %v754 = vadd.f32 %v716, %v719
      %v755 = vadd.f32 %v754, %v724
      %v756 = vadd.f32 %v755, %v727
      %v757 = vadd.f32 %v756, %v732
      %v758 = vadd.f32 %v757, %v735
      %v759 = vadd.f32 %v758, %v740
      %v760 = vadd.f32 %v759, %v743
      %v761 = vadd.f32 %v760, %v748
      %v762 = vadd.f32 %v761, %v751
      %v763 = vrot.slane %v762, 4
      %v764 = vadd.f32 %v762, %v763
      %v765 = vrot.slane %v764, 2
      %v766 = vadd.f32 %v764, %v765
      %v767 = vrot.slane %v766, 1
      %v768 = vadd.f32 %v766, %v767
      %769 = vst [vmem:[%s181] sm:$0x1] %v768
      %v770 = vmul.f32 %v716, %v716
      %v771 = vmul.f32 %v719, %v719
      %v772 = vmul.f32 %v724, %v724
      %v773 = vmul.f32 %v727, %v727
      %v774 = vmul.f32 %v732, %v732
      %v775 = vmul.f32 %v735, %v735
      %v776 = vmul.f32 %v740, %v740
      %v777 = vmul.f32 %v743, %v743
      %v778 = vmul.f32 %v748, %v748
      %v779 = vmul.f32 %v751, %v751
      %v780 = vadd.f32 %v770, %v771
      %v781 = vadd.f32 %v780, %v772
      %v782 = vadd.f32 %v781, %v773
      %v783 = vadd.f32 %v782, %v774
      %v784 = vadd.f32 %v783, %v775
      %v785 = vadd.f32 %v784, %v776
      %v786 = vadd.f32 %v785, %v777
      %v787 = vadd.f32 %v786, %v778
      %v788 = vadd.f32 %v787, %v779
      %v789 = vrot.slane %v788, 4
      %v790 = vadd.f32 %v788, %v789
      %v791 = vrot.slane %v790, 2
      %v792 = vadd.f32 %v790, %v791
      %v793 = vrot.slane %v792, 1
      %v794 = vadd.f32 %v792, %v793
      %795 = vst [vmem:[%s181 + $0x1] sm:$0x1] %v794
      %v796 = vmax.f32 %v716, %v724
      %v797 = vmax.f32 %v719, %v727
      %v798 = vmin.f32 %v716, %v724
      %v799 = vmin.f32 %v719, %v727
      %v800 = vmax.f32 %v796, %v732
      %v801 = vmax.f32 %v797, %v735
      %v802 = vmin.f32 %v798, %v732
      %v803 = vmin.f32 %v799, %v735
      %v804 = vmax.f32 %v800, %v740
      %v805 = vmax.f32 %v801, %v743
      %v806 = vmin.f32 %v802, %v740
      %v807 = vmin.f32 %v803, %v743
      %v808 = vmax.f32 %v804, %v748
      %v809 = vmax.f32 %v805, %v751
      %v810 = vmin.f32 %v806, %v748
      %v811 = vmin.f32 %v807, %v751
      %v812 = vpack.c.bf16 %v809, %v808
      %v814 = vunpack.c.l.b16 %v812
      %v815 = vunpack.c.h.b16 %v812
      %v816 = vpack.c.b16 %v814, %v814
      %v817 = vpack.c.b16 %v815, %v815
      %820 = vst [vmem:[%s177] sm:$0xf] %v816
      %821 = vst [vmem:[%s177 + $0x4] sm:$0xf] %v817
      %v822 = vpack.c.bf16 %v811, %v810
      %v824 = vunpack.c.l.b16 %v822
      %v825 = vunpack.c.h.b16 %v822
      %v826 = vpack.c.b16 %v824, %v824
      %v827 = vpack.c.b16 %v825, %v825
      %830 = vst [vmem:[%s177 + $0x8] sm:$0xf] %v826
      %831 = vst [vmem:[%s177 + $0xc] sm:$0xf] %v827
      %p832 = scmp.lt.s32.totalorder %s15, 1
      %s833 = scalar_select %p832, %s15, 1
      %s834 = smul.addr %s833, 4
      %s835 = smul.addr %s834, 4
      %s836 = scalar_lea.vmem %s2, %s835
      %p837 = scmp.lt.s32.totalorder %s15, 1
      %s838 = scalar_select %p837, %s15, 1
      %s839 = smul.addr %s838, 2
      %s840 = scalar_lea.vmem %s3, %s839
      // Predicated region
      $region29: #{motion_detect_module.4} parent=27 // pred_check
        %p841 = pneg %p80
      $region30: #{motion_detect_module.4} parent=27 // pred_check_branch
        %843 = sbr.rel (%p841) target = $region32
      $region31: #{motion_detect_module.4} parent=27 // pred_region
        _
      $region32: #{motion_detect_module.4} parent=27 // pred_fallthru
        _
      // Predicated region
      $region33: #{motion_detect_module.4} parent=27 // pred_check
        %p844 = pneg %p106
      $region34: #{motion_detect_module.4} parent=27 // pred_check_branch
        %846 = sbr.rel (%p844) target = $region36
      $region35: #{motion_detect_module.4} parent=27 // pred_region
        _
      $region36: #{motion_detect_module.4} parent=27 // pred_fallthru
        _
    $region28: #{motion_detect_module.4} parent=5 // pred_fallthru
      _
    %p847 = scmp.le.s32.totalorder 2, %s10
    // Predicated region
    $region37: #{motion_detect_module.4} parent=5 // pred_check
      %p848 = pneg %p847
    $region38: #{motion_detect_module.4} parent=5 // pred_check_branch
      %850 = sbr.rel (%p848) target = $region40
    $region39: #{motion_detect_module.4} parent=5 // pred_region
      %s851 = ssub.s32 %s10, 2
      // Predicated region
      $region41: #{motion_detect_module.4} parent=39 // pred_check
        %p852 = pneg %p86
      $region42: #{motion_detect_module.4} parent=39 // pred_check_branch
        %854 = sbr.rel (%p852) target = $region44
      $region43: #{motion_detect_module.4} parent=39 // pred_region
        %p855 = scmp.lt.s32.totalorder %s16, 1
        %s856 = scalar_select %p855, %s16, 1
        %s857 = smul.addr %s856, 4
        %s858 = smul.addr %s857, 4
        %s859 = scalar_lea.vmem %s2, %s858
      $region44: #{motion_detect_module.4} parent=39 // pred_fallthru
        _
      // Predicated region
      $region45: #{motion_detect_module.4} parent=39 // pred_check
        %p860 = pneg %p112
      $region46: #{motion_detect_module.4} parent=39 // pred_check_branch
        %862 = sbr.rel (%p860) target = $region48
      $region47: #{motion_detect_module.4} parent=39 // pred_region
        %p863 = scmp.lt.s32.totalorder %s16, 1
        %s864 = scalar_select %p863, %s16, 1
        %s865 = smul.addr %s864, 2
        %s866 = scalar_lea.vmem %s3, %s865
      $region48: #{motion_detect_module.4} parent=39 // pred_fallthru
        _
    $region40: #{motion_detect_module.4} parent=5 // pred_fallthru
      _
  $region6: #{motion_detect_module.4} parent=0 // loop_footer
    %s14 = sadd.s32 1, %s10
  $region7: #{motion_detect_module.4} parent=0 // loop_footer_branch
    %9 = sbr.rel target = $region3
  $region8: #{motion_detect_module.4} parent=0 // loop_exit
    _

// kernel: motion_detect_module.5
$region0: #{motion_detect_module.5}
  #allocation0 [shape = 'u32[]', space=smem, size = 0x4, offset = 0x4, fixed_abs, tag = 'smem constant byte address 0x4 - core index']
  #allocation1 [shape = 'u32[144,128]{1,0:T(1,128)}', space=vmem, size = 0x12000, scoped, tag = 'internal scratch']
  %s0 = inlined_call_operand.vmem [shape: bf16[2,32,128], index: 0, kind: input, shape index: {}]
  %s1 = inlined_call_operand.vmem [shape: f32[1,128], index: 1, kind: input, shape index: {}]
  %s2 = inlined_call_operand.vmem [shape: f32[1,128], index: 2, kind: input, shape index: {}]
  %s3 = inlined_call_operand.vmem [shape: bf16[128,512], index: 3, kind: input, shape index: {}]
  %s4 = inlined_call_operand.vmem [shape: bf16[2,32,256], index: 4, kind: output, shape index: {0}]
  %s5 = inlined_call_operand.vmem [shape: f32[2,2,256], index: 5, kind: output, shape index: {1}]
  %6 = xla_tuple %s4, %s5
  %s7 = sld [smem:[#allocation0]]
  $region57: #{motion_detect_module.5} parent=0
    _
  %s9 = ssub.s32 1, %s7
  %s10 = scalar_select 0, %s9, %s7
  loop: start=0, step=1, limit=4
  $region2: #{motion_detect_module.5} parent=0 // loop_pre_header
    _
  $region3: #{motion_detect_module.5} parent=0 // loop_header
    %s12 = sphi 0, %s16
    %p13 = scmp.ge.s32.totalorder %s12, 4
    %s22 = sphi 0, %s24
    %s25 = sphi 0, %s22
    %s26 = sphi 0, %s25
    %s42 = sphi 0, %s26
    %s46 = sphi 0, %s46
    %s48 = sphi 0, %s46
    %s49 = sphi 0, %s48
    %s63 = sphi 0, %s49
    %s67 = sphi 0, %s67
    %s69 = sphi 0, %s67
    %s70 = sphi 0, %s69
    %s84 = sphi 0, %s70
    %s88 = sphi 0, %s88
    %s90 = sphi 0, %s88
    %s91 = sphi 0, %s90
    %s105 = sphi 0, %s91
    %s111 = sphi 0, %s113
    %s114 = sphi 0, %s111
    %s115 = sphi 0, %s114
    %s131 = sphi 0, %s115
    %s137 = sphi 0, %s139
    %s140 = sphi 0, %s137
    %s141 = sphi 0, %s140
    %s157 = sphi 0, %s141
  $region4: #{motion_detect_module.5} parent=0 // loop_header_branch
    %15 = sbr.rel (%p13) target = $region8
  $region5: #{motion_detect_module.5} parent=0 // loop_body
    %s17 = ssub.s32 %s12, 1
    %s18 = ssub.s32 %s12, 2
    %s19 = sadd.s32 %s12, 1
    %s20 = ssub.s32 %s12, %s19
    %p21 = scmp.eq.s32.totalorder %s20, 0
    %s23 = sadd.s32 %s22, 1
    %s24 = scalar_select %p21, %s22, %s23
    %p27 = pneg %p21
    %p28 = scmp.eq.s32.totalorder %s12, 1
    %p29 = por %p27, %p28
    %p30 = scmp.ne.s32.totalorder %s22, %s25
    %p31 = scmp.eq.s32.totalorder %s12, 0
    %p32 = por %p30, %p31
    %p33 = scmp.ne.s32.totalorder %s22, %s25
    %p34 = scmp.eq.s32.totalorder %s17, 1
    %p35 = por %p33, %p34
    %p36 = scmp.ne.s32.totalorder %s25, %s26
    %p37 = scmp.eq.s32.totalorder %s17, 0
    %p38 = por %p36, %p37
    %p39 = scmp.ne.s32.totalorder %s25, %s26
    %p40 = scmp.eq.s32.totalorder %s18, 1
    %p41 = por %p39, %p40
    %p43 = scmp.ne.s32.totalorder %s26, %s42
    %p44 = scmp.eq.s32.totalorder %s18, 0
    %p45 = por %p43, %p44
    %s47 = sadd.s32 %s46, 1
    %p50 = scmp.eq.s32.totalorder %s12, 1
    %p51 = scmp.ne.s32.totalorder %s46, %s48
    %p52 = scmp.eq.s32.totalorder %s12, 0
    %p53 = por %p51, %p52
    %p54 = scmp.ne.s32.totalorder %s46, %s48
    %p55 = scmp.eq.s32.totalorder %s17, 1
    %p56 = por %p54, %p55
    %p57 = scmp.ne.s32.totalorder %s48, %s49
    %p58 = scmp.eq.s32.totalorder %s17, 0
    %p59 = por %p57, %p58
    %p60 = scmp.ne.s32.totalorder %s48, %s49
    %p61 = scmp.eq.s32.totalorder %s18, 1
    %p62 = por %p60, %p61
    %p64 = scmp.ne.s32.totalorder %s49, %s63
    %p65 = scmp.eq.s32.totalorder %s18, 0
    %p66 = por %p64, %p65
    %s68 = sadd.s32 %s67, 1
    %p71 = scmp.eq.s32.totalorder %s12, 1
    %p72 = scmp.ne.s32.totalorder %s67, %s69
    %p73 = scmp.eq.s32.totalorder %s12, 0
    %p74 = por %p72, %p73
    %p75 = scmp.ne.s32.totalorder %s67, %s69
    %p76 = scmp.eq.s32.totalorder %s17, 1
    %p77 = por %p75, %p76
    %p78 = scmp.ne.s32.totalorder %s69, %s70
    %p79 = scmp.eq.s32.totalorder %s17, 0
    %p80 = por %p78, %p79
    %p81 = scmp.ne.s32.totalorder %s69, %s70
    %p82 = scmp.eq.s32.totalorder %s18, 1
    %p83 = por %p81, %p82
    %p85 = scmp.ne.s32.totalorder %s70, %s84
    %p86 = scmp.eq.s32.totalorder %s18, 0
    %p87 = por %p85, %p86
    %s89 = sadd.s32 %s88, 1
    %p92 = scmp.eq.s32.totalorder %s12, 1
    %p93 = scmp.ne.s32.totalorder %s88, %s90
    %p94 = scmp.eq.s32.totalorder %s12, 0
    %p95 = por %p93, %p94
    %p96 = scmp.ne.s32.totalorder %s88, %s90
    %p97 = scmp.eq.s32.totalorder %s17, 1
    %p98 = por %p96, %p97
    %p99 = scmp.ne.s32.totalorder %s90, %s91
    %p100 = scmp.eq.s32.totalorder %s17, 0
    %p101 = por %p99, %p100
    %p102 = scmp.ne.s32.totalorder %s90, %s91
    %p103 = scmp.eq.s32.totalorder %s18, 1
    %p104 = por %p102, %p103
    %p106 = scmp.ne.s32.totalorder %s91, %s105
    %p107 = scmp.eq.s32.totalorder %s18, 0
    %p108 = por %p106, %p107
    %s109 = ssub.s32 %s12, %s19
    %p110 = scmp.eq.s32.totalorder %s109, 0
    %s112 = sadd.s32 %s111, 1
    %s113 = scalar_select %p110, %s111, %s112
    %p116 = pneg %p110
    %p117 = scmp.eq.s32.totalorder %s12, 1
    %p118 = por %p116, %p117
    %p119 = scmp.ne.s32.totalorder %s111, %s114
    %p120 = scmp.eq.s32.totalorder %s12, 0
    %p121 = por %p119, %p120
    %p122 = scmp.ne.s32.totalorder %s111, %s114
    %p123 = scmp.eq.s32.totalorder %s17, 1
    %p124 = por %p122, %p123
    %p125 = scmp.ne.s32.totalorder %s114, %s115
    %p126 = scmp.eq.s32.totalorder %s17, 0
    %p127 = por %p125, %p126
    %p128 = scmp.ne.s32.totalorder %s114, %s115
    %p129 = scmp.eq.s32.totalorder %s18, 1
    %p130 = por %p128, %p129
    %p132 = scmp.ne.s32.totalorder %s115, %s131
    %p133 = scmp.eq.s32.totalorder %s18, 0
    %p134 = por %p132, %p133
    %s135 = ssub.s32 %s12, %s19
    %p136 = scmp.eq.s32.totalorder %s135, 0
    %s138 = sadd.s32 %s137, 1
    %s139 = scalar_select %p136, %s137, %s138
    %p142 = pneg %p136
    %p143 = scmp.eq.s32.totalorder %s12, 1
    %p144 = por %p142, %p143
    %p145 = scmp.ne.s32.totalorder %s137, %s140
    %p146 = scmp.eq.s32.totalorder %s12, 0
    %p147 = por %p145, %p146
    %p148 = scmp.ne.s32.totalorder %s137, %s140
    %p149 = scmp.eq.s32.totalorder %s17, 1
    %p150 = por %p148, %p149
    %p151 = scmp.ne.s32.totalorder %s140, %s141
    %p152 = scmp.eq.s32.totalorder %s17, 0
    %p153 = por %p151, %p152
    %p154 = scmp.ne.s32.totalorder %s140, %s141
    %p155 = scmp.eq.s32.totalorder %s18, 1
    %p156 = por %p154, %p155
    %p158 = scmp.ne.s32.totalorder %s141, %s157
    %p159 = scmp.eq.s32.totalorder %s18, 0
    %p160 = por %p158, %p159
    %p161 = scmp.le.s32.totalorder 1, %s12
    %p162 = scmp.lt.s32.totalorder %s12, 3
    %p163 = pnand %p161, %p162
    %p164 = pneg %p163
    // Predicated region
    $region9: #{motion_detect_module.5} parent=5 // pred_check
      _
    $region10: #{motion_detect_module.5} parent=5 // pred_check_branch
      %166 = sbr.rel (%p163) target = $region12
    $region11: #{motion_detect_module.5} parent=5 // pred_region
      %s167 = ssub.s32 %s12, 1
      // Predicated region
      $region13: #{motion_detect_module.5} parent=11 // pred_check
        %p168 = pneg %p59
      $region14: #{motion_detect_module.5} parent=11 // pred_check_branch
        %170 = sbr.rel (%p168) target = $region16
      $region15: #{motion_detect_module.5} parent=11 // pred_region
        _
      $region16: #{motion_detect_module.5} parent=11 // pred_fallthru
        _
      // Predicated region
      $region17: #{motion_detect_module.5} parent=11 // pred_check
        %p171 = pneg %p80
      $region18: #{motion_detect_module.5} parent=11 // pred_check_branch
        %173 = sbr.rel (%p171) target = $region20
      $region19: #{motion_detect_module.5} parent=11 // pred_region
        _
      $region20: #{motion_detect_module.5} parent=11 // pred_fallthru
        _
      // Predicated region
      $region21: #{motion_detect_module.5} parent=11 // pred_check
        %p174 = pneg %p101
      $region22: #{motion_detect_module.5} parent=11 // pred_check_branch
        %176 = sbr.rel (%p174) target = $region24
      $region23: #{motion_detect_module.5} parent=11 // pred_region
        _
      $region24: #{motion_detect_module.5} parent=11 // pred_fallthru
        _
    $region12: #{motion_detect_module.5} parent=5 // pred_fallthru
      _
    %p177 = scmp.lt.s32.totalorder %s12, 2
    // Predicated region
    $region25: #{motion_detect_module.5} parent=5 // pred_check
      %p178 = pneg %p177
    $region26: #{motion_detect_module.5} parent=5 // pred_check_branch
      %180 = sbr.rel (%p178) target = $region28
    $region27: #{motion_detect_module.5} parent=5 // pred_region
      // Predicated region
      $region29: #{motion_detect_module.5} parent=27 // pred_check
        %p181 = pneg %p32
      $region30: #{motion_detect_module.5} parent=27 // pred_check_branch
        %183 = sbr.rel (%p181) target = $region32
      $region31: #{motion_detect_module.5} parent=27 // pred_region
        %p184 = scmp.lt.s32.totalorder %s12, 1
        %s185 = scalar_select %p184, %s12, 1
        %s186 = smul.addr %s185, 4
        %s187 = smul.addr %s186, 4
        %s188 = scalar_lea.vmem %s0, %s187
      $region32: #{motion_detect_module.5} parent=27 // pred_fallthru
        _
    $region28: #{motion_detect_module.5} parent=5 // pred_fallthru
      _
    %p189 = scmp.le.s32.totalorder 1, %s12
    %p190 = scmp.lt.s32.totalorder %s12, 3
    %p191 = pnand %p189, %p190
    %p192 = pneg %p191
    // Predicated region
    $region33: #{motion_detect_module.5} parent=5 // pred_check
      _
    $region34: #{motion_detect_module.5} parent=5 // pred_check_branch
      %194 = sbr.rel (%p191) target = $region36
    $region35: #{motion_detect_module.5} parent=5 // pred_region
      %s195 = ssub.s32 %s12, 1
      %p196 = scmp.lt.s32.totalorder %s17, 1
      %s197 = scalar_select %p196, %s17, 1
      %s198 = smul.addr %s197, 4
      %s199 = smul.addr %s198, 4
      %s200 = scalar_lea.vmem %s0, %s199
      %p201 = pneg %p38
      %p202 = pneg %p35
      %p203 = pneg %p59
      %p204 = pneg %p56
      %p205 = pneg %p80
      %p206 = pneg %p77
      %p207 = pneg %p101
      %p208 = pneg %p98
      %p209 = pneg %p127
      %p210 = pneg %p124
      %p211 = scmp.lt.s32.totalorder %s17, 1
      %s212 = scalar_select %p211, %s17, 1
      %s213 = smul.addr %s212, 8
      %s214 = smul.addr %s213, 4
      %s215 = scalar_lea.vmem %s4, %s214
      %p216 = pneg %p153
      %p217 = pneg %p150
      %p218 = scmp.lt.s32.totalorder %s17, 1
      %s219 = scalar_select %p218, %s17, 1
      %s220 = smul.addr %s219, 2
      %s221 = smul.addr %s220, 2
      %s222 = scalar_lea.vmem %s5, %s221
      %p223 = scmp.lt.s32.totalorder %s17, 1
      %s224 = scalar_select %p223, %s17, 1
      %s225 = smul.addr %s224, 4
      %s226 = smul.addr %s225, 4
      %s227 = scalar_lea.vmem %s0, %s226
      %p228 = scmp.lt.s32.totalorder %s17, 1
      %s229 = scalar_select %p228, %s17, 1
      %s230 = smul.addr %s229, 8
      %s231 = smul.addr %s230, 4
      %s232 = scalar_lea.vmem %s4, %s231
      %p233 = scmp.lt.s32.totalorder %s17, 1
      %s234 = scalar_select %p233, %s17, 1
      %s235 = smul.addr %s234, 2
      %s236 = smul.addr %s235, 2
      %s237 = scalar_lea.vmem %s5, %s236
      %v239 = vld [vmem:[%s227] sm:$0xf]
      %v240 = vld [vmem:[%s227 + $0x4] sm:$0xf]
      %v241 = vld [vmem:[%s227 + $0x8] sm:$0xf]
      %v242 = vld [vmem:[%s227 + $0xc] sm:$0xf]
      %v243 = vld [vmem:[%s1] sm:$0x1]
      %v244 = vld [vmem:[%s2] sm:$0x1]
      %vm245 = vcmp.ge.f32.partialorder %v243, 0.0
      %v246 = vunpack.c.l.bf16 %v239
      %v247 = vunpack.c.l.bf16 %v240
      %v249 = vlaneseq
      %v250 = vshrl.u32 %v249, 7
      %v251 = vsub.s32 0, %v250
      %v252 = vrot.slane %v243, %v251
      %v254 = vmul.f32 %v252, %v246
      %v255 = vmul.f32 %v252, %v247
      %v256 = vunpack.c.l.bf16 %v241
      %v257 = vunpack.c.l.bf16 %v242
      %v258 = vmul.f32 %v252, %v256
      %v259 = vmul.f32 %v252, %v257
      %v260 = vsel %vm245, 1, 0
      %v261 = vlaneseq
      %v262 = vshrl.u32 %v261, 7
      %v263 = vsub.s32 0, %v262
      %v264 = vrot.slane %v260, %v263
      %vm265 = vcmp.eq.s32.totalorder %v264, 1
      %v266 = vsel %vm265, %v254, %v258
      %v267 = vsel %vm265, %v255, %v259
      %v269 = vlaneseq
      %v270 = vshrl.u32 %v269, 7
      %v271 = vsub.s32 0, %v270
      %v272 = vrot.slane %v244, %v271
      %v274 = vadd.f32 %v266, %v272
      %v275 = vadd.f32 %v267, %v272
      %vm276 = vcmp.ge.f32.partialorder %v274, 0.0
      %vm277 = vcmp.ge.f32.partialorder %v275, 0.0
      %v278 = vmul.f32 %v274, 0.2
      %v279 = vmul.f32 %v275, 0.2
      %v280 = vsel %vm276, %v274, %v278
      %v281 = vsel %vm277, %v275, %v279
      %v282 = vmul.f32 %v280, %v280
      %v283 = vmul.f32 %v281, %v281
      %284 = vadd.xlane.f32.xlu0 %v282
      %v285 = vpop.xlane.xlu0 %284
      %286 = vadd.xlane.f32.xlu0 %v283
      %v287 = vpop.xlane.xlu0 %286
      %288 = vmatprep.subr.mxu0 0.0
      %289 = vmatpush1.xpose.msra.mxu0 0.0
      %290 = vmatprep.subr.mxu0 0.0
      %291 = vmatpush1.xpose.msra.mxu0 0.0
      %292 = vmatprep.subr.mxu0 0.0
      %293 = vmatpush1.xpose.msra.mxu0 0.0
      %294 = vmatprep.subr.mxu0 0.0
      %295 = vmatpush1.xpose.msra.mxu0 0.0
      %296 = vmatprep.subr.mxu0 0.0
      %297 = vmatpush1.xpose.msra.mxu0 0.0
      %298 = vmatprep.subr.mxu0 0.0
      %299 = vmatpush1.xpose.msra.mxu0 0.0
      %300 = vmatprep.subr.mxu0 0.0
      %301 = vmatpush1.xpose.msra.mxu0 0.0
      %302 = vmatprep.subr.mxu0 0.0
      %303 = vmatpush1.xpose.msra.mxu0 0.0
      %304 = vmatprep.subr.mxu0 0.0
      %305 = vmatpush1.xpose.msra.mxu0 0.0
      %306 = vmatprep.subr.mxu0 0.0
      %307 = vmatpush1.xpose.msra.mxu0 0.0
      %308 = vmatprep.subr.mxu0 0.0
      %309 = vmatpush1.xpose.msra.mxu0 0.0
      %310 = vmatprep.subr.mxu0 0.0
      %311 = vmatpush1.xpose.msra.mxu0 0.0
      %312 = vmatprep.subr.mxu0 0.0
      %313 = vmatpush1.xpose.msra.mxu0 0.0
      %314 = vmatprep.subr.mxu0 0.0
      %315 = vmatpush1.xpose.msra.mxu0 0.0
      %316 = vmatprep.subr.mxu0 0.0
      %317 = vmatpush1.xpose.msra.mxu0 %v281
      %318 = vmatprep.subr.mxu0 0.0
      %319 = vmatpush1.xpose.msra.mxu0 %v280
      %320 = vmatprep.subr.mxu0 0.0
      %321 = vmatpush2.xpose.msra.mxu0 0.0
      %322 = vmatprep.subr.mxu0 0.0
      %323 = vmatpush2.xpose.msra.mxu0 0.0
      %324 = vmatprep.subr.mxu0 0.0
      %325 = vmatpush2.xpose.msra.mxu0 0.0
      %326 = vmatprep.subr.mxu0 0.0
      %327 = vmatpush2.xpose.msra.mxu0 0.0
      %328 = vmatprep.subr.mxu0 0.0
      %329 = vmatpush2.xpose.msra.mxu0 0.0
      %330 = vmatprep.subr.mxu0 0.0
      %331 = vmatpush2.xpose.msra.mxu0 0.0
      %332 = vmatprep.subr.mxu0 0.0
      %333 = vmatpush2.xpose.msra.mxu0 0.0
      %334 = vmatprep.subr.mxu0 0.0
      %335 = vmatpush2.xpose.msra.mxu0 0.0
      %336 = vmatprep.subr.mxu0 0.0
      %337 = vmatpush2.xpose.msra.mxu0 0.0
      %338 = vmatprep.subr.mxu0 0.0
      %339 = vmatpush2.xpose.msra.mxu0 0.0
      %340 = vmatprep.subr.mxu0 0.0
      %341 = vmatpush2.xpose.msra.mxu0 0.0
      %342 = vmatprep.subr.mxu0 0.0
      %343 = vmatpush2.xpose.msra.mxu0 0.0
      %344 = vmatprep.subr.mxu0 0.0
      %345 = vmatpush2.xpose.msra.mxu0 0.0
      %346 = vmatprep.subr.mxu0 0.0
      %347 = vmatpush2.xpose.msra.mxu0 0.0
      %348 = vmatprep.subr.mxu0 0.0
      %349 = vmatpush2.xpose.msra.mxu0 0.0
      %350 = vmatprep.subr.mxu0 0.0
      %351 = vmatpush2.xpose.msra.mxu0 0.0
      %352 = vmatprep.mubr.f32.mxu0 0.0
      %353 = vmatmul.mubr.f32.gmra.mxu0 %v280
      %v354 = vpop.f32.mrf.mxu0
      %v355 = vadd.f32 0.0, %v354
      %v356 = vpop.f32.mrf.mxu0
      %357 = vmatprep.mubr.f32.mxu0 0.0
      %358 = vmatmul.mubr.f32.gmra.mxu0 %v281
      %v359 = vpop.f32.mrf.mxu0
      %v360 = vadd.f32 0.0, %v359
      %v361 = vpop.f32.mrf.mxu0
      %362 = vdwg.mxu0
      %363 = vxpose.xlu0.b32.start [1/16] %v285, 128
      %364 = vxpose.xlu0.b32.cont [2/16] %v287, 128
      %365 = vxpose.xlu0.b32.cont [3/16] 0.0, 128
      %366 = vxpose.xlu0.b32.cont [4/16] 0.0, 128
      %367 = vxpose.xlu0.b32.cont [5/16] 0.0, 128
      %368 = vxpose.xlu0.b32.cont [6/16] 0.0, 128
      %369 = vxpose.xlu0.b32.cont [7/16] 0.0, 128
      %370 = vxpose.xlu0.b32.cont [8/16] 0.0, 128
      %371 = vxpose.xlu0.b32.cont [9/16] 0.0, 128
      %372 = vxpose.xlu0.b32.cont [10/16] 0.0, 128
      %373 = vxpose.xlu0.b32.cont [11/16] 0.0, 128
      %374 = vxpose.xlu0.b32.cont [12/16] 0.0, 128
      %375 = vxpose.xlu0.b32.cont [13/16] 0.0, 128
      %376 = vxpose.xlu0.b32.cont [14/16] 0.0, 128
      %377 = vxpose.xlu0.b32.cont [15/16] 0.0, 128
      %378 = vxpose.xlu0.b32.end [16/16] 0.0, 128
      %v379 = vpop.trf.xlu0
      %v380 = vpop.trf.xlu0
      %v381 = vpop.trf.xlu0
      %v382 = vpop.trf.xlu0
      %v383 = vpop.trf.xlu0
      %v384 = vpop.trf.xlu0
      %v385 = vpop.trf.xlu0
      %v386 = vpop.trf.xlu0
      %v387 = vpop.trf.xlu0
      %v388 = vpop.trf.xlu0
      %v389 = vpop.trf.xlu0
      %v390 = vpop.trf.xlu0
      %v391 = vpop.trf.xlu0
      %v392 = vpop.trf.xlu0
      %v393 = vpop.trf.xlu0
      %v394 = vpop.trf.xlu0
      %v395 = vlaneseq
      %v396 = vshrl.u32 %v395, 7
      %v397 = vsub.s32 0, %v396
      %v398 = vrot.slane %v379, %v397
      %v399 = vadd.f32 %v285, %v398
      %v400 = vadd.f32 %v287, %v398
      %v401 = vmul.f32 %v355, 2.0
      %v402 = vmul.f32 %v360, 2.0
      %v403 = vsub.f32 %v399, %v401
      %v404 = vsub.f32 %v400, %v402
      %v405 = vpack.c.bf16 %v281, %v280
      %v406 = vld [vmem:[%s3] sm:$0xff]
      %v407 = vld [vmem:[%s3 + $0x8] sm:$0xff]
      %v408 = vld [vmem:[%s3 + $0x10] sm:$0xff]
      %v409 = vld [vmem:[%s3 + $0x18] sm:$0xff]
      %v410 = vld [vmem:[%s3 + $0x20] sm:$0xff]
      %v411 = vld [vmem:[%s3 + $0x28] sm:$0xff]
      %v412 = vld [vmem:[%s3 + $0x30] sm:$0xff]
      %v413 = vld [vmem:[%s3 + $0x38] sm:$0xff]
      %v414 = vld [vmem:[%s3 + $0x40] sm:$0xff]
      %v415 = vld [vmem:[%s3 + $0x48] sm:$0xff]
      %v416 = vld [vmem:[%s3 + $0x50] sm:$0xff]
      %v417 = vld [vmem:[%s3 + $0x58] sm:$0xff]
      %v418 = vld [vmem:[%s3 + $0x60] sm:$0xff]
      %v419 = vld [vmem:[%s3 + $0x68] sm:$0xff]
      %v420 = vld [vmem:[%s3 + $0x70] sm:$0xff]
      %v421 = vld [vmem:[%s3 + $0x78] sm:$0xff]
      %v422 = vld [vmem:[%s3 + $0x80] sm:$0xff]
      %v423 = vld [vmem:[%s3 + $0x88] sm:$0xff]
      %v424 = vld [vmem:[%s3 + $0x90] sm:$0xff]
      %v425 = vld [vmem:[%s3 + $0x98] sm:$0xff]
      %v426 = vld [vmem:[%s3 + $0xa0] sm:$0xff]
      %v427 = vld [vmem:[%s3 + $0xa8] sm:$0xff]
      %v428 = vld [vmem:[%s3 + $0xb0] sm:$0xff]
      %v429 = vld [vmem:[%s3 + $0xb8] sm:$0xff]
      %v430 = vld [vmem:[%s3 + $0xc0] sm:$0xff]
      %v431 = vld [vmem:[%s3 + $0xc8] sm:$0xff]
      %v432 = vld [vmem:[%s3 + $0xd0] sm:$0xff]
      %v433 = vld [vmem:[%s3 + $0xd8] sm:$0xff]
      %v434 = vld [vmem:[%s3 + $0xe0] sm:$0xff]
      %v435 = vld [vmem:[%s3 + $0xe8] sm:$0xff]
      %v436 = vld [vmem:[%s3 + $0xf0] sm:$0xff]
      %v437 = vld [vmem:[%s3 + $0xf8] sm:$0xff]
      %v470 = vunpack.c.l.b16 %v406
      %v471 = vunpack.c.h.b16 %v406
      %v472 = vunpack.c.l.b16 %v407
      %v473 = vunpack.c.h.b16 %v407
      %v474 = vunpack.c.l.b16 %v408
      %v475 = vunpack.c.h.b16 %v408
      %v476 = vunpack.c.l.b16 %v409
      %v477 = vunpack.c.h.b16 %v409
      %v478 = vunpack.c.l.b16 %v410
      %v479 = vunpack.c.h.b16 %v410
      %v480 = vunpack.c.l.b16 %v411
      %v481 = vunpack.c.h.b16 %v411
      %v482 = vunpack.c.l.b16 %v412
      %v483 = vunpack.c.h.b16 %v412
      %v484 = vunpack.c.l.b16 %v413
      %v485 = vunpack.c.h.b16 %v413
      %v486 = vunpack.c.l.b16 %v414
      %v487 = vunpack.c.h.b16 %v414
      %v488 = vunpack.c.l.b16 %v415
      %v489 = vunpack.c.h.b16 %v415
      %v490 = vunpack.c.l.b16 %v416
      %v491 = vunpack.c.h.b16 %v416
      %v492 = vunpack.c.l.b16 %v417
      %v493 = vunpack.c.h.b16 %v417
      %v494 = vunpack.c.l.b16 %v418
      %v495 = vunpack.c.h.b16 %v418
      %v496 = vunpack.c.l.b16 %v419
      %v497 = vunpack.c.h.b16 %v419
      %v498 = vunpack.c.l.b16 %v420
      %v499 = vunpack.c.h.b16 %v420
      %v500 = vunpack.c.l.b16 %v421
      %v501 = vunpack.c.h.b16 %v421
      %v502 = vunpack.c.l.b16 %v422
      %v503 = vunpack.c.h.b16 %v422
      %v504 = vunpack.c.l.b16 %v423
      %v505 = vunpack.c.h.b16 %v423
      %v506 = vunpack.c.l.b16 %v424
      %v507 = vunpack.c.h.b16 %v424
      %v508 = vunpack.c.l.b16 %v425
      %v509 = vunpack.c.h.b16 %v425
      %v510 = vunpack.c.l.b16 %v426
      %v511 = vunpack.c.h.b16 %v426
      %v512 = vunpack.c.l.b16 %v427
      %v513 = vunpack.c.h.b16 %v427
      %v514 = vunpack.c.l.b16 %v428
      %v515 = vunpack.c.h.b16 %v428
      %v516 = vunpack.c.l.b16 %v429
      %v517 = vunpack.c.h.b16 %v429
      %v518 = vunpack.c.l.b16 %v430
      %v519 = vunpack.c.h.b16 %v430
      %v520 = vunpack.c.l.b16 %v431
      %v521 = vunpack.c.h.b16 %v431
      %v522 = vunpack.c.l.b16 %v432
      %v523 = vunpack.c.h.b16 %v432
      %v524 = vunpack.c.l.b16 %v433
      %v525 = vunpack.c.h.b16 %v433
      %v526 = vunpack.c.l.b16 %v434
      %v527 = vunpack.c.h.b16 %v434
      %v528 = vunpack.c.l.b16 %v435
      %v529 = vunpack.c.h.b16 %v435
      %v530 = vunpack.c.l.b16 %v436
      %v531 = vunpack.c.h.b16 %v436
      %v532 = vunpack.c.l.b16 %v437
      %v533 = vunpack.c.h.b16 %v437
      %v534 = vpack.c.b16 %v474, %v470
      %v535 = vpack.c.b16 %v475, %v471
      %v536 = vpack.c.b16 %v476, %v472
      %v537 = vpack.c.b16 %v477, %v473
      %v538 = vpack.c.b16 %v482, %v478
      %v539 = vpack.c.b16 %v483, %v479
      %v540 = vpack.c.b16 %v484, %v480
      %v541 = vpack.c.b16 %v485, %v481
      %v542 = vpack.c.b16 %v490, %v486
      %v543 = vpack.c.b16 %v491, %v487
      %v544 = vpack.c.b16 %v492, %v488
      %v545 = vpack.c.b16 %v493, %v489
      %v546 = vpack.c.b16 %v498, %v494
      %v547 = vpack.c.b16 %v499, %v495
      %v548 = vpack.c.b16 %v500, %v496
      %v549 = vpack.c.b16 %v501, %v497
      %v550 = vpack.c.b16 %v506, %v502
      %v551 = vpack.c.b16 %v507, %v503
      %v552 = vpack.c.b16 %v508, %v504
      %v553 = vpack.c.b16 %v509, %v505
      %v554 = vpack.c.b16 %v514, %v510
      %v555 = vpack.c.b16 %v515, %v511
      %v556 = vpack.c.b16 %v516, %v512
      %v557 = vpack.c.b16 %v517, %v513
      %v558 = vpack.c.b16 %v522, %v518
      %v559 = vpack.c.b16 %v523, %v519
      %v560 = vpack.c.b16 %v524, %v520
      %v561 = vpack.c.b16 %v525, %v521
      %v562 = vpack.c.b16 %v530, %v526
      %v563 = vpack.c.b16 %v531, %v527
      %v564 = vpack.c.b16 %v532, %v528
      %v565 = vpack.c.b16 %v533, %v529
      %598 = vmatprep.subr.bf16.mxu0 %v563
      %599 = vmatpush1.bf16.msra.mxu0 %v562
      %600 = vmatprep.subr.bf16.mxu0 %v559
      %601 = vmatpush1.bf16.msra.mxu0 %v558
      %602 = vmatprep.subr.bf16.mxu0 %v555
      %603 = vmatpush1.bf16.msra.mxu0 %v554
      %604 = vmatprep.subr.bf16.mxu0 %v551
      %605 = vmatpush1.bf16.msra.mxu0 %v550
      %606 = vmatprep.subr.bf16.mxu0 %v547
      %607 = vmatpush1.bf16.msra.mxu0 %v546
      %608 = vmatprep.subr.bf16.mxu0 %v543
      %609 = vmatpush1.bf16.msra.mxu0 %v542
      %610 = vmatprep.subr.bf16.mxu0 %v539
      %611 = vmatpush1.bf16.msra.mxu0 %v538
      %612 = vmatprep.subr.bf16.mxu0 %v535
      %613 = vmatpush1.bf16.msra.mxu0 %v534
      %614 = vmatprep.subr.bf16.mxu0 0
      %615 = vmatpush2.bf16.msra.mxu0 0
      %616 = vmatprep.subr.bf16.mxu0 0
      %617 = vmatpush2.bf16.msra.mxu0 0
      %618 = vmatprep.subr.bf16.mxu0 0
      %619 = vmatpush2.bf16.msra.mxu0 0
      %620 = vmatprep.subr.bf16.mxu0 0
      %621 = vmatpush2.bf16.msra.mxu0 0
      %622 = vmatprep.subr.bf16.mxu0 0
      %623 = vmatpush2.bf16.msra.mxu0 0
      %624 = vmatprep.subr.bf16.mxu0 0
      %625 = vmatpush2.bf16.msra.mxu0 0
      %626 = vmatprep.subr.bf16.mxu0 0
      %627 = vmatpush2.bf16.msra.mxu0 0
      %628 = vmatprep.subr.bf16.mxu0 0
      %629 = vmatpush2.bf16.msra.mxu0 0
      %630 = vmatprep.mubr.bf16.mxu0 0
      %631 = vmatmul.mubr.bf16.gmra.mxu0 %v405
      %v632 = vpop.f32.mrf.mxu0
      %v633 = vadd.f32 0.0, %v632
      %v634 = vpop.f32.mrf.mxu0
      %v635 = vadd.f32 0.0, %v634
      %v636 = vpop.f32.mrf.mxu0
      %v637 = vadd.f32 0.0, %v636
      %v638 = vpop.f32.mrf.mxu0
      %v639 = vadd.f32 0.0, %v638
      %640 = vdwg.mxu0
      %641 = vmatprep.subr.bf16.mxu0 %v565
      %642 = vmatpush1.bf16.msra.mxu0 %v564
      %643 = vmatprep.subr.bf16.mxu0 %v561
      %644 = vmatpush1.bf16.msra.mxu0 %v560
      %645 = vmatprep.subr.bf16.mxu0 %v557
      %646 = vmatpush1.bf16.msra.mxu0 %v556
      %647 = vmatprep.subr.bf16.mxu0 %v553
      %648 = vmatpush1.bf16.msra.mxu0 %v552
      %649 = vmatprep.subr.bf16.mxu0 %v549
      %650 = vmatpush1.bf16.msra.mxu0 %v548
      %651 = vmatprep.subr.bf16.mxu0 %v545
      %652 = vmatpush1.bf16.msra.mxu0 %v544
      %653 = vmatprep.subr.bf16.mxu0 %v541
      %654 = vmatpush1.bf16.msra.mxu0 %v540
      %655 = vmatprep.subr.bf16.mxu0 %v537
      %656 = vmatpush1.bf16.msra.mxu0 %v536
      %657 = vmatprep.subr.bf16.mxu0 0
      %658 = vmatpush2.bf16.msra.mxu0 0
      %659 = vmatprep.subr.bf16.mxu0 0
      %660 = vmatpush2.bf16.msra.mxu0 0
      %661 = vmatprep.subr.bf16.mxu0 0
      %662 = vmatpush2.bf16.msra.mxu0 0
      %663 = vmatprep.subr.bf16.mxu0 0
      %664 = vmatpush2.bf16.msra.mxu0 0
      %665 = vmatprep.subr.bf16.mxu0 0
      %666 = vmatpush2.bf16.msra.mxu0 0
      %667 = vmatprep.subr.bf16.mxu0 0
      %668 = vmatpush2.bf16.msra.mxu0 0
      %669 = vmatprep.subr.bf16.mxu0 0
      %670 = vmatpush2.bf16.msra.mxu0 0
      %671 = vmatprep.subr.bf16.mxu0 0
      %672 = vmatpush2.bf16.msra.mxu0 0
      %673 = vmatprep.mubr.bf16.mxu0 0
      %674 = vmatmul.mubr.bf16.gmra.mxu0 %v405
      %v675 = vpop.f32.mrf.mxu0
      %v676 = vadd.f32 0.0, %v675
      %v677 = vpop.f32.mrf.mxu0
      %v678 = vadd.f32 0.0, %v677
      %v679 = vpop.f32.mrf.mxu0
      %v680 = vadd.f32 0.0, %v679
      %v681 = vpop.f32.mrf.mxu0
      %v682 = vadd.f32 0.0, %v681
      %683 = vdwg.mxu0
      %v684 = vlaneseq
      %v685 = vand.u32 %v684, 127
      %vm686 = vcmask 130048
      %v687 = vsel %vm686, %v403, inf
      %688 = vmin.xlane.f32.xlu0 %v687
      %v689 = vpop.xlane.xlu0 %688
      %v690 = vsel %vm686, %v404, inf
      %691 = vmin.xlane.f32.xlu0 %v690
      %v692 = vpop.xlane.xlu0 %691
      %vm693 = vcmp.le.f32.partialorder %v403, %v689
      %vm694 = vcmp.le.f32.partialorder %v404, %v692
      %v695 = vsel %vm693, %v685, 16
      %v696 = vsel %vm694, %v685, 16
      %v697 = vsel %vm686, %v695, 2147483647
      %v698 = vand.u32 %v697, 65535
      %v699 = vshra.s32 %v697, 16
      %v700 = vcvt.s32.f32 %v698
      %v701 = vcvt.s32.f32 %v699
      %702 = vmin.xlane.f32.xlu0 %v701
      %v703 = vpop.xlane.xlu0 %702
      %vm704 = vcmp.eq.f32.partialorder %v701, %v703
      %v705 = vsel %vm704, %v700, inf
      %706 = vmin.xlane.f32.xlu0 %v705
      %v707 = vpop.xlane.xlu0 %706
      %v708 = vcvt.f32.s32 %v707
      %v709 = vcvt.f32.s32 %v703
      %v710 = vshll.u32 %v709, 16
      %v711 = vadd.s32 %v710, %v708
      %v712 = vsel %vm686, %v696, 2147483647
      %v713 = vand.u32 %v712, 65535
      %v714 = vshra.s32 %v712, 16
      %v715 = vcvt.s32.f32 %v713
      %v716 = vcvt.s32.f32 %v714
      %717 = vmin.xlane.f32.xlu0 %v716
      %v718 = vpop.xlane.xlu0 %717
      %vm719 = vcmp.eq.f32.partialorder %v716, %v718
      %v720 = vsel %vm719, %v715, inf
      %721 = vmin.xlane.f32.xlu0 %v720
      %v722 = vpop.xlane.xlu0 %721
      %v723 = vcvt.f32.s32 %v722
      %v724 = vcvt.f32.s32 %v718
      %v725 = vshll.u32 %v724, 16
      %v726 = vadd.s32 %v725, %v723
      %vm727 = vcmp.eq.s32.totalorder %v685, %v711
      %vm728 = vcmp.eq.s32.totalorder %v685, %v726
      %v729 = vsel %vm727, 1e+30, %v403
      %v730 = vsel %vm728, 1e+30, %v404
      %v731 = vsel %vm686, %v729, inf
      %732 = vmin.xlane.f32.xlu0 %v731
      %v733 = vpop.xlane.xlu0 %732
      %v734 = vsel %vm686, %v730, inf
      %735 = vmin.xlane.f32.xlu0 %v734
      %v736 = vpop.xlane.xlu0 %735
      %vm737 = vcmp.le.f32.partialorder %v729, %v733
      %vm738 = vcmp.le.f32.partialorder %v730, %v736
      %v739 = vsel %vm737, %v685, 16
      %v740 = vsel %vm738, %v685, 16
      %v741 = vsel %vm686, %v739, 2147483647
      %v742 = vand.u32 %v741, 65535
      %v743 = vshra.s32 %v741, 16
      %v744 = vcvt.s32.f32 %v742
      %v745 = vcvt.s32.f32 %v743
      %746 = vmin.xlane.f32.xlu0 %v745
      %v747 = vpop.xlane.xlu0 %746
      %vm748 = vcmp.eq.f32.partialorder %v745, %v747
      %v749 = vsel %vm748, %v744, inf
      %750 = vmin.xlane.f32.xlu0 %v749
      %v751 = vpop.xlane.xlu0 %750
      %v752 = vcvt.f32.s32 %v751
      %v753 = vcvt.f32.s32 %v747
      %v754 = vshll.u32 %v753, 16
      %v755 = vadd.s32 %v754, %v752
      %v756 = vsel %vm686, %v740, 2147483647
      %v757 = vand.u32 %v756, 65535
      %v758 = vshra.s32 %v756, 16
      %v759 = vcvt.s32.f32 %v757
      %v760 = vcvt.s32.f32 %v758
      %761 = vmin.xlane.f32.xlu0 %v760
      %v762 = vpop.xlane.xlu0 %761
      %vm763 = vcmp.eq.f32.partialorder %v760, %v762
      %v764 = vsel %vm763, %v759, inf
      %765 = vmin.xlane.f32.xlu0 %v764
      %v766 = vpop.xlane.xlu0 %765
      %v767 = vcvt.f32.s32 %v766
      %v768 = vcvt.f32.s32 %v762
      %v769 = vshll.u32 %v768, 16
      %v770 = vadd.s32 %v769, %v767
      %vm771 = vcmp.eq.s32.totalorder %v685, %v755
      %vm772 = vcmp.eq.s32.totalorder %v685, %v770
      %v773 = vsel %vm771, 1e+30, %v729
      %v774 = vsel %vm772, 1e+30, %v730
      %v775 = vsel %vm686, %v773, inf
      %776 = vmin.xlane.f32.xlu0 %v775
      %v777 = vpop.xlane.xlu0 %776
      %v778 = vsel %vm686, %v774, inf
      %779 = vmin.xlane.f32.xlu0 %v778
      %v780 = vpop.xlane.xlu0 %779
      %vm781 = vcmp.le.f32.partialorder %v773, %v777
      %vm782 = vcmp.le.f32.partialorder %v774, %v780
      %v783 = vsel %vm781, %v685, 16
      %v784 = vsel %vm782, %v685, 16
      %v785 = vsel %vm686, %v783, 2147483647
      %v786 = vand.u32 %v785, 65535
      %v787 = vshra.s32 %v785, 16
      %v788 = vcvt.s32.f32 %v786
      %v789 = vcvt.s32.f32 %v787
      %790 = vmin.xlane.f32.xlu0 %v789
      %v791 = vpop.xlane.xlu0 %790
      %vm792 = vcmp.eq.f32.partialorder %v789, %v791
      %v793 = vsel %vm792, %v788, inf
      %794 = vmin.xlane.f32.xlu0 %v793
      %v795 = vpop.xlane.xlu0 %794
      %v796 = vcvt.f32.s32 %v795
      %v797 = vcvt.f32.s32 %v791
      %v798 = vshll.u32 %v797, 16
      %v799 = vadd.s32 %v798, %v796
      %v800 = vsel %vm686, %v784, 2147483647
      %v801 = vand.u32 %v800, 65535
      %v802 = vshra.s32 %v800, 16
      %v803 = vcvt.s32.f32 %v801
      %v804 = vcvt.s32.f32 %v802
      %805 = vmin.xlane.f32.xlu0 %v804
      %v806 = vpop.xlane.xlu0 %805
      %vm807 = vcmp.eq.f32.partialorder %v804, %v806
      %v808 = vsel %vm807, %v803, inf
      %809 = vmin.xlane.f32.xlu0 %v808
      %v810 = vpop.xlane.xlu0 %809
      %v811 = vcvt.f32.s32 %v810
      %v812 = vcvt.f32.s32 %v806
      %v813 = vshll.u32 %v812, 16
      %v814 = vadd.s32 %v813, %v811
      %vm815 = vcmp.eq.s32.totalorder %v685, %v799
      %vm816 = vcmp.eq.s32.totalorder %v685, %v814
      %v817 = vsel %vm815, 1e+30, %v773
      %v818 = vsel %vm816, 1e+30, %v774
      %v819 = vsel %vm686, %v817, inf
      %820 = vmin.xlane.f32.xlu0 %v819
      %v821 = vpop.xlane.xlu0 %820
      %v822 = vsel %vm686, %v818, inf
      %823 = vmin.xlane.f32.xlu0 %v822
      %v824 = vpop.xlane.xlu0 %823
      %vm825 = vcmp.le.f32.partialorder %v817, %v821
      %vm826 = vcmp.le.f32.partialorder %v818, %v824
      %v827 = vsel %vm825, %v685, 16
      %v828 = vsel %vm826, %v685, 16
      %v829 = vsel %vm686, %v827, 2147483647
      %v830 = vand.u32 %v829, 65535
      %v831 = vshra.s32 %v829, 16
      %v832 = vcvt.s32.f32 %v830
      %v833 = vcvt.s32.f32 %v831
      %834 = vmin.xlane.f32.xlu0 %v833
      %v835 = vpop.xlane.xlu0 %834
      %vm836 = vcmp.eq.f32.partialorder %v833, %v835
      %v837 = vsel %vm836, %v832, inf
      %838 = vmin.xlane.f32.xlu0 %v837
      %v839 = vpop.xlane.xlu0 %838
      %v840 = vcvt.f32.s32 %v839
      %v841 = vcvt.f32.s32 %v835
      %v842 = vshll.u32 %v841, 16
      %v843 = vadd.s32 %v842, %v840
      %v844 = vsel %vm686, %v828, 2147483647
      %v845 = vand.u32 %v844, 65535
      %v846 = vshra.s32 %v844, 16
      %v847 = vcvt.s32.f32 %v845
      %v848 = vcvt.s32.f32 %v846
      %849 = vmin.xlane.f32.xlu0 %v848
      %v850 = vpop.xlane.xlu0 %849
      %vm851 = vcmp.eq.f32.partialorder %v848, %v850
      %v852 = vsel %vm851, %v847, inf
      %853 = vmin.xlane.f32.xlu0 %v852
      %v854 = vpop.xlane.xlu0 %853
      %v855 = vcvt.f32.s32 %v854
      %v856 = vcvt.f32.s32 %v850
      %v857 = vshll.u32 %v856, 16
      %v858 = vadd.s32 %v857, %v855
      %vm859 = vcmp.eq.s32.totalorder %v685, %v843
      %vm860 = vcmp.eq.s32.totalorder %v685, %v858
      %v861 = vsel %vm859, 1e+30, %v817
      %v862 = vsel %vm860, 1e+30, %v818
      %v863 = vsel %vm686, %v861, inf
      %864 = vmin.xlane.f32.xlu0 %v863
      %v865 = vpop.xlane.xlu0 %864
      %v866 = vsel %vm686, %v862, inf
      %867 = vmin.xlane.f32.xlu0 %v866
      %v868 = vpop.xlane.xlu0 %867
      %vm869 = vcmp.le.f32.partialorder %v861, %v865
      %vm870 = vcmp.le.f32.partialorder %v862, %v868
      %v871 = vsel %vm869, %v685, 16
      %v872 = vsel %vm870, %v685, 16
      %v873 = vsel %vm686, %v871, 2147483647
      %v874 = vand.u32 %v873, 65535
      %v875 = vshra.s32 %v873, 16
      %v876 = vcvt.s32.f32 %v874
      %v877 = vcvt.s32.f32 %v875
      %878 = vmin.xlane.f32.xlu0 %v877
      %v879 = vpop.xlane.xlu0 %878
      %vm880 = vcmp.eq.f32.partialorder %v877, %v879
      %v881 = vsel %vm880, %v876, inf
      %882 = vmin.xlane.f32.xlu0 %v881
      %v883 = vpop.xlane.xlu0 %882
      %v884 = vcvt.f32.s32 %v883
      %v885 = vcvt.f32.s32 %v879
      %v886 = vshll.u32 %v885, 16
      %v887 = vadd.s32 %v886, %v884
      %v888 = vsel %vm686, %v872, 2147483647
      %v889 = vand.u32 %v888, 65535
      %v890 = vshra.s32 %v888, 16
      %v891 = vcvt.s32.f32 %v889
      %v892 = vcvt.s32.f32 %v890
      %893 = vmin.xlane.f32.xlu0 %v892
      %v894 = vpop.xlane.xlu0 %893
      %vm895 = vcmp.eq.f32.partialorder %v892, %v894
      %v896 = vsel %vm895, %v891, inf
      %897 = vmin.xlane.f32.xlu0 %v896
      %v898 = vpop.xlane.xlu0 %897
      %v899 = vcvt.f32.s32 %v898
      %v900 = vcvt.f32.s32 %v894
      %v901 = vshll.u32 %v900, 16
      %v902 = vadd.s32 %v901, %v899
      %903 = vset.pattern.permute.xlu0 0
      %904 = vperm.xlu0 %903, %v711
      %v905 = vpop.permute.xlu0 %904
      %906 = vset.pattern.permute.xlu0 0
      %907 = vperm.xlu0 %906, %v726
      %v908 = vpop.permute.xlu0 %907
      %909 = vset.pattern.permute.xlu0 0
      %910 = vperm.xlu0 %909, %v755
      %v911 = vpop.permute.xlu0 %910
      %912 = vset.pattern.permute.xlu0 0
      %913 = vperm.xlu0 %912, %v770
      %v914 = vpop.permute.xlu0 %913
      %915 = vset.pattern.permute.xlu0 0
      %916 = vperm.xlu0 %915, %v799
      %v917 = vpop.permute.xlu0 %916
      %918 = vset.pattern.permute.xlu0 0
      %919 = vperm.xlu0 %918, %v814
      %v920 = vpop.permute.xlu0 %919
      %921 = vset.pattern.permute.xlu0 0
      %922 = vperm.xlu0 %921, %v843
      %v923 = vpop.permute.xlu0 %922
      %924 = vset.pattern.permute.xlu0 0
      %925 = vperm.xlu0 %924, %v858
      %v926 = vpop.permute.xlu0 %925
      %927 = vset.pattern.permute.xlu0 0
      %928 = vperm.xlu0 %927, %v887
      %v929 = vpop.permute.xlu0 %928
      %930 = vset.pattern.permute.xlu0 0
      %931 = vperm.xlu0 %930, %v902
      %v932 = vpop.permute.xlu0 %931
      %vm933 = vcmp.eq.s32.totalorder %v685, %v905
      %vm934 = vcmp.eq.s32.totalorder %v685, %v908
      %vm935 = vcmp.eq.s32.totalorder %v685, %v911
      %vm936 = vcmp.eq.s32.totalorder %v685, %v914
      %vm937 = vcmp.eq.s32.totalorder %v685, %v917
      %vm938 = vcmp.eq.s32.totalorder %v685, %v920
      %vm939 = vcmp.eq.s32.totalorder %v685, %v923
      %vm940 = vcmp.eq.s32.totalorder %v685, %v926
      %vm941 = vcmp.eq.s32.totalorder %v685, %v929
      %vm942 = vcmp.eq.s32.totalorder %v685, %v932
      %v943 = vsel %vm933, 1, 0
      %v944 = vsel %vm934, 1, 0
      %v945 = vsel %vm935, 1, 0
      %v946 = vsel %vm936, 1, 0
      %v947 = vsel %vm937, 1, 0
      %v948 = vsel %vm938, 1, 0
      %v949 = vsel %vm939, 1, 0
      %v950 = vsel %vm940, 1, 0
      %v951 = vsel %vm941, 1, 0
      %v952 = vsel %vm942, 1, 0
      %v953 = vcvt.s32.f32 %v943
      %v954 = vcvt.s32.f32 %v944
      %v955 = vcvt.s32.f32 %v945
      %v956 = vcvt.s32.f32 %v946
      %v957 = vcvt.s32.f32 %v947
      %v958 = vcvt.s32.f32 %v948
      %v959 = vcvt.s32.f32 %v949
      %v960 = vcvt.s32.f32 %v950
      %v961 = vcvt.s32.f32 %v951
      %v962 = vcvt.s32.f32 %v952
      %v963 = vpack.c.bf16 %v954, %v953
      %v964 = vpack.c.bf16 %v956, %v955
      %v965 = vpack.c.bf16 %v958, %v957
      %v966 = vpack.c.bf16 %v960, %v959
      %v967 = vpack.c.bf16 %v962, %v961
      %v968 = vpack.c.bf16 %v637, %v633
      %v969 = vpack.c.bf16 %v639, %v635
      %v971 = vsel %vm686, %v963, 0
      %v974 = vsel %vm686, %v964, 0
      %v977 = vsel %vm686, %v965, 0
      %v980 = vsel %vm686, %v966, 0
      %v983 = vsel %vm686, %v967, 0
      %985 = vmatprep.subr.bf16.mxu0 0
      %986 = vmatpush1.bf16.msra.mxu0 0
      %987 = vmatprep.subr.bf16.mxu0 0
      %988 = vmatpush1.bf16.msra.mxu0 0
      %989 = vmatprep.subr.bf16.mxu0 0
      %990 = vmatpush1.bf16.msra.mxu0 0
      %991 = vmatprep.subr.bf16.mxu0 0
      %992 = vmatpush1.bf16.msra.mxu0 0
      %993 = vmatprep.subr.bf16.mxu0 0
      %994 = vmatpush1.bf16.msra.mxu0 0
      %995 = vmatprep.subr.bf16.mxu0 0
      %996 = vmatpush1.bf16.msra.mxu0 0
      %997 = vmatprep.subr.bf16.mxu0 0
      %998 = vmatpush1.bf16.msra.mxu0 0
      %999 = vmatprep.subr.bf16.mxu0 %v969
      %1000 = vmatpush1.bf16.msra.mxu0 %v968
      %1001 = vmatprep.subr.bf16.mxu0 0
      %1002 = vmatpush2.bf16.msra.mxu0 0
      %1003 = vmatprep.subr.bf16.mxu0 0
      %1004 = vmatpush2.bf16.msra.mxu0 0
      %1005 = vmatprep.subr.bf16.mxu0 0
      %1006 = vmatpush2.bf16.msra.mxu0 0
      %1007 = vmatprep.subr.bf16.mxu0 0
      %1008 = vmatpush2.bf16.msra.mxu0 0
      %1009 = vmatprep.subr.bf16.mxu0 0
      %1010 = vmatpush2.bf16.msra.mxu0 0
      %1011 = vmatprep.subr.bf16.mxu0 0
      %1012 = vmatpush2.bf16.msra.mxu0 0
      %1013 = vmatprep.subr.bf16.mxu0 0
      %1014 = vmatpush2.bf16.msra.mxu0 0
      %1015 = vmatprep.subr.bf16.mxu0 0
      %1016 = vmatpush2.bf16.msra.mxu0 0
      %1017 = vmatprep.mubr.bf16.mxu0 0
      %1018 = vmatmul.mubr.bf16.gmra.mxu0 %v971
      %v1019 = vpop.f32.mrf.mxu0
      %v1020 = vadd.f32 %v676, %v1019
      %v1021 = vpop.f32.mrf.mxu0
      %v1022 = vadd.f32 %v678, %v1021
      %v1023 = vpop.f32.mrf.mxu0
      %v1024 = vadd.f32 %v680, %v1023
      %v1025 = vpop.f32.mrf.mxu0
      %v1026 = vadd.f32 %v682, %v1025
      %1027 = vmatprep.mubr.bf16.mxu0 0
      %1028 = vmatmul.mubr.bf16.gmra.mxu0 %v974
      %v1029 = vpop.f32.mrf.mxu0
      %v1030 = vadd.f32 %v676, %v1029
      %v1031 = vpop.f32.mrf.mxu0
      %v1032 = vadd.f32 %v678, %v1031
      %v1033 = vpop.f32.mrf.mxu0
      %v1034 = vadd.f32 %v680, %v1033
      %v1035 = vpop.f32.mrf.mxu0
      %v1036 = vadd.f32 %v682, %v1035
      %1037 = vmatprep.mubr.bf16.mxu0 0
      %1038 = vmatmul.mubr.bf16.gmra.mxu0 %v977
      %v1039 = vpop.f32.mrf.mxu0
      %v1040 = vadd.f32 %v676, %v1039
      %v1041 = vpop.f32.mrf.mxu0
      %v1042 = vadd.f32 %v678, %v1041
      %v1043 = vpop.f32.mrf.mxu0
      %v1044 = vadd.f32 %v680, %v1043
      %v1045 = vpop.f32.mrf.mxu0
      %v1046 = vadd.f32 %v682, %v1045
      %1047 = vmatprep.mubr.bf16.mxu0 0
      %1048 = vmatmul.mubr.bf16.gmra.mxu0 %v980
      %v1049 = vpop.f32.mrf.mxu0
      %v1050 = vadd.f32 %v676, %v1049
      %v1051 = vpop.f32.mrf.mxu0
      %v1052 = vadd.f32 %v678, %v1051
      %v1053 = vpop.f32.mrf.mxu0
      %v1054 = vadd.f32 %v680, %v1053
      %v1055 = vpop.f32.mrf.mxu0
      %v1056 = vadd.f32 %v682, %v1055
      %1057 = vmatprep.mubr.bf16.mxu0 0
      %1058 = vmatmul.mubr.bf16.gmra.mxu0 %v983
      %v1059 = vpop.f32.mrf.mxu0
      %v1060 = vadd.f32 %v676, %v1059
      %v1061 = vpop.f32.mrf.mxu0
      %v1062 = vadd.f32 %v678, %v1061
      %v1063 = vpop.f32.mrf.mxu0
      %v1064 = vadd.f32 %v680, %v1063
      %v1065 = vpop.f32.mrf.mxu0
      %v1066 = vadd.f32 %v682, %v1065
      %1067 = vdwg.mxu0
      %v1068 = vadd.f32 %v1020, %v1024
      %v1069 = vadd.f32 %v1068, %v1030
      %v1070 = vadd.f32 %v1069, %v1034
      %v1071 = vadd.f32 %v1070, %v1040
      %v1072 = vadd.f32 %v1071, %v1044
      %v1073 = vadd.f32 %v1072, %v1050
      %v1074 = vadd.f32 %v1073, %v1054
      %v1075 = vadd.f32 %v1074, %v1060
      %v1076 = vadd.f32 %v1075, %v1064
      %v1077 = vrot.slane %v1076, 4
      %v1078 = vadd.f32 %v1076, %v1077
      %v1079 = vrot.slane %v1078, 2
      %v1080 = vadd.f32 %v1078, %v1079
      %v1081 = vrot.slane %v1080, 1
      %v1082 = vadd.f32 %v1080, %v1081
      %v1083 = vadd.f32 %v1022, %v1026
      %v1084 = vadd.f32 %v1083, %v1032
      %v1085 = vadd.f32 %v1084, %v1036
      %v1086 = vadd.f32 %v1085, %v1042
      %v1087 = vadd.f32 %v1086, %v1046
      %v1088 = vadd.f32 %v1087, %v1052
      %v1089 = vadd.f32 %v1088, %v1056
      %v1090 = vadd.f32 %v1089, %v1062
      %v1091 = vadd.f32 %v1090, %v1066
      %v1092 = vrot.slane %v1091, 4
      %v1093 = vadd.f32 %v1091, %v1092
      %v1094 = vrot.slane %v1093, 2
      %v1095 = vadd.f32 %v1093, %v1094
      %v1096 = vrot.slane %v1095, 1
      %v1097 = vadd.f32 %v1095, %v1096
      %v1100 = vcombine.low %v1082, %v1097
      %v1102 = vunpack.c.l.s4 1966171168
      %v1103 = vunpack.c.0.s8 %v1102
      %v1104 = vlaneseq
      %v1105 = vshrl.u32 %v1104, 7
      %v1106 = vsub.s32 %v1103, %v1105
      %v1107 = vrot.slane %v1100, %v1106
      %v1109 = vunpack.c.l.s4 1966171168
      %v1110 = vunpack.c.0.s8 %v1109
      %v1111 = vlaneseq
      %v1112 = vshrl.u32 %v1111, 7
      %v1113 = vsub.s32 %v1110, %v1112
      %v1114 = vrot.slane %v1107, %v1113
      %v1116 = vlaneseq
      %vm1117 = vcmp.ge.s32.totalorder %v1116, 0
      %vm1118 = vcmp.lt.s32.totalorder %v1116, 256
      %vm1119 = vmand %vm1117, %vm1118
      %1120 = vst.msk [vmem:[%s237] ss:$2 sm:$0x3] %vm1119, %v1114
      %v1121 = vmul.f32 %v1020, %v1020
      %v1122 = vmul.f32 %v1022, %v1022
      %v1123 = vmul.f32 %v1024, %v1024
      %v1124 = vmul.f32 %v1026, %v1026
      %v1125 = vmul.f32 %v1030, %v1030
      %v1126 = vmul.f32 %v1032, %v1032
      %v1127 = vmul.f32 %v1034, %v1034
      %v1128 = vmul.f32 %v1036, %v1036
      %v1129 = vmul.f32 %v1040, %v1040
      %v1130 = vmul.f32 %v1042, %v1042
      %v1131 = vmul.f32 %v1044, %v1044
      %v1132 = vmul.f32 %v1046, %v1046
      %v1133 = vmul.f32 %v1050, %v1050
      %v1134 = vmul.f32 %v1052, %v1052
      %v1135 = vmul.f32 %v1054, %v1054
      %v1136 = vmul.f32 %v1056, %v1056
      %v1137 = vmul.f32 %v1060, %v1060
      %v1138 = vmul.f32 %v1062, %v1062
      %v1139 = vmul.f32 %v1064, %v1064
      %v1140 = vmul.f32 %v1066, %v1066
      %v1141 = vadd.f32 %v1121, %v1123
      %v1142 = vadd.f32 %v1141, %v1125
      %v1143 = vadd.f32 %v1142, %v1127
      %v1144 = vadd.f32 %v1143, %v1129
      %v1145 = vadd.f32 %v1144, %v1131
      %v1146 = vadd.f32 %v1145, %v1133
      %v1147 = vadd.f32 %v1146, %v1135
      %v1148 = vadd.f32 %v1147, %v1137
      %v1149 = vadd.f32 %v1148, %v1139
      %v1150 = vrot.slane %v1149, 4
      %v1151 = vadd.f32 %v1149, %v1150
      %v1152 = vrot.slane %v1151, 2
      %v1153 = vadd.f32 %v1151, %v1152
      %v1154 = vrot.slane %v1153, 1
      %v1155 = vadd.f32 %v1153, %v1154
      %v1156 = vadd.f32 %v1122, %v1124
      %v1157 = vadd.f32 %v1156, %v1126
      %v1158 = vadd.f32 %v1157, %v1128
      %v1159 = vadd.f32 %v1158, %v1130
      %v1160 = vadd.f32 %v1159, %v1132
      %v1161 = vadd.f32 %v1160, %v1134
      %v1162 = vadd.f32 %v1161, %v1136
      %v1163 = vadd.f32 %v1162, %v1138
      %v1164 = vadd.f32 %v1163, %v1140
      %v1165 = vrot.slane %v1164, 4
      %v1166 = vadd.f32 %v1164, %v1165
      %v1167 = vrot.slane %v1166, 2
      %v1168 = vadd.f32 %v1166, %v1167
      %v1169 = vrot.slane %v1168, 1
      %v1170 = vadd.f32 %v1168, %v1169
      %v1173 = vcombine.low %v1155, %v1170
      %v1175 = vunpack.c.l.s4 1966171168
      %v1176 = vunpack.c.0.s8 %v1175
      %v1177 = vlaneseq
      %v1178 = vshrl.u32 %v1177, 7
      %v1179 = vsub.s32 %v1176, %v1178
      %v1180 = vrot.slane %v1173, %v1179
      %v1182 = vunpack.c.l.s4 1966171168
      %v1183 = vunpack.c.0.s8 %v1182
      %v1184 = vlaneseq
      %v1185 = vshrl.u32 %v1184, 7
      %v1186 = vsub.s32 %v1183, %v1185
      %v1187 = vrot.slane %v1180, %v1186
      %s1189 = scalar_lea.vmem %s237, 1
      %1190 = vst.msk [vmem:[%s1189] ss:$2 sm:$0x3] %vm1119, %v1187
      %v1191 = vmax.f32 %v1020, %v1030
      %v1192 = vmax.f32 %v1022, %v1032
      %v1193 = vmax.f32 %v1024, %v1034
      %v1194 = vmax.f32 %v1026, %v1036
      %v1195 = vmin.f32 %v1020, %v1030
      %v1196 = vmin.f32 %v1022, %v1032
      %v1197 = vmin.f32 %v1024, %v1034
      %v1198 = vmin.f32 %v1026, %v1036
      %v1199 = vmax.f32 %v1191, %v1040
      %v1200 = vmax.f32 %v1192, %v1042
      %v1201 = vmax.f32 %v1193, %v1044
      %v1202 = vmax.f32 %v1194, %v1046
      %v1203 = vmin.f32 %v1195, %v1040
      %v1204 = vmin.f32 %v1196, %v1042
      %v1205 = vmin.f32 %v1197, %v1044
      %v1206 = vmin.f32 %v1198, %v1046
      %v1207 = vmax.f32 %v1199, %v1050
      %v1208 = vmax.f32 %v1200, %v1052
      %v1209 = vmax.f32 %v1201, %v1054
      %v1210 = vmax.f32 %v1202, %v1056
      %v1211 = vmin.f32 %v1203, %v1050
      %v1212 = vmin.f32 %v1204, %v1052
      %v1213 = vmin.f32 %v1205, %v1054
      %v1214 = vmin.f32 %v1206, %v1056
      %v1215 = vmax.f32 %v1207, %v1060
      %v1216 = vmax.f32 %v1208, %v1062
      %v1217 = vmax.f32 %v1209, %v1064
      %v1218 = vmax.f32 %v1210, %v1066
      %v1219 = vmin.f32 %v1211, %v1060
      %v1220 = vmin.f32 %v1212, %v1062
      %v1221 = vmin.f32 %v1213, %v1064
      %v1222 = vmin.f32 %v1214, %v1066
      %v1223 = vpack.c.bf16 %v1217, %v1215
      %v1224 = vpack.c.bf16 %v1218, %v1216
      %v1227 = vunpack.c.l.b16 %v1223
      %v1228 = vunpack.c.l.b16 %v1224
      %v1229 = vunpack.c.h.b16 %v1223
      %v1230 = vunpack.c.h.b16 %v1224
      %v1231 = vpack.c.b16 %v1228, %v1227
      %v1232 = vpack.c.b16 %v1230, %v1229
      %1235 = vst [vmem:[%s232] sm:$0xff] %v1231
      %1236 = vst [vmem:[%s232 + $0x8] sm:$0xff] %v1232
      %v1237 = vpack.c.bf16 %v1221, %v1219
      %v1238 = vpack.c.bf16 %v1222, %v1220
      %v1241 = vunpack.c.l.b16 %v1237
      %v1242 = vunpack.c.l.b16 %v1238
      %v1243 = vunpack.c.h.b16 %v1237
      %v1244 = vunpack.c.h.b16 %v1238
      %v1245 = vpack.c.b16 %v1242, %v1241
      %v1246 = vpack.c.b16 %v1244, %v1243
      %1249 = vst [vmem:[%s232 + $0x10] sm:$0xff] %v1245
      %1250 = vst [vmem:[%s232 + $0x18] sm:$0xff] %v1246
      %p1251 = scmp.lt.s32.totalorder %s17, 1
      %s1252 = scalar_select %p1251, %s17, 1
      %s1253 = smul.addr %s1252, 8
      %s1254 = smul.addr %s1253, 4
      %s1255 = scalar_lea.vmem %s4, %s1254
      %p1256 = scmp.lt.s32.totalorder %s17, 1
      %s1257 = scalar_select %p1256, %s17, 1
      %s1258 = smul.addr %s1257, 2
      %s1259 = smul.addr %s1258, 2
      %s1260 = scalar_lea.vmem %s5, %s1259
      // Predicated region
      $region37: #{motion_detect_module.5} parent=35 // pred_check
        %p1261 = pneg %p124
      $region38: #{motion_detect_module.5} parent=35 // pred_check_branch
        %1263 = sbr.rel (%p1261) target = $region40
      $region39: #{motion_detect_module.5} parent=35 // pred_region
        _
      $region40: #{motion_detect_module.5} parent=35 // pred_fallthru
        _
      // Predicated region
      $region41: #{motion_detect_module.5} parent=35 // pred_check
        %p1264 = pneg %p150
      $region42: #{motion_detect_module.5} parent=35 // pred_check_branch
        %1266 = sbr.rel (%p1264) target = $region44
      $region43: #{motion_detect_module.5} parent=35 // pred_region
        _
      $region44: #{motion_detect_module.5} parent=35 // pred_fallthru
        _
    $region36: #{motion_detect_module.5} parent=5 // pred_fallthru
      _
    %p1267 = scmp.le.s32.totalorder 2, %s12
    // Predicated region
    $region45: #{motion_detect_module.5} parent=5 // pred_check
      %p1268 = pneg %p1267
    $region46: #{motion_detect_module.5} parent=5 // pred_check_branch
      %1270 = sbr.rel (%p1268) target = $region48
    $region47: #{motion_detect_module.5} parent=5 // pred_region
      %s1271 = ssub.s32 %s12, 2
      // Predicated region
      $region49: #{motion_detect_module.5} parent=47 // pred_check
        %p1272 = pneg %p130
      $region50: #{motion_detect_module.5} parent=47 // pred_check_branch
        %1274 = sbr.rel (%p1272) target = $region52
      $region51: #{motion_detect_module.5} parent=47 // pred_region
        %p1275 = scmp.lt.s32.totalorder %s18, 1
        %s1276 = scalar_select %p1275, %s18, 1
        %s1277 = smul.addr %s1276, 8
        %s1278 = smul.addr %s1277, 4
        %s1279 = scalar_lea.vmem %s4, %s1278
      $region52: #{motion_detect_module.5} parent=47 // pred_fallthru
        _
      // Predicated region
      $region53: #{motion_detect_module.5} parent=47 // pred_check
        %p1280 = pneg %p156
      $region54: #{motion_detect_module.5} parent=47 // pred_check_branch
        %1282 = sbr.rel (%p1280) target = $region56
      $region55: #{motion_detect_module.5} parent=47 // pred_region
        %p1283 = scmp.lt.s32.totalorder %s18, 1
        %s1284 = scalar_select %p1283, %s18, 1
        %s1285 = smul.addr %s1284, 2
        %s1286 = smul.addr %s1285, 2
        %s1287 = scalar_lea.vmem %s5, %s1286
      $region56: #{motion_detect_module.5} parent=47 // pred_fallthru
        _
    $region48: #{motion_detect_module.5} parent=5 // pred_fallthru
      _
  $region6: #{motion_detect_module.5} parent=0 // loop_footer
    %s16 = sadd.s32 1, %s12
  $region7: #{motion_detect_module.5} parent=0 // loop_footer_branch
    %11 = sbr.rel target = $region3
  $region8: #{motion_detect_module.5} parent=0 // loop_exit
    _

// kernel: motion_detect_module.6
$region0: #{motion_detect_module.6}
  #allocation0 [shape = 'u32[]', space=smem, size = 0x4, offset = 0x4, fixed_abs, tag = 'smem constant byte address 0x4 - core index']
  #allocation1 [shape = 'u32[144,128]{1,0:T(1,128)}', space=vmem, size = 0x12000, scoped, tag = 'internal scratch']
  %s0 = inlined_call_operand.vmem [shape: bf16[2,32,256], index: 0, kind: input, shape index: {}]
  %s1 = inlined_call_operand.vmem [shape: f32[1,256], index: 1, kind: input, shape index: {}]
  %s2 = inlined_call_operand.vmem [shape: f32[1,256], index: 2, kind: input, shape index: {}]
  %s3 = inlined_call_operand.vmem [shape: bf16[256,512], index: 3, kind: input, shape index: {}]
  %s4 = inlined_call_operand.vmem [shape: bf16[2,32,256], index: 4, kind: output, shape index: {0}]
  %s5 = inlined_call_operand.vmem [shape: f32[2,2,256], index: 5, kind: output, shape index: {1}]
  %6 = xla_tuple %s4, %s5
  %s7 = sld [smem:[#allocation0]]
  $region57: #{motion_detect_module.6} parent=0
    _
  %s9 = ssub.s32 1, %s7
  %s10 = scalar_select 0, %s9, %s7
  loop: start=0, step=1, limit=4
  $region2: #{motion_detect_module.6} parent=0 // loop_pre_header
    _
  $region3: #{motion_detect_module.6} parent=0 // loop_header
    %s12 = sphi 0, %s16
    %p13 = scmp.ge.s32.totalorder %s12, 4
    %s22 = sphi 0, %s24
    %s25 = sphi 0, %s22
    %s26 = sphi 0, %s25
    %s42 = sphi 0, %s26
    %s46 = sphi 0, %s46
    %s48 = sphi 0, %s46
    %s49 = sphi 0, %s48
    %s63 = sphi 0, %s49
    %s67 = sphi 0, %s67
    %s69 = sphi 0, %s67
    %s70 = sphi 0, %s69
    %s84 = sphi 0, %s70
    %s88 = sphi 0, %s88
    %s90 = sphi 0, %s88
    %s91 = sphi 0, %s90
    %s105 = sphi 0, %s91
    %s111 = sphi 0, %s113
    %s114 = sphi 0, %s111
    %s115 = sphi 0, %s114
    %s131 = sphi 0, %s115
    %s137 = sphi 0, %s139
    %s140 = sphi 0, %s137
    %s141 = sphi 0, %s140
    %s157 = sphi 0, %s141
  $region4: #{motion_detect_module.6} parent=0 // loop_header_branch
    %15 = sbr.rel (%p13) target = $region8
  $region5: #{motion_detect_module.6} parent=0 // loop_body
    %s17 = ssub.s32 %s12, 1
    %s18 = ssub.s32 %s12, 2
    %s19 = sadd.s32 %s12, 1
    %s20 = ssub.s32 %s12, %s19
    %p21 = scmp.eq.s32.totalorder %s20, 0
    %s23 = sadd.s32 %s22, 1
    %s24 = scalar_select %p21, %s22, %s23
    %p27 = pneg %p21
    %p28 = scmp.eq.s32.totalorder %s12, 1
    %p29 = por %p27, %p28
    %p30 = scmp.ne.s32.totalorder %s22, %s25
    %p31 = scmp.eq.s32.totalorder %s12, 0
    %p32 = por %p30, %p31
    %p33 = scmp.ne.s32.totalorder %s22, %s25
    %p34 = scmp.eq.s32.totalorder %s17, 1
    %p35 = por %p33, %p34
    %p36 = scmp.ne.s32.totalorder %s25, %s26
    %p37 = scmp.eq.s32.totalorder %s17, 0
    %p38 = por %p36, %p37
    %p39 = scmp.ne.s32.totalorder %s25, %s26
    %p40 = scmp.eq.s32.totalorder %s18, 1
    %p41 = por %p39, %p40
    %p43 = scmp.ne.s32.totalorder %s26, %s42
    %p44 = scmp.eq.s32.totalorder %s18, 0
    %p45 = por %p43, %p44
    %s47 = sadd.s32 %s46, 1
    %p50 = scmp.eq.s32.totalorder %s12, 1
    %p51 = scmp.ne.s32.totalorder %s46, %s48
    %p52 = scmp.eq.s32.totalorder %s12, 0
    %p53 = por %p51, %p52
    %p54 = scmp.ne.s32.totalorder %s46, %s48
    %p55 = scmp.eq.s32.totalorder %s17, 1
    %p56 = por %p54, %p55
    %p57 = scmp.ne.s32.totalorder %s48, %s49
    %p58 = scmp.eq.s32.totalorder %s17, 0
    %p59 = por %p57, %p58
    %p60 = scmp.ne.s32.totalorder %s48, %s49
    %p61 = scmp.eq.s32.totalorder %s18, 1
    %p62 = por %p60, %p61
    %p64 = scmp.ne.s32.totalorder %s49, %s63
    %p65 = scmp.eq.s32.totalorder %s18, 0
    %p66 = por %p64, %p65
    %s68 = sadd.s32 %s67, 1
    %p71 = scmp.eq.s32.totalorder %s12, 1
    %p72 = scmp.ne.s32.totalorder %s67, %s69
    %p73 = scmp.eq.s32.totalorder %s12, 0
    %p74 = por %p72, %p73
    %p75 = scmp.ne.s32.totalorder %s67, %s69
    %p76 = scmp.eq.s32.totalorder %s17, 1
    %p77 = por %p75, %p76
    %p78 = scmp.ne.s32.totalorder %s69, %s70
    %p79 = scmp.eq.s32.totalorder %s17, 0
    %p80 = por %p78, %p79
    %p81 = scmp.ne.s32.totalorder %s69, %s70
    %p82 = scmp.eq.s32.totalorder %s18, 1
    %p83 = por %p81, %p82
    %p85 = scmp.ne.s32.totalorder %s70, %s84
    %p86 = scmp.eq.s32.totalorder %s18, 0
    %p87 = por %p85, %p86
    %s89 = sadd.s32 %s88, 1
    %p92 = scmp.eq.s32.totalorder %s12, 1
    %p93 = scmp.ne.s32.totalorder %s88, %s90
    %p94 = scmp.eq.s32.totalorder %s12, 0
    %p95 = por %p93, %p94
    %p96 = scmp.ne.s32.totalorder %s88, %s90
    %p97 = scmp.eq.s32.totalorder %s17, 1
    %p98 = por %p96, %p97
    %p99 = scmp.ne.s32.totalorder %s90, %s91
    %p100 = scmp.eq.s32.totalorder %s17, 0
    %p101 = por %p99, %p100
    %p102 = scmp.ne.s32.totalorder %s90, %s91
    %p103 = scmp.eq.s32.totalorder %s18, 1
    %p104 = por %p102, %p103
    %p106 = scmp.ne.s32.totalorder %s91, %s105
    %p107 = scmp.eq.s32.totalorder %s18, 0
    %p108 = por %p106, %p107
    %s109 = ssub.s32 %s12, %s19
    %p110 = scmp.eq.s32.totalorder %s109, 0
    %s112 = sadd.s32 %s111, 1
    %s113 = scalar_select %p110, %s111, %s112
    %p116 = pneg %p110
    %p117 = scmp.eq.s32.totalorder %s12, 1
    %p118 = por %p116, %p117
    %p119 = scmp.ne.s32.totalorder %s111, %s114
    %p120 = scmp.eq.s32.totalorder %s12, 0
    %p121 = por %p119, %p120
    %p122 = scmp.ne.s32.totalorder %s111, %s114
    %p123 = scmp.eq.s32.totalorder %s17, 1
    %p124 = por %p122, %p123
    %p125 = scmp.ne.s32.totalorder %s114, %s115
    %p126 = scmp.eq.s32.totalorder %s17, 0
    %p127 = por %p125, %p126
    %p128 = scmp.ne.s32.totalorder %s114, %s115
    %p129 = scmp.eq.s32.totalorder %s18, 1
    %p130 = por %p128, %p129
    %p132 = scmp.ne.s32.totalorder %s115, %s131
    %p133 = scmp.eq.s32.totalorder %s18, 0
    %p134 = por %p132, %p133
    %s135 = ssub.s32 %s12, %s19
    %p136 = scmp.eq.s32.totalorder %s135, 0
    %s138 = sadd.s32 %s137, 1
    %s139 = scalar_select %p136, %s137, %s138
    %p142 = pneg %p136
    %p143 = scmp.eq.s32.totalorder %s12, 1
    %p144 = por %p142, %p143
    %p145 = scmp.ne.s32.totalorder %s137, %s140
    %p146 = scmp.eq.s32.totalorder %s12, 0
    %p147 = por %p145, %p146
    %p148 = scmp.ne.s32.totalorder %s137, %s140
    %p149 = scmp.eq.s32.totalorder %s17, 1
    %p150 = por %p148, %p149
    %p151 = scmp.ne.s32.totalorder %s140, %s141
    %p152 = scmp.eq.s32.totalorder %s17, 0
    %p153 = por %p151, %p152
    %p154 = scmp.ne.s32.totalorder %s140, %s141
    %p155 = scmp.eq.s32.totalorder %s18, 1
    %p156 = por %p154, %p155
    %p158 = scmp.ne.s32.totalorder %s141, %s157
    %p159 = scmp.eq.s32.totalorder %s18, 0
    %p160 = por %p158, %p159
    %p161 = scmp.le.s32.totalorder 1, %s12
    %p162 = scmp.lt.s32.totalorder %s12, 3
    %p163 = pnand %p161, %p162
    %p164 = pneg %p163
    // Predicated region
    $region9: #{motion_detect_module.6} parent=5 // pred_check
      _
    $region10: #{motion_detect_module.6} parent=5 // pred_check_branch
      %166 = sbr.rel (%p163) target = $region12
    $region11: #{motion_detect_module.6} parent=5 // pred_region
      %s167 = ssub.s32 %s12, 1
      // Predicated region
      $region13: #{motion_detect_module.6} parent=11 // pred_check
        %p168 = pneg %p59
      $region14: #{motion_detect_module.6} parent=11 // pred_check_branch
        %170 = sbr.rel (%p168) target = $region16
      $region15: #{motion_detect_module.6} parent=11 // pred_region
        _
      $region16: #{motion_detect_module.6} parent=11 // pred_fallthru
        _
      // Predicated region
      $region17: #{motion_detect_module.6} parent=11 // pred_check
        %p171 = pneg %p80
      $region18: #{motion_detect_module.6} parent=11 // pred_check_branch
        %173 = sbr.rel (%p171) target = $region20
      $region19: #{motion_detect_module.6} parent=11 // pred_region
        _
      $region20: #{motion_detect_module.6} parent=11 // pred_fallthru
        _
      // Predicated region
      $region21: #{motion_detect_module.6} parent=11 // pred_check
        %p174 = pneg %p101
      $region22: #{motion_detect_module.6} parent=11 // pred_check_branch
        %176 = sbr.rel (%p174) target = $region24
      $region23: #{motion_detect_module.6} parent=11 // pred_region
        _
      $region24: #{motion_detect_module.6} parent=11 // pred_fallthru
        _
    $region12: #{motion_detect_module.6} parent=5 // pred_fallthru
      _
    %p177 = scmp.lt.s32.totalorder %s12, 2
    // Predicated region
    $region25: #{motion_detect_module.6} parent=5 // pred_check
      %p178 = pneg %p177
    $region26: #{motion_detect_module.6} parent=5 // pred_check_branch
      %180 = sbr.rel (%p178) target = $region28
    $region27: #{motion_detect_module.6} parent=5 // pred_region
      // Predicated region
      $region29: #{motion_detect_module.6} parent=27 // pred_check
        %p181 = pneg %p32
      $region30: #{motion_detect_module.6} parent=27 // pred_check_branch
        %183 = sbr.rel (%p181) target = $region32
      $region31: #{motion_detect_module.6} parent=27 // pred_region
        %p184 = scmp.lt.s32.totalorder %s12, 1
        %s185 = scalar_select %p184, %s12, 1
        %s186 = smul.addr %s185, 8
        %s187 = smul.addr %s186, 4
        %s188 = scalar_lea.vmem %s0, %s187
      $region32: #{motion_detect_module.6} parent=27 // pred_fallthru
        _
    $region28: #{motion_detect_module.6} parent=5 // pred_fallthru
      _
    %p189 = scmp.le.s32.totalorder 1, %s12
    %p190 = scmp.lt.s32.totalorder %s12, 3
    %p191 = pnand %p189, %p190
    %p192 = pneg %p191
    // Predicated region
    $region33: #{motion_detect_module.6} parent=5 // pred_check
      _
    $region34: #{motion_detect_module.6} parent=5 // pred_check_branch
      %194 = sbr.rel (%p191) target = $region36
    $region35: #{motion_detect_module.6} parent=5 // pred_region
      %s195 = ssub.s32 %s12, 1
      %p196 = scmp.lt.s32.totalorder %s17, 1
      %s197 = scalar_select %p196, %s17, 1
      %s198 = smul.addr %s197, 8
      %s199 = smul.addr %s198, 4
      %s200 = scalar_lea.vmem %s0, %s199
      %p201 = pneg %p38
      %p202 = pneg %p35
      %p203 = pneg %p59
      %p204 = pneg %p56
      %p205 = pneg %p80
      %p206 = pneg %p77
      %p207 = pneg %p101
      %p208 = pneg %p98
      %p209 = pneg %p127
      %p210 = pneg %p124
      %p211 = scmp.lt.s32.totalorder %s17, 1
      %s212 = scalar_select %p211, %s17, 1
      %s213 = smul.addr %s212, 8
      %s214 = smul.addr %s213, 4
      %s215 = scalar_lea.vmem %s4, %s214
      %p216 = pneg %p153
      %p217 = pneg %p150
      %p218 = scmp.lt.s32.totalorder %s17, 1
      %s219 = scalar_select %p218, %s17, 1
      %s220 = smul.addr %s219, 2
      %s221 = smul.addr %s220, 2
      %s222 = scalar_lea.vmem %s5, %s221
      %p223 = scmp.lt.s32.totalorder %s17, 1
      %s224 = scalar_select %p223, %s17, 1
      %s225 = smul.addr %s224, 8
      %s226 = smul.addr %s225, 4
      %s227 = scalar_lea.vmem %s0, %s226
      %p228 = scmp.lt.s32.totalorder %s17, 1
      %s229 = scalar_select %p228, %s17, 1
      %s230 = smul.addr %s229, 8
      %s231 = smul.addr %s230, 4
      %s232 = scalar_lea.vmem %s4, %s231
      %p233 = scmp.lt.s32.totalorder %s17, 1
      %s234 = scalar_select %p233, %s17, 1
      %s235 = smul.addr %s234, 2
      %s236 = smul.addr %s235, 2
      %s237 = scalar_lea.vmem %s5, %s236
      %v239 = vld [vmem:[%s227] sm:$0xff]
      %v240 = vld [vmem:[%s227 + $0x8] sm:$0xff]
      %v241 = vld [vmem:[%s227 + $0x10] sm:$0xff]
      %v242 = vld [vmem:[%s227 + $0x18] sm:$0xff]
      %v243 = vld [vmem:[%s1] sm:$0x3]
      %v244 = vld [vmem:[%s2] sm:$0x3]
      %vm245 = vcmp.ge.f32.partialorder %v243, 0.0
      %v246 = vunpack.c.l.bf16 %v239
      %v247 = vunpack.c.h.bf16 %v239
      %v248 = vunpack.c.l.bf16 %v240
      %v249 = vunpack.c.h.bf16 %v240
      %v251 = vlaneseq
      %v252 = vshrl.u32 %v251, 7
      %v253 = vsub.s32 0, %v252
      %v254 = vrot.slane %v243, %v253
      %v255 = vlaneseq
      %v256 = vshrl.u32 %v255, 7
      %v257 = vsub.s32 1, %v256
      %v258 = vrot.slane %v243, %v257
      %v261 = vmul.f32 %v254, %v246
      %v262 = vmul.f32 %v258, %v247
      %v263 = vmul.f32 %v254, %v248
      %v264 = vmul.f32 %v258, %v249
      %v265 = vunpack.c.l.bf16 %v241
      %v266 = vunpack.c.h.bf16 %v241
      %v267 = vunpack.c.l.bf16 %v242
      %v268 = vunpack.c.h.bf16 %v242
      %v269 = vmul.f32 %v254, %v265
      %v270 = vmul.f32 %v258, %v266
      %v271 = vmul.f32 %v254, %v267
      %v272 = vmul.f32 %v258, %v268
      %v273 = vsel %vm245, 1, 0
      %v274 = vlaneseq
      %v275 = vshrl.u32 %v274, 7
      %v276 = vsub.s32 0, %v275
      %v277 = vrot.slane %v273, %v276
      %v278 = vlaneseq
      %v279 = vshrl.u32 %v278, 7
      %v280 = vsub.s32 1, %v279
      %v281 = vrot.slane %v273, %v280
      %vm282 = vcmp.eq.s32.totalorder %v277, 1
      %vm283 = vcmp.eq.s32.totalorder %v281, 1
      %v284 = vsel %vm282, %v261, %v269
      %v285 = vsel %vm283, %v262, %v270
      %v286 = vsel %vm282, %v263, %v271
      %v287 = vsel %vm283, %v264, %v272
      %v289 = vlaneseq
      %v290 = vshrl.u32 %v289, 7
      %v291 = vsub.s32 0, %v290
      %v292 = vrot.slane %v244, %v291
      %v293 = vlaneseq
      %v294 = vshrl.u32 %v293, 7
      %v295 = vsub.s32 1, %v294
      %v296 = vrot.slane %v244, %v295
      %v299 = vadd.f32 %v284, %v292
      %v300 = vadd.f32 %v285, %v296
      %v301 = vadd.f32 %v286, %v292
      %v302 = vadd.f32 %v287, %v296
      %vm303 = vcmp.ge.f32.partialorder %v299, 0.0
      %vm304 = vcmp.ge.f32.partialorder %v300, 0.0
      %vm305 = vcmp.ge.f32.partialorder %v301, 0.0
      %vm306 = vcmp.ge.f32.partialorder %v302, 0.0
      %v307 = vmul.f32 %v299, 0.2
      %v308 = vmul.f32 %v300, 0.2
      %v309 = vmul.f32 %v301, 0.2
      %v310 = vmul.f32 %v302, 0.2
      %v311 = vsel %vm303, %v299, %v307
      %v312 = vsel %vm304, %v300, %v308
      %v313 = vsel %vm305, %v301, %v309
      %v314 = vsel %vm306, %v302, %v310
      %v315 = vmul.f32 %v311, %v311
      %v316 = vmul.f32 %v312, %v312
      %v317 = vmul.f32 %v313, %v313
      %v318 = vmul.f32 %v314, %v314
      %v319 = vadd.f32 %v315, %v316
      %320 = vadd.xlane.f32.xlu0 %v319
      %v321 = vpop.xlane.xlu0 %320
      %v322 = vadd.f32 %v317, %v318
      %323 = vadd.xlane.f32.xlu0 %v322
      %v324 = vpop.xlane.xlu0 %323
      %325 = vmatprep.subr.mxu0 0.0
      %326 = vmatpush1.xpose.msra.mxu0 0.0
      %327 = vmatprep.subr.mxu0 0.0
      %328 = vmatpush1.xpose.msra.mxu0 0.0
      %329 = vmatprep.subr.mxu0 0.0
      %330 = vmatpush1.xpose.msra.mxu0 0.0
      %331 = vmatprep.subr.mxu0 0.0
      %332 = vmatpush1.xpose.msra.mxu0 0.0
      %333 = vmatprep.subr.mxu0 0.0
      %334 = vmatpush1.xpose.msra.mxu0 0.0
      %335 = vmatprep.subr.mxu0 0.0
      %336 = vmatpush1.xpose.msra.mxu0 0.0
      %337 = vmatprep.subr.mxu0 0.0
      %338 = vmatpush1.xpose.msra.mxu0 0.0
      %339 = vmatprep.subr.mxu0 0.0
      %340 = vmatpush1.xpose.msra.mxu0 0.0
      %341 = vmatprep.subr.mxu0 0.0
      %342 = vmatpush1.xpose.msra.mxu0 0.0
      %343 = vmatprep.subr.mxu0 0.0
      %344 = vmatpush1.xpose.msra.mxu0 0.0
      %345 = vmatprep.subr.mxu0 0.0
      %346 = vmatpush1.xpose.msra.mxu0 0.0
      %347 = vmatprep.subr.mxu0 0.0
      %348 = vmatpush1.xpose.msra.mxu0 0.0
      %349 = vmatprep.subr.mxu0 0.0
      %350 = vmatpush1.xpose.msra.mxu0 0.0
      %351 = vmatprep.subr.mxu0 0.0
      %352 = vmatpush1.xpose.msra.mxu0 0.0
      %353 = vmatprep.subr.mxu0 %v314
      %354 = vmatpush1.xpose.msra.mxu0 %v313
      %355 = vmatprep.subr.mxu0 %v312
      %356 = vmatpush1.xpose.msra.mxu0 %v311
      %357 = vmatprep.subr.mxu0 0.0
      %358 = vmatpush2.xpose.msra.mxu0 0.0
      %359 = vmatprep.subr.mxu0 0.0
      %360 = vmatpush2.xpose.msra.mxu0 0.0
      %361 = vmatprep.subr.mxu0 0.0
      %362 = vmatpush2.xpose.msra.mxu0 0.0
      %363 = vmatprep.subr.mxu0 0.0
      %364 = vmatpush2.xpose.msra.mxu0 0.0
      %365 = vmatprep.subr.mxu0 0.0
      %366 = vmatpush2.xpose.msra.mxu0 0.0
      %367 = vmatprep.subr.mxu0 0.0
      %368 = vmatpush2.xpose.msra.mxu0 0.0
      %369 = vmatprep.subr.mxu0 0.0
      %370 = vmatpush2.xpose.msra.mxu0 0.0
      %371 = vmatprep.subr.mxu0 0.0
      %372 = vmatpush2.xpose.msra.mxu0 0.0
      %373 = vmatprep.subr.mxu0 0.0
      %374 = vmatpush2.xpose.msra.mxu0 0.0
      %375 = vmatprep.subr.mxu0 0.0
      %376 = vmatpush2.xpose.msra.mxu0 0.0
      %377 = vmatprep.subr.mxu0 0.0
      %378 = vmatpush2.xpose.msra.mxu0 0.0
      %379 = vmatprep.subr.mxu0 0.0
      %380 = vmatpush2.xpose.msra.mxu0 0.0
      %381 = vmatprep.subr.mxu0 0.0
      %382 = vmatpush2.xpose.msra.mxu0 0.0
      %383 = vmatprep.subr.mxu0 0.0
      %384 = vmatpush2.xpose.msra.mxu0 0.0
      %385 = vmatprep.subr.mxu0 0.0
      %386 = vmatpush2.xpose.msra.mxu0 0.0
      %387 = vmatprep.subr.mxu0 0.0
      %388 = vmatpush2.xpose.msra.mxu0 0.0
      %389 = vmatprep.mubr.f32.mxu0 %v312
      %390 = vmatmul.mubr.f32.gmra.mxu0 %v311
      %v391 = vpop.f32.mrf.mxu0
      %v392 = vadd.f32 0.0, %v391
      %v393 = vpop.f32.mrf.mxu0
      %394 = vmatprep.mubr.f32.mxu0 %v314
      %395 = vmatmul.mubr.f32.gmra.mxu0 %v313
      %v396 = vpop.f32.mrf.mxu0
      %v397 = vadd.f32 0.0, %v396
      %v398 = vpop.f32.mrf.mxu0
      %399 = vdwg.mxu0
      %400 = vxpose.xlu0.b32.start [1/16] %v321, 128
      %401 = vxpose.xlu0.b32.cont [2/16] %v324, 128
      %402 = vxpose.xlu0.b32.cont [3/16] 0.0, 128
      %403 = vxpose.xlu0.b32.cont [4/16] 0.0, 128
      %404 = vxpose.xlu0.b32.cont [5/16] 0.0, 128
      %405 = vxpose.xlu0.b32.cont [6/16] 0.0, 128
      %406 = vxpose.xlu0.b32.cont [7/16] 0.0, 128
      %407 = vxpose.xlu0.b32.cont [8/16] 0.0, 128
      %408 = vxpose.xlu0.b32.cont [9/16] 0.0, 128
      %409 = vxpose.xlu0.b32.cont [10/16] 0.0, 128
      %410 = vxpose.xlu0.b32.cont [11/16] 0.0, 128
      %411 = vxpose.xlu0.b32.cont [12/16] 0.0, 128
      %412 = vxpose.xlu0.b32.cont [13/16] 0.0, 128
      %413 = vxpose.xlu0.b32.cont [14/16] 0.0, 128
      %414 = vxpose.xlu0.b32.cont [15/16] 0.0, 128
      %415 = vxpose.xlu0.b32.end [16/16] 0.0, 128
      %v416 = vpop.trf.xlu0
      %v417 = vpop.trf.xlu0
      %v418 = vpop.trf.xlu0
      %v419 = vpop.trf.xlu0
      %v420 = vpop.trf.xlu0
      %v421 = vpop.trf.xlu0
      %v422 = vpop.trf.xlu0
      %v423 = vpop.trf.xlu0
      %v424 = vpop.trf.xlu0
      %v425 = vpop.trf.xlu0
      %v426 = vpop.trf.xlu0
      %v427 = vpop.trf.xlu0
      %v428 = vpop.trf.xlu0
      %v429 = vpop.trf.xlu0
      %v430 = vpop.trf.xlu0
      %v431 = vpop.trf.xlu0
      %v432 = vlaneseq
      %v433 = vshrl.u32 %v432, 7
      %v434 = vsub.s32 0, %v433
      %v435 = vrot.slane %v416, %v434
      %v436 = vadd.f32 %v321, %v435
      %v437 = vadd.f32 %v324, %v435
      %v438 = vmul.f32 %v392, 2.0
      %v439 = vmul.f32 %v397, 2.0
      %v440 = vsub.f32 %v436, %v438
      %v441 = vsub.f32 %v437, %v439
      %v442 = vpack.c.bf16 %v313, %v311
      %v443 = vpack.c.bf16 %v314, %v312
      %v444 = vld [vmem:[%s3] sm:$0xff]
      %v445 = vld [vmem:[%s3 + $0x8] sm:$0xff]
      %v446 = vld [vmem:[%s3 + $0x10] sm:$0xff]
      %v447 = vld [vmem:[%s3 + $0x18] sm:$0xff]
      %v448 = vld [vmem:[%s3 + $0x20] sm:$0xff]
      %v449 = vld [vmem:[%s3 + $0x28] sm:$0xff]
      %v450 = vld [vmem:[%s3 + $0x30] sm:$0xff]
      %v451 = vld [vmem:[%s3 + $0x38] sm:$0xff]
      %v452 = vld [vmem:[%s3 + $0x40] sm:$0xff]
      %v453 = vld [vmem:[%s3 + $0x48] sm:$0xff]
      %v454 = vld [vmem:[%s3 + $0x50] sm:$0xff]
      %v455 = vld [vmem:[%s3 + $0x58] sm:$0xff]
      %v456 = vld [vmem:[%s3 + $0x60] sm:$0xff]
      %v457 = vld [vmem:[%s3 + $0x68] sm:$0xff]
      %v458 = vld [vmem:[%s3 + $0x70] sm:$0xff]
      %v459 = vld [vmem:[%s3 + $0x78] sm:$0xff]
      %v460 = vld [vmem:[%s3 + $0x80] sm:$0xff]
      %v461 = vld [vmem:[%s3 + $0x88] sm:$0xff]
      %v462 = vld [vmem:[%s3 + $0x90] sm:$0xff]
      %v463 = vld [vmem:[%s3 + $0x98] sm:$0xff]
      %v464 = vld [vmem:[%s3 + $0xa0] sm:$0xff]
      %v465 = vld [vmem:[%s3 + $0xa8] sm:$0xff]
      %v466 = vld [vmem:[%s3 + $0xb0] sm:$0xff]
      %v467 = vld [vmem:[%s3 + $0xb8] sm:$0xff]
      %v468 = vld [vmem:[%s3 + $0xc0] sm:$0xff]
      %v469 = vld [vmem:[%s3 + $0xc8] sm:$0xff]
      %v470 = vld [vmem:[%s3 + $0xd0] sm:$0xff]
      %v471 = vld [vmem:[%s3 + $0xd8] sm:$0xff]
      %v472 = vld [vmem:[%s3 + $0xe0] sm:$0xff]
      %v473 = vld [vmem:[%s3 + $0xe8] sm:$0xff]
      %v474 = vld [vmem:[%s3 + $0xf0] sm:$0xff]
      %v475 = vld [vmem:[%s3 + $0xf8] sm:$0xff]
      %v476 = vld [vmem:[%s3 + $0x100] sm:$0xff]
      %v477 = vld [vmem:[%s3 + $0x108] sm:$0xff]
      %v478 = vld [vmem:[%s3 + $0x110] sm:$0xff]
      %v479 = vld [vmem:[%s3 + $0x118] sm:$0xff]
      %v480 = vld [vmem:[%s3 + $0x120] sm:$0xff]
      %v481 = vld [vmem:[%s3 + $0x128] sm:$0xff]
      %v482 = vld [vmem:[%s3 + $0x130] sm:$0xff]
      %v483 = vld [vmem:[%s3 + $0x138] sm:$0xff]
      %v484 = vld [vmem:[%s3 + $0x140] sm:$0xff]
      %v485 = vld [vmem:[%s3 + $0x148] sm:$0xff]
      %v486 = vld [vmem:[%s3 + $0x150] sm:$0xff]
      %v487 = vld [vmem:[%s3 + $0x158] sm:$0xff]
      %v488 = vld [vmem:[%s3 + $0x160] sm:$0xff]
      %v489 = vld [vmem:[%s3 + $0x168] sm:$0xff]
      %v490 = vld [vmem:[%s3 + $0x170] sm:$0xff]
      %v491 = vld [vmem:[%s3 + $0x178] sm:$0xff]
      %v492 = vld [vmem:[%s3 + $0x180] sm:$0xff]
      %v493 = vld [vmem:[%s3 + $0x188] sm:$0xff]
      %v494 = vld [vmem:[%s3 + $0x190] sm:$0xff]
      %v495 = vld [vmem:[%s3 + $0x198] sm:$0xff]
      %v496 = vld [vmem:[%s3 + $0x1a0] sm:$0xff]
      %v497 = vld [vmem:[%s3 + $0x1a8] sm:$0xff]
      %v498 = vld [vmem:[%s3 + $0x1b0] sm:$0xff]
      %v499 = vld [vmem:[%s3 + $0x1b8] sm:$0xff]
      %v500 = vld [vmem:[%s3 + $0x1c0] sm:$0xff]
      %v501 = vld [vmem:[%s3 + $0x1c8] sm:$0xff]
      %v502 = vld [vmem:[%s3 + $0x1d0] sm:$0xff]
      %v503 = vld [vmem:[%s3 + $0x1d8] sm:$0xff]
      %v504 = vld [vmem:[%s3 + $0x1e0] sm:$0xff]
      %v505 = vld [vmem:[%s3 + $0x1e8] sm:$0xff]
      %v506 = vld [vmem:[%s3 + $0x1f0] sm:$0xff]
      %v507 = vld [vmem:[%s3 + $0x1f8] sm:$0xff]
      %v572 = vunpack.c.l.b16 %v444
      %v573 = vunpack.c.h.b16 %v444
      %v574 = vunpack.c.l.b16 %v445
      %v575 = vunpack.c.h.b16 %v445
      %v576 = vunpack.c.l.b16 %v446
      %v577 = vunpack.c.h.b16 %v446
      %v578 = vunpack.c.l.b16 %v447
      %v579 = vunpack.c.h.b16 %v447
      %v580 = vunpack.c.l.b16 %v448
      %v581 = vunpack.c.h.b16 %v448
      %v582 = vunpack.c.l.b16 %v449
      %v583 = vunpack.c.h.b16 %v449
      %v584 = vunpack.c.l.b16 %v450
      %v585 = vunpack.c.h.b16 %v450
      %v586 = vunpack.c.l.b16 %v451
      %v587 = vunpack.c.h.b16 %v451
      %v588 = vunpack.c.l.b16 %v452
      %v589 = vunpack.c.h.b16 %v452
      %v590 = vunpack.c.l.b16 %v453
      %v591 = vunpack.c.h.b16 %v453
      %v592 = vunpack.c.l.b16 %v454
      %v593 = vunpack.c.h.b16 %v454
      %v594 = vunpack.c.l.b16 %v455
      %v595 = vunpack.c.h.b16 %v455
      %v596 = vunpack.c.l.b16 %v456
      %v597 = vunpack.c.h.b16 %v456
      %v598 = vunpack.c.l.b16 %v457
      %v599 = vunpack.c.h.b16 %v457
      %v600 = vunpack.c.l.b16 %v458
      %v601 = vunpack.c.h.b16 %v458
      %v602 = vunpack.c.l.b16 %v459
      %v603 = vunpack.c.h.b16 %v459
      %v604 = vunpack.c.l.b16 %v460
      %v605 = vunpack.c.h.b16 %v460
      %v606 = vunpack.c.l.b16 %v461
      %v607 = vunpack.c.h.b16 %v461
      %v608 = vunpack.c.l.b16 %v462
      %v609 = vunpack.c.h.b16 %v462
      %v610 = vunpack.c.l.b16 %v463
      %v611 = vunpack.c.h.b16 %v463
      %v612 = vunpack.c.l.b16 %v464
      %v613 = vunpack.c.h.b16 %v464
      %v614 = vunpack.c.l.b16 %v465
      %v615 = vunpack.c.h.b16 %v465
      %v616 = vunpack.c.l.b16 %v466
      %v617 = vunpack.c.h.b16 %v466
      %v618 = vunpack.c.l.b16 %v467
      %v619 = vunpack.c.h.b16 %v467
      %v620 = vunpack.c.l.b16 %v468
      %v621 = vunpack.c.h.b16 %v468
      %v622 = vunpack.c.l.b16 %v469
      %v623 = vunpack.c.h.b16 %v469
      %v624 = vunpack.c.l.b16 %v470
      %v625 = vunpack.c.h.b16 %v470
      %v626 = vunpack.c.l.b16 %v471
      %v627 = vunpack.c.h.b16 %v471
      %v628 = vunpack.c.l.b16 %v472
      %v629 = vunpack.c.h.b16 %v472
      %v630 = vunpack.c.l.b16 %v473
      %v631 = vunpack.c.h.b16 %v473
      %v632 = vunpack.c.l.b16 %v474
      %v633 = vunpack.c.h.b16 %v474
      %v634 = vunpack.c.l.b16 %v475
      %v635 = vunpack.c.h.b16 %v475
      %v636 = vunpack.c.l.b16 %v476
      %v637 = vunpack.c.h.b16 %v476
      %v638 = vunpack.c.l.b16 %v477
      %v639 = vunpack.c.h.b16 %v477
      %v640 = vunpack.c.l.b16 %v478
      %v641 = vunpack.c.h.b16 %v478
      %v642 = vunpack.c.l.b16 %v479
      %v643 = vunpack.c.h.b16 %v479
      %v644 = vunpack.c.l.b16 %v480
      %v645 = vunpack.c.h.b16 %v480
      %v646 = vunpack.c.l.b16 %v481
      %v647 = vunpack.c.h.b16 %v481
      %v648 = vunpack.c.l.b16 %v482
      %v649 = vunpack.c.h.b16 %v482
      %v650 = vunpack.c.l.b16 %v483
      %v651 = vunpack.c.h.b16 %v483
      %v652 = vunpack.c.l.b16 %v484
      %v653 = vunpack.c.h.b16 %v484
      %v654 = vunpack.c.l.b16 %v485
      %v655 = vunpack.c.h.b16 %v485
      %v656 = vunpack.c.l.b16 %v486
      %v657 = vunpack.c.h.b16 %v486
      %v658 = vunpack.c.l.b16 %v487
      %v659 = vunpack.c.h.b16 %v487
      %v660 = vunpack.c.l.b16 %v488
      %v661 = vunpack.c.h.b16 %v488
      %v662 = vunpack.c.l.b16 %v489
      %v663 = vunpack.c.h.b16 %v489
      %v664 = vunpack.c.l.b16 %v490
      %v665 = vunpack.c.h.b16 %v490
      %v666 = vunpack.c.l.b16 %v491
      %v667 = vunpack.c.h.b16 %v491
      %v668 = vunpack.c.l.b16 %v492
      %v669 = vunpack.c.h.b16 %v492
      %v670 = vunpack.c.l.b16 %v493
      %v671 = vunpack.c.h.b16 %v493
      %v672 = vunpack.c.l.b16 %v494
      %v673 = vunpack.c.h.b16 %v494
      %v674 = vunpack.c.l.b16 %v495
      %v675 = vunpack.c.h.b16 %v495
      %v676 = vunpack.c.l.b16 %v496
      %v677 = vunpack.c.h.b16 %v496
      %v678 = vunpack.c.l.b16 %v497
      %v679 = vunpack.c.h.b16 %v497
      %v680 = vunpack.c.l.b16 %v498
      %v681 = vunpack.c.h.b16 %v498
      %v682 = vunpack.c.l.b16 %v499
      %v683 = vunpack.c.h.b16 %v499
      %v684 = vunpack.c.l.b16 %v500
      %v685 = vunpack.c.h.b16 %v500
      %v686 = vunpack.c.l.b16 %v501
      %v687 = vunpack.c.h.b16 %v501
      %v688 = vunpack.c.l.b16 %v502
      %v689 = vunpack.c.h.b16 %v502
      %v690 = vunpack.c.l.b16 %v503
      %v691 = vunpack.c.h.b16 %v503
      %v692 = vunpack.c.l.b16 %v504
      %v693 = vunpack.c.h.b16 %v504
      %v694 = vunpack.c.l.b16 %v505
      %v695 = vunpack.c.h.b16 %v505
      %v696 = vunpack.c.l.b16 %v506
      %v697 = vunpack.c.h.b16 %v506
      %v698 = vunpack.c.l.b16 %v507
      %v699 = vunpack.c.h.b16 %v507
      %v700 = vpack.c.b16 %v576, %v572
      %v701 = vpack.c.b16 %v577, %v573
      %v702 = vpack.c.b16 %v578, %v574
      %v703 = vpack.c.b16 %v579, %v575
      %v704 = vpack.c.b16 %v584, %v580
      %v705 = vpack.c.b16 %v585, %v581
      %v706 = vpack.c.b16 %v586, %v582
      %v707 = vpack.c.b16 %v587, %v583
      %v708 = vpack.c.b16 %v592, %v588
      %v709 = vpack.c.b16 %v593, %v589
      %v710 = vpack.c.b16 %v594, %v590
      %v711 = vpack.c.b16 %v595, %v591
      %v712 = vpack.c.b16 %v600, %v596
      %v713 = vpack.c.b16 %v601, %v597
      %v714 = vpack.c.b16 %v602, %v598
      %v715 = vpack.c.b16 %v603, %v599
      %v716 = vpack.c.b16 %v608, %v604
      %v717 = vpack.c.b16 %v609, %v605
      %v718 = vpack.c.b16 %v610, %v606
      %v719 = vpack.c.b16 %v611, %v607
      %v720 = vpack.c.b16 %v616, %v612
      %v721 = vpack.c.b16 %v617, %v613
      %v722 = vpack.c.b16 %v618, %v614
      %v723 = vpack.c.b16 %v619, %v615
      %v724 = vpack.c.b16 %v624, %v620
      %v725 = vpack.c.b16 %v625, %v621
      %v726 = vpack.c.b16 %v626, %v622
      %v727 = vpack.c.b16 %v627, %v623
      %v728 = vpack.c.b16 %v632, %v628
      %v729 = vpack.c.b16 %v633, %v629
      %v730 = vpack.c.b16 %v634, %v630
      %v731 = vpack.c.b16 %v635, %v631
      %v732 = vpack.c.b16 %v640, %v636
      %v733 = vpack.c.b16 %v641, %v637
      %v734 = vpack.c.b16 %v642, %v638
      %v735 = vpack.c.b16 %v643, %v639
      %v736 = vpack.c.b16 %v648, %v644
      %v737 = vpack.c.b16 %v649, %v645
      %v738 = vpack.c.b16 %v650, %v646
      %v739 = vpack.c.b16 %v651, %v647
      %v740 = vpack.c.b16 %v656, %v652
      %v741 = vpack.c.b16 %v657, %v653
      %v742 = vpack.c.b16 %v658, %v654
      %v743 = vpack.c.b16 %v659, %v655
      %v744 = vpack.c.b16 %v664, %v660
      %v745 = vpack.c.b16 %v665, %v661
      %v746 = vpack.c.b16 %v666, %v662
      %v747 = vpack.c.b16 %v667, %v663
      %v748 = vpack.c.b16 %v672, %v668
      %v749 = vpack.c.b16 %v673, %v669
      %v750 = vpack.c.b16 %v674, %v670
      %v751 = vpack.c.b16 %v675, %v671
      %v752 = vpack.c.b16 %v680, %v676
      %v753 = vpack.c.b16 %v681, %v677
      %v754 = vpack.c.b16 %v682, %v678
      %v755 = vpack.c.b16 %v683, %v679
      %v756 = vpack.c.b16 %v688, %v684
      %v757 = vpack.c.b16 %v689, %v685
      %v758 = vpack.c.b16 %v690, %v686
      %v759 = vpack.c.b16 %v691, %v687
      %v760 = vpack.c.b16 %v696, %v692
      %v761 = vpack.c.b16 %v697, %v693
      %v762 = vpack.c.b16 %v698, %v694
      %v763 = vpack.c.b16 %v699, %v695
      %828 = vmatprep.subr.bf16.mxu0 %v729
      %829 = vmatpush1.bf16.msra.mxu0 %v728
      %830 = vmatprep.subr.bf16.mxu0 %v725
      %831 = vmatpush1.bf16.msra.mxu0 %v724
      %832 = vmatprep.subr.bf16.mxu0 %v721
      %833 = vmatpush1.bf16.msra.mxu0 %v720
      %834 = vmatprep.subr.bf16.mxu0 %v717
      %835 = vmatpush1.bf16.msra.mxu0 %v716
      %836 = vmatprep.subr.bf16.mxu0 %v713
      %837 = vmatpush1.bf16.msra.mxu0 %v712
      %838 = vmatprep.subr.bf16.mxu0 %v709
      %839 = vmatpush1.bf16.msra.mxu0 %v708
      %840 = vmatprep.subr.bf16.mxu0 %v705
      %841 = vmatpush1.bf16.msra.mxu0 %v704
      %842 = vmatprep.subr.bf16.mxu0 %v701
      %843 = vmatpush1.bf16.msra.mxu0 %v700
      %844 = vmatprep.subr.bf16.mxu0 %v761
      %845 = vmatpush2.bf16.msra.mxu0 %v760
      %846 = vmatprep.subr.bf16.mxu0 %v757
      %847 = vmatpush2.bf16.msra.mxu0 %v756
      %848 = vmatprep.subr.bf16.mxu0 %v753
      %849 = vmatpush2.bf16.msra.mxu0 %v752
      %850 = vmatprep.subr.bf16.mxu0 %v749
      %851 = vmatpush2.bf16.msra.mxu0 %v748
      %852 = vmatprep.subr.bf16.mxu0 %v745
      %853 = vmatpush2.bf16.msra.mxu0 %v744
      %854 = vmatprep.subr.bf16.mxu0 %v741
      %855 = vmatpush2.bf16.msra.mxu0 %v740
      %856 = vmatprep.subr.bf16.mxu0 %v737
      %857 = vmatpush2.bf16.msra.mxu0 %v736
      %858 = vmatprep.subr.bf16.mxu0 %v733
      %859 = vmatpush2.bf16.msra.mxu0 %v732
      %860 = vmatprep.mubr.bf16.mxu0 %v443
      %861 = vmatmul.mubr.bf16.gmra.mxu0 %v442
      %v862 = vpop.f32.mrf.mxu0
      %v863 = vadd.f32 0.0, %v862
      %v864 = vpop.f32.mrf.mxu0
      %v865 = vadd.f32 0.0, %v864
      %v866 = vpop.f32.mrf.mxu0
      %v867 = vadd.f32 0.0, %v866
      %v868 = vpop.f32.mrf.mxu0
      %v869 = vadd.f32 0.0, %v868
      %870 = vdwg.mxu0
      %871 = vmatprep.subr.bf16.mxu0 %v731
      %872 = vmatpush1.bf16.msra.mxu0 %v730
      %873 = vmatprep.subr.bf16.mxu0 %v727
      %874 = vmatpush1.bf16.msra.mxu0 %v726
      %875 = vmatprep.subr.bf16.mxu0 %v723
      %876 = vmatpush1.bf16.msra.mxu0 %v722
      %877 = vmatprep.subr.bf16.mxu0 %v719
      %878 = vmatpush1.bf16.msra.mxu0 %v718
      %879 = vmatprep.subr.bf16.mxu0 %v715
      %880 = vmatpush1.bf16.msra.mxu0 %v714
      %881 = vmatprep.subr.bf16.mxu0 %v711
      %882 = vmatpush1.bf16.msra.mxu0 %v710
      %883 = vmatprep.subr.bf16.mxu0 %v707
      %884 = vmatpush1.bf16.msra.mxu0 %v706
      %885 = vmatprep.subr.bf16.mxu0 %v703
      %886 = vmatpush1.bf16.msra.mxu0 %v702
      %887 = vmatprep.subr.bf16.mxu0 %v763
      %888 = vmatpush2.bf16.msra.mxu0 %v762
      %889 = vmatprep.subr.bf16.mxu0 %v759
      %890 = vmatpush2.bf16.msra.mxu0 %v758
      %891 = vmatprep.subr.bf16.mxu0 %v755
      %892 = vmatpush2.bf16.msra.mxu0 %v754
      %893 = vmatprep.subr.bf16.mxu0 %v751
      %894 = vmatpush2.bf16.msra.mxu0 %v750
      %895 = vmatprep.subr.bf16.mxu0 %v747
      %896 = vmatpush2.bf16.msra.mxu0 %v746
      %897 = vmatprep.subr.bf16.mxu0 %v743
      %898 = vmatpush2.bf16.msra.mxu0 %v742
      %899 = vmatprep.subr.bf16.mxu0 %v739
      %900 = vmatpush2.bf16.msra.mxu0 %v738
      %901 = vmatprep.subr.bf16.mxu0 %v735
      %902 = vmatpush2.bf16.msra.mxu0 %v734
      %903 = vmatprep.mubr.bf16.mxu0 %v443
      %904 = vmatmul.mubr.bf16.gmra.mxu0 %v442
      %v905 = vpop.f32.mrf.mxu0
      %v906 = vadd.f32 0.0, %v905
      %v907 = vpop.f32.mrf.mxu0
      %v908 = vadd.f32 0.0, %v907
      %v909 = vpop.f32.mrf.mxu0
      %v910 = vadd.f32 0.0, %v909
      %v911 = vpop.f32.mrf.mxu0
      %v912 = vadd.f32 0.0, %v911
      %913 = vdwg.mxu0
      %v914 = vlaneseq
      %v915 = vand.u32 %v914, 127
      %vm916 = vcmask 130048
      %v917 = vsel %vm916, %v440, inf
      %918 = vmin.xlane.f32.xlu0 %v917
      %v919 = vpop.xlane.xlu0 %918
      %v920 = vsel %vm916, %v441, inf
      %921 = vmin.xlane.f32.xlu0 %v920
      %v922 = vpop.xlane.xlu0 %921
      %vm923 = vcmp.le.f32.partialorder %v440, %v919
      %vm924 = vcmp.le.f32.partialorder %v441, %v922
      %v925 = vsel %vm923, %v915, 16
      %v926 = vsel %vm924, %v915, 16
      %v927 = vsel %vm916, %v925, 2147483647
      %v928 = vand.u32 %v927, 65535
      %v929 = vshra.s32 %v927, 16
      %v930 = vcvt.s32.f32 %v928
      %v931 = vcvt.s32.f32 %v929
      %932 = vmin.xlane.f32.xlu0 %v931
      %v933 = vpop.xlane.xlu0 %932
      %vm934 = vcmp.eq.f32.partialorder %v931, %v933
      %v935 = vsel %vm934, %v930, inf
      %936 = vmin.xlane.f32.xlu0 %v935
      %v937 = vpop.xlane.xlu0 %936
      %v938 = vcvt.f32.s32 %v937
      %v939 = vcvt.f32.s32 %v933
      %v940 = vshll.u32 %v939, 16
      %v941 = vadd.s32 %v940, %v938
      %v942 = vsel %vm916, %v926, 2147483647
      %v943 = vand.u32 %v942, 65535
      %v944 = vshra.s32 %v942, 16
      %v945 = vcvt.s32.f32 %v943
      %v946 = vcvt.s32.f32 %v944
      %947 = vmin.xlane.f32.xlu0 %v946
      %v948 = vpop.xlane.xlu0 %947
      %vm949 = vcmp.eq.f32.partialorder %v946, %v948
      %v950 = vsel %vm949, %v945, inf
      %951 = vmin.xlane.f32.xlu0 %v950
      %v952 = vpop.xlane.xlu0 %951
      %v953 = vcvt.f32.s32 %v952
      %v954 = vcvt.f32.s32 %v948
      %v955 = vshll.u32 %v954, 16
      %v956 = vadd.s32 %v955, %v953
      %vm957 = vcmp.eq.s32.totalorder %v915, %v941
      %vm958 = vcmp.eq.s32.totalorder %v915, %v956
      %v959 = vsel %vm957, 1e+30, %v440
      %v960 = vsel %vm958, 1e+30, %v441
      %v961 = vsel %vm916, %v959, inf
      %962 = vmin.xlane.f32.xlu0 %v961
      %v963 = vpop.xlane.xlu0 %962
      %v964 = vsel %vm916, %v960, inf
      %965 = vmin.xlane.f32.xlu0 %v964
      %v966 = vpop.xlane.xlu0 %965
      %vm967 = vcmp.le.f32.partialorder %v959, %v963
      %vm968 = vcmp.le.f32.partialorder %v960, %v966
      %v969 = vsel %vm967, %v915, 16
      %v970 = vsel %vm968, %v915, 16
      %v971 = vsel %vm916, %v969, 2147483647
      %v972 = vand.u32 %v971, 65535
      %v973 = vshra.s32 %v971, 16
      %v974 = vcvt.s32.f32 %v972
      %v975 = vcvt.s32.f32 %v973
      %976 = vmin.xlane.f32.xlu0 %v975
      %v977 = vpop.xlane.xlu0 %976
      %vm978 = vcmp.eq.f32.partialorder %v975, %v977
      %v979 = vsel %vm978, %v974, inf
      %980 = vmin.xlane.f32.xlu0 %v979
      %v981 = vpop.xlane.xlu0 %980
      %v982 = vcvt.f32.s32 %v981
      %v983 = vcvt.f32.s32 %v977
      %v984 = vshll.u32 %v983, 16
      %v985 = vadd.s32 %v984, %v982
      %v986 = vsel %vm916, %v970, 2147483647
      %v987 = vand.u32 %v986, 65535
      %v988 = vshra.s32 %v986, 16
      %v989 = vcvt.s32.f32 %v987
      %v990 = vcvt.s32.f32 %v988
      %991 = vmin.xlane.f32.xlu0 %v990
      %v992 = vpop.xlane.xlu0 %991
      %vm993 = vcmp.eq.f32.partialorder %v990, %v992
      %v994 = vsel %vm993, %v989, inf
      %995 = vmin.xlane.f32.xlu0 %v994
      %v996 = vpop.xlane.xlu0 %995
      %v997 = vcvt.f32.s32 %v996
      %v998 = vcvt.f32.s32 %v992
      %v999 = vshll.u32 %v998, 16
      %v1000 = vadd.s32 %v999, %v997
      %vm1001 = vcmp.eq.s32.totalorder %v915, %v985
      %vm1002 = vcmp.eq.s32.totalorder %v915, %v1000
      %v1003 = vsel %vm1001, 1e+30, %v959
      %v1004 = vsel %vm1002, 1e+30, %v960
      %v1005 = vsel %vm916, %v1003, inf
      %1006 = vmin.xlane.f32.xlu0 %v1005
      %v1007 = vpop.xlane.xlu0 %1006
      %v1008 = vsel %vm916, %v1004, inf
      %1009 = vmin.xlane.f32.xlu0 %v1008
      %v1010 = vpop.xlane.xlu0 %1009
      %vm1011 = vcmp.le.f32.partialorder %v1003, %v1007
      %vm1012 = vcmp.le.f32.partialorder %v1004, %v1010
      %v1013 = vsel %vm1011, %v915, 16
      %v1014 = vsel %vm1012, %v915, 16
      %v1015 = vsel %vm916, %v1013, 2147483647
      %v1016 = vand.u32 %v1015, 65535
      %v1017 = vshra.s32 %v1015, 16
      %v1018 = vcvt.s32.f32 %v1016
      %v1019 = vcvt.s32.f32 %v1017
      %1020 = vmin.xlane.f32.xlu0 %v1019
      %v1021 = vpop.xlane.xlu0 %1020
      %vm1022 = vcmp.eq.f32.partialorder %v1019, %v1021
      %v1023 = vsel %vm1022, %v1018, inf
      %1024 = vmin.xlane.f32.xlu0 %v1023
      %v1025 = vpop.xlane.xlu0 %1024
      %v1026 = vcvt.f32.s32 %v1025
      %v1027 = vcvt.f32.s32 %v1021
      %v1028 = vshll.u32 %v1027, 16
      %v1029 = vadd.s32 %v1028, %v1026
      %v1030 = vsel %vm916, %v1014, 2147483647
      %v1031 = vand.u32 %v1030, 65535
      %v1032 = vshra.s32 %v1030, 16
      %v1033 = vcvt.s32.f32 %v1031
      %v1034 = vcvt.s32.f32 %v1032
      %1035 = vmin.xlane.f32.xlu0 %v1034
      %v1036 = vpop.xlane.xlu0 %1035
      %vm1037 = vcmp.eq.f32.partialorder %v1034, %v1036
      %v1038 = vsel %vm1037, %v1033, inf
      %1039 = vmin.xlane.f32.xlu0 %v1038
      %v1040 = vpop.xlane.xlu0 %1039
      %v1041 = vcvt.f32.s32 %v1040
      %v1042 = vcvt.f32.s32 %v1036
      %v1043 = vshll.u32 %v1042, 16
      %v1044 = vadd.s32 %v1043, %v1041
      %vm1045 = vcmp.eq.s32.totalorder %v915, %v1029
      %vm1046 = vcmp.eq.s32.totalorder %v915, %v1044
      %v1047 = vsel %vm1045, 1e+30, %v1003
      %v1048 = vsel %vm1046, 1e+30, %v1004
      %v1049 = vsel %vm916, %v1047, inf
      %1050 = vmin.xlane.f32.xlu0 %v1049
      %v1051 = vpop.xlane.xlu0 %1050
      %v1052 = vsel %vm916, %v1048, inf
      %1053 = vmin.xlane.f32.xlu0 %v1052
      %v1054 = vpop.xlane.xlu0 %1053
      %vm1055 = vcmp.le.f32.partialorder %v1047, %v1051
      %vm1056 = vcmp.le.f32.partialorder %v1048, %v1054
      %v1057 = vsel %vm1055, %v915, 16
      %v1058 = vsel %vm1056, %v915, 16
      %v1059 = vsel %vm916, %v1057, 2147483647
      %v1060 = vand.u32 %v1059, 65535
      %v1061 = vshra.s32 %v1059, 16
      %v1062 = vcvt.s32.f32 %v1060
      %v1063 = vcvt.s32.f32 %v1061
      %1064 = vmin.xlane.f32.xlu0 %v1063
      %v1065 = vpop.xlane.xlu0 %1064
      %vm1066 = vcmp.eq.f32.partialorder %v1063, %v1065
      %v1067 = vsel %vm1066, %v1062, inf
      %1068 = vmin.xlane.f32.xlu0 %v1067
      %v1069 = vpop.xlane.xlu0 %1068
      %v1070 = vcvt.f32.s32 %v1069
      %v1071 = vcvt.f32.s32 %v1065
      %v1072 = vshll.u32 %v1071, 16
      %v1073 = vadd.s32 %v1072, %v1070
      %v1074 = vsel %vm916, %v1058, 2147483647
      %v1075 = vand.u32 %v1074, 65535
      %v1076 = vshra.s32 %v1074, 16
      %v1077 = vcvt.s32.f32 %v1075
      %v1078 = vcvt.s32.f32 %v1076
      %1079 = vmin.xlane.f32.xlu0 %v1078
      %v1080 = vpop.xlane.xlu0 %1079
      %vm1081 = vcmp.eq.f32.partialorder %v1078, %v1080
      %v1082 = vsel %vm1081, %v1077, inf
      %1083 = vmin.xlane.f32.xlu0 %v1082
      %v1084 = vpop.xlane.xlu0 %1083
      %v1085 = vcvt.f32.s32 %v1084
      %v1086 = vcvt.f32.s32 %v1080
      %v1087 = vshll.u32 %v1086, 16
      %v1088 = vadd.s32 %v1087, %v1085
      %vm1089 = vcmp.eq.s32.totalorder %v915, %v1073
      %vm1090 = vcmp.eq.s32.totalorder %v915, %v1088
      %v1091 = vsel %vm1089, 1e+30, %v1047
      %v1092 = vsel %vm1090, 1e+30, %v1048
      %v1093 = vsel %vm916, %v1091, inf
      %1094 = vmin.xlane.f32.xlu0 %v1093
      %v1095 = vpop.xlane.xlu0 %1094
      %v1096 = vsel %vm916, %v1092, inf
      %1097 = vmin.xlane.f32.xlu0 %v1096
      %v1098 = vpop.xlane.xlu0 %1097
      %vm1099 = vcmp.le.f32.partialorder %v1091, %v1095
      %vm1100 = vcmp.le.f32.partialorder %v1092, %v1098
      %v1101 = vsel %vm1099, %v915, 16
      %v1102 = vsel %vm1100, %v915, 16
      %v1103 = vsel %vm916, %v1101, 2147483647
      %v1104 = vand.u32 %v1103, 65535
      %v1105 = vshra.s32 %v1103, 16
      %v1106 = vcvt.s32.f32 %v1104
      %v1107 = vcvt.s32.f32 %v1105
      %1108 = vmin.xlane.f32.xlu0 %v1107
      %v1109 = vpop.xlane.xlu0 %1108
      %vm1110 = vcmp.eq.f32.partialorder %v1107, %v1109
      %v1111 = vsel %vm1110, %v1106, inf
      %1112 = vmin.xlane.f32.xlu0 %v1111
      %v1113 = vpop.xlane.xlu0 %1112
      %v1114 = vcvt.f32.s32 %v1113
      %v1115 = vcvt.f32.s32 %v1109
      %v1116 = vshll.u32 %v1115, 16
      %v1117 = vadd.s32 %v1116, %v1114
      %v1118 = vsel %vm916, %v1102, 2147483647
      %v1119 = vand.u32 %v1118, 65535
      %v1120 = vshra.s32 %v1118, 16
      %v1121 = vcvt.s32.f32 %v1119
      %v1122 = vcvt.s32.f32 %v1120
      %1123 = vmin.xlane.f32.xlu0 %v1122
      %v1124 = vpop.xlane.xlu0 %1123
      %vm1125 = vcmp.eq.f32.partialorder %v1122, %v1124
      %v1126 = vsel %vm1125, %v1121, inf
      %1127 = vmin.xlane.f32.xlu0 %v1126
      %v1128 = vpop.xlane.xlu0 %1127
      %v1129 = vcvt.f32.s32 %v1128
      %v1130 = vcvt.f32.s32 %v1124
      %v1131 = vshll.u32 %v1130, 16
      %v1132 = vadd.s32 %v1131, %v1129
      %1133 = vset.pattern.permute.xlu0 0
      %1134 = vperm.xlu0 %1133, %v941
      %v1135 = vpop.permute.xlu0 %1134
      %1136 = vset.pattern.permute.xlu0 0
      %1137 = vperm.xlu0 %1136, %v956
      %v1138 = vpop.permute.xlu0 %1137
      %1139 = vset.pattern.permute.xlu0 0
      %1140 = vperm.xlu0 %1139, %v985
      %v1141 = vpop.permute.xlu0 %1140
      %1142 = vset.pattern.permute.xlu0 0
      %1143 = vperm.xlu0 %1142, %v1000
      %v1144 = vpop.permute.xlu0 %1143
      %1145 = vset.pattern.permute.xlu0 0
      %1146 = vperm.xlu0 %1145, %v1029
      %v1147 = vpop.permute.xlu0 %1146
      %1148 = vset.pattern.permute.xlu0 0
      %1149 = vperm.xlu0 %1148, %v1044
      %v1150 = vpop.permute.xlu0 %1149
      %1151 = vset.pattern.permute.xlu0 0
      %1152 = vperm.xlu0 %1151, %v1073
      %v1153 = vpop.permute.xlu0 %1152
      %1154 = vset.pattern.permute.xlu0 0
      %1155 = vperm.xlu0 %1154, %v1088
      %v1156 = vpop.permute.xlu0 %1155
      %1157 = vset.pattern.permute.xlu0 0
      %1158 = vperm.xlu0 %1157, %v1117
      %v1159 = vpop.permute.xlu0 %1158
      %1160 = vset.pattern.permute.xlu0 0
      %1161 = vperm.xlu0 %1160, %v1132
      %v1162 = vpop.permute.xlu0 %1161
      %vm1163 = vcmp.eq.s32.totalorder %v915, %v1135
      %vm1164 = vcmp.eq.s32.totalorder %v915, %v1138
      %vm1165 = vcmp.eq.s32.totalorder %v915, %v1141
      %vm1166 = vcmp.eq.s32.totalorder %v915, %v1144
      %vm1167 = vcmp.eq.s32.totalorder %v915, %v1147
      %vm1168 = vcmp.eq.s32.totalorder %v915, %v1150
      %vm1169 = vcmp.eq.s32.totalorder %v915, %v1153
      %vm1170 = vcmp.eq.s32.totalorder %v915, %v1156
      %vm1171 = vcmp.eq.s32.totalorder %v915, %v1159
      %vm1172 = vcmp.eq.s32.totalorder %v915, %v1162
      %v1173 = vsel %vm1163, 1, 0
      %v1174 = vsel %vm1164, 1, 0
      %v1175 = vsel %vm1165, 1, 0
      %v1176 = vsel %vm1166, 1, 0
      %v1177 = vsel %vm1167, 1, 0
      %v1178 = vsel %vm1168, 1, 0
      %v1179 = vsel %vm1169, 1, 0
      %v1180 = vsel %vm1170, 1, 0
      %v1181 = vsel %vm1171, 1, 0
      %v1182 = vsel %vm1172, 1, 0
      %v1183 = vcvt.s32.f32 %v1173
      %v1184 = vcvt.s32.f32 %v1174
      %v1185 = vcvt.s32.f32 %v1175
      %v1186 = vcvt.s32.f32 %v1176
      %v1187 = vcvt.s32.f32 %v1177
      %v1188 = vcvt.s32.f32 %v1178
      %v1189 = vcvt.s32.f32 %v1179
      %v1190 = vcvt.s32.f32 %v1180
      %v1191 = vcvt.s32.f32 %v1181
      %v1192 = vcvt.s32.f32 %v1182
      %v1193 = vpack.c.bf16 %v1184, %v1183
      %v1194 = vpack.c.bf16 %v1186, %v1185
      %v1195 = vpack.c.bf16 %v1188, %v1187
      %v1196 = vpack.c.bf16 %v1190, %v1189
      %v1197 = vpack.c.bf16 %v1192, %v1191
      %v1198 = vpack.c.bf16 %v867, %v863
      %v1199 = vpack.c.bf16 %v869, %v865
      %v1201 = vsel %vm916, %v1193, 0
      %v1204 = vsel %vm916, %v1194, 0
      %v1207 = vsel %vm916, %v1195, 0
      %v1210 = vsel %vm916, %v1196, 0
      %v1213 = vsel %vm916, %v1197, 0
      %1215 = vmatprep.subr.bf16.mxu0 0
      %1216 = vmatpush1.bf16.msra.mxu0 0
      %1217 = vmatprep.subr.bf16.mxu0 0
      %1218 = vmatpush1.bf16.msra.mxu0 0
      %1219 = vmatprep.subr.bf16.mxu0 0
      %1220 = vmatpush1.bf16.msra.mxu0 0
      %1221 = vmatprep.subr.bf16.mxu0 0
      %1222 = vmatpush1.bf16.msra.mxu0 0
      %1223 = vmatprep.subr.bf16.mxu0 0
      %1224 = vmatpush1.bf16.msra.mxu0 0
      %1225 = vmatprep.subr.bf16.mxu0 0
      %1226 = vmatpush1.bf16.msra.mxu0 0
      %1227 = vmatprep.subr.bf16.mxu0 0
      %1228 = vmatpush1.bf16.msra.mxu0 0
      %1229 = vmatprep.subr.bf16.mxu0 %v1199
      %1230 = vmatpush1.bf16.msra.mxu0 %v1198
      %1231 = vmatprep.subr.bf16.mxu0 0
      %1232 = vmatpush2.bf16.msra.mxu0 0
      %1233 = vmatprep.subr.bf16.mxu0 0
      %1234 = vmatpush2.bf16.msra.mxu0 0
      %1235 = vmatprep.subr.bf16.mxu0 0
      %1236 = vmatpush2.bf16.msra.mxu0 0
      %1237 = vmatprep.subr.bf16.mxu0 0
      %1238 = vmatpush2.bf16.msra.mxu0 0
      %1239 = vmatprep.subr.bf16.mxu0 0
      %1240 = vmatpush2.bf16.msra.mxu0 0
      %1241 = vmatprep.subr.bf16.mxu0 0
      %1242 = vmatpush2.bf16.msra.mxu0 0
      %1243 = vmatprep.subr.bf16.mxu0 0
      %1244 = vmatpush2.bf16.msra.mxu0 0
      %1245 = vmatprep.subr.bf16.mxu0 0
      %1246 = vmatpush2.bf16.msra.mxu0 0
      %1247 = vmatprep.mubr.bf16.mxu0 0
      %1248 = vmatmul.mubr.bf16.gmra.mxu0 %v1201
      %v1249 = vpop.f32.mrf.mxu0
      %v1250 = vadd.f32 %v906, %v1249
      %v1251 = vpop.f32.mrf.mxu0
      %v1252 = vadd.f32 %v908, %v1251
      %v1253 = vpop.f32.mrf.mxu0
      %v1254 = vadd.f32 %v910, %v1253
      %v1255 = vpop.f32.mrf.mxu0
      %v1256 = vadd.f32 %v912, %v1255
      %1257 = vmatprep.mubr.bf16.mxu0 0
      %1258 = vmatmul.mubr.bf16.gmra.mxu0 %v1204
      %v1259 = vpop.f32.mrf.mxu0
      %v1260 = vadd.f32 %v906, %v1259
      %v1261 = vpop.f32.mrf.mxu0
      %v1262 = vadd.f32 %v908, %v1261
      %v1263 = vpop.f32.mrf.mxu0
      %v1264 = vadd.f32 %v910, %v1263
      %v1265 = vpop.f32.mrf.mxu0
      %v1266 = vadd.f32 %v912, %v1265
      %1267 = vmatprep.mubr.bf16.mxu0 0
      %1268 = vmatmul.mubr.bf16.gmra.mxu0 %v1207
      %v1269 = vpop.f32.mrf.mxu0
      %v1270 = vadd.f32 %v906, %v1269
      %v1271 = vpop.f32.mrf.mxu0
      %v1272 = vadd.f32 %v908, %v1271
      %v1273 = vpop.f32.mrf.mxu0
      %v1274 = vadd.f32 %v910, %v1273
      %v1275 = vpop.f32.mrf.mxu0
      %v1276 = vadd.f32 %v912, %v1275
      %1277 = vmatprep.mubr.bf16.mxu0 0
      %1278 = vmatmul.mubr.bf16.gmra.mxu0 %v1210
      %v1279 = vpop.f32.mrf.mxu0
      %v1280 = vadd.f32 %v906, %v1279
      %v1281 = vpop.f32.mrf.mxu0
      %v1282 = vadd.f32 %v908, %v1281
      %v1283 = vpop.f32.mrf.mxu0
      %v1284 = vadd.f32 %v910, %v1283
      %v1285 = vpop.f32.mrf.mxu0
      %v1286 = vadd.f32 %v912, %v1285
      %1287 = vmatprep.mubr.bf16.mxu0 0
      %1288 = vmatmul.mubr.bf16.gmra.mxu0 %v1213
      %v1289 = vpop.f32.mrf.mxu0
      %v1290 = vadd.f32 %v906, %v1289
      %v1291 = vpop.f32.mrf.mxu0
      %v1292 = vadd.f32 %v908, %v1291
      %v1293 = vpop.f32.mrf.mxu0
      %v1294 = vadd.f32 %v910, %v1293
      %v1295 = vpop.f32.mrf.mxu0
      %v1296 = vadd.f32 %v912, %v1295
      %1297 = vdwg.mxu0
      %v1298 = vadd.f32 %v1250, %v1254
      %v1299 = vadd.f32 %v1298, %v1260
      %v1300 = vadd.f32 %v1299, %v1264
      %v1301 = vadd.f32 %v1300, %v1270
      %v1302 = vadd.f32 %v1301, %v1274
      %v1303 = vadd.f32 %v1302, %v1280
      %v1304 = vadd.f32 %v1303, %v1284
      %v1305 = vadd.f32 %v1304, %v1290
      %v1306 = vadd.f32 %v1305, %v1294
      %v1307 = vrot.slane %v1306, 4
      %v1308 = vadd.f32 %v1306, %v1307
      %v1309 = vrot.slane %v1308, 2
      %v1310 = vadd.f32 %v1308, %v1309
      %v1311 = vrot.slane %v1310, 1
      %v1312 = vadd.f32 %v1310, %v1311
      %v1313 = vadd.f32 %v1252, %v1256
      %v1314 = vadd.f32 %v1313, %v1262
      %v1315 = vadd.f32 %v1314, %v1266
      %v1316 = vadd.f32 %v1315, %v1272
      %v1317 = vadd.f32 %v1316, %v1276
      %v1318 = vadd.f32 %v1317, %v1282
      %v1319 = vadd.f32 %v1318, %v1286
      %v1320 = vadd.f32 %v1319, %v1292
      %v1321 = vadd.f32 %v1320, %v1296
      %v1322 = vrot.slane %v1321, 4
      %v1323 = vadd.f32 %v1321, %v1322
      %v1324 = vrot.slane %v1323, 2
      %v1325 = vadd.f32 %v1323, %v1324
      %v1326 = vrot.slane %v1325, 1
      %v1327 = vadd.f32 %v1325, %v1326
      %v1330 = vcombine.low %v1312, %v1327
      %v1332 = vunpack.c.l.s4 1966171168
      %v1333 = vunpack.c.0.s8 %v1332
      %v1334 = vlaneseq
      %v1335 = vshrl.u32 %v1334, 7
      %v1336 = vsub.s32 %v1333, %v1335
      %v1337 = vrot.slane %v1330, %v1336
      %v1339 = vunpack.c.l.s4 1966171168
      %v1340 = vunpack.c.0.s8 %v1339
      %v1341 = vlaneseq
      %v1342 = vshrl.u32 %v1341, 7
      %v1343 = vsub.s32 %v1340, %v1342
      %v1344 = vrot.slane %v1337, %v1343
      %v1346 = vlaneseq
      %vm1347 = vcmp.ge.s32.totalorder %v1346, 0
      %vm1348 = vcmp.lt.s32.totalorder %v1346, 256
      %vm1349 = vmand %vm1347, %vm1348
      %1350 = vst.msk [vmem:[%s237] ss:$2 sm:$0x3] %vm1349, %v1344
      %v1351 = vmul.f32 %v1250, %v1250
      %v1352 = vmul.f32 %v1252, %v1252
      %v1353 = vmul.f32 %v1254, %v1254
      %v1354 = vmul.f32 %v1256, %v1256
      %v1355 = vmul.f32 %v1260, %v1260
      %v1356 = vmul.f32 %v1262, %v1262
      %v1357 = vmul.f32 %v1264, %v1264
      %v1358 = vmul.f32 %v1266, %v1266
      %v1359 = vmul.f32 %v1270, %v1270
      %v1360 = vmul.f32 %v1272, %v1272
      %v1361 = vmul.f32 %v1274, %v1274
      %v1362 = vmul.f32 %v1276, %v1276
      %v1363 = vmul.f32 %v1280, %v1280
      %v1364 = vmul.f32 %v1282, %v1282
      %v1365 = vmul.f32 %v1284, %v1284
      %v1366 = vmul.f32 %v1286, %v1286
      %v1367 = vmul.f32 %v1290, %v1290
      %v1368 = vmul.f32 %v1292, %v1292
      %v1369 = vmul.f32 %v1294, %v1294
      %v1370 = vmul.f32 %v1296, %v1296
      %v1371 = vadd.f32 %v1351, %v1353
      %v1372 = vadd.f32 %v1371, %v1355
      %v1373 = vadd.f32 %v1372, %v1357
      %v1374 = vadd.f32 %v1373, %v1359
      %v1375 = vadd.f32 %v1374, %v1361
      %v1376 = vadd.f32 %v1375, %v1363
      %v1377 = vadd.f32 %v1376, %v1365
      %v1378 = vadd.f32 %v1377, %v1367
      %v1379 = vadd.f32 %v1378, %v1369
      %v1380 = vrot.slane %v1379, 4
      %v1381 = vadd.f32 %v1379, %v1380
      %v1382 = vrot.slane %v1381, 2
      %v1383 = vadd.f32 %v1381, %v1382
      %v1384 = vrot.slane %v1383, 1
      %v1385 = vadd.f32 %v1383, %v1384
      %v1386 = vadd.f32 %v1352, %v1354
      %v1387 = vadd.f32 %v1386, %v1356
      %v1388 = vadd.f32 %v1387, %v1358
      %v1389 = vadd.f32 %v1388, %v1360
      %v1390 = vadd.f32 %v1389, %v1362
      %v1391 = vadd.f32 %v1390, %v1364
      %v1392 = vadd.f32 %v1391, %v1366
      %v1393 = vadd.f32 %v1392, %v1368
      %v1394 = vadd.f32 %v1393, %v1370
      %v1395 = vrot.slane %v1394, 4
      %v1396 = vadd.f32 %v1394, %v1395
      %v1397 = vrot.slane %v1396, 2
      %v1398 = vadd.f32 %v1396, %v1397
      %v1399 = vrot.slane %v1398, 1
      %v1400 = vadd.f32 %v1398, %v1399
      %v1403 = vcombine.low %v1385, %v1400
      %v1405 = vunpack.c.l.s4 1966171168
      %v1406 = vunpack.c.0.s8 %v1405
      %v1407 = vlaneseq
      %v1408 = vshrl.u32 %v1407, 7
      %v1409 = vsub.s32 %v1406, %v1408
      %v1410 = vrot.slane %v1403, %v1409
      %v1412 = vunpack.c.l.s4 1966171168
      %v1413 = vunpack.c.0.s8 %v1412
      %v1414 = vlaneseq
      %v1415 = vshrl.u32 %v1414, 7
      %v1416 = vsub.s32 %v1413, %v1415
      %v1417 = vrot.slane %v1410, %v1416
      %s1419 = scalar_lea.vmem %s237, 1
      %1420 = vst.msk [vmem:[%s1419] ss:$2 sm:$0x3] %vm1349, %v1417
      %v1421 = vmax.f32 %v1250, %v1260
      %v1422 = vmax.f32 %v1252, %v1262
      %v1423 = vmax.f32 %v1254, %v1264
      %v1424 = vmax.f32 %v1256, %v1266
      %v1425 = vmin.f32 %v1250, %v1260
      %v1426 = vmin.f32 %v1252, %v1262
      %v1427 = vmin.f32 %v1254, %v1264
      %v1428 = vmin.f32 %v1256, %v1266
      %v1429 = vmax.f32 %v1421, %v1270
      %v1430 = vmax.f32 %v1422, %v1272
      %v1431 = vmax.f32 %v1423, %v1274
      %v1432 = vmax.f32 %v1424, %v1276
      %v1433 = vmin.f32 %v1425, %v1270
      %v1434 = vmin.f32 %v1426, %v1272
      %v1435 = vmin.f32 %v1427, %v1274
      %v1436 = vmin.f32 %v1428, %v1276
      %v1437 = vmax.f32 %v1429, %v1280
      %v1438 = vmax.f32 %v1430, %v1282
      %v1439 = vmax.f32 %v1431, %v1284
      %v1440 = vmax.f32 %v1432, %v1286
      %v1441 = vmin.f32 %v1433, %v1280
      %v1442 = vmin.f32 %v1434, %v1282
      %v1443 = vmin.f32 %v1435, %v1284
      %v1444 = vmin.f32 %v1436, %v1286
      %v1445 = vmax.f32 %v1437, %v1290
      %v1446 = vmax.f32 %v1438, %v1292
      %v1447 = vmax.f32 %v1439, %v1294
      %v1448 = vmax.f32 %v1440, %v1296
      %v1449 = vmin.f32 %v1441, %v1290
      %v1450 = vmin.f32 %v1442, %v1292
      %v1451 = vmin.f32 %v1443, %v1294
      %v1452 = vmin.f32 %v1444, %v1296
      %v1453 = vpack.c.bf16 %v1447, %v1445
      %v1454 = vpack.c.bf16 %v1448, %v1446
      %v1457 = vunpack.c.l.b16 %v1453
      %v1458 = vunpack.c.l.b16 %v1454
      %v1459 = vunpack.c.h.b16 %v1453
      %v1460 = vunpack.c.h.b16 %v1454
      %v1461 = vpack.c.b16 %v1458, %v1457
      %v1462 = vpack.c.b16 %v1460, %v1459
      %1465 = vst [vmem:[%s232] sm:$0xff] %v1461
      %1466 = vst [vmem:[%s232 + $0x8] sm:$0xff] %v1462
      %v1467 = vpack.c.bf16 %v1451, %v1449
      %v1468 = vpack.c.bf16 %v1452, %v1450
      %v1471 = vunpack.c.l.b16 %v1467
      %v1472 = vunpack.c.l.b16 %v1468
      %v1473 = vunpack.c.h.b16 %v1467
      %v1474 = vunpack.c.h.b16 %v1468
      %v1475 = vpack.c.b16 %v1472, %v1471
      %v1476 = vpack.c.b16 %v1474, %v1473
      %1479 = vst [vmem:[%s232 + $0x10] sm:$0xff] %v1475
      %1480 = vst [vmem:[%s232 + $0x18] sm:$0xff] %v1476
      %p1481 = scmp.lt.s32.totalorder %s17, 1
      %s1482 = scalar_select %p1481, %s17, 1
      %s1483 = smul.addr %s1482, 8
      %s1484 = smul.addr %s1483, 4
      %s1485 = scalar_lea.vmem %s4, %s1484
      %p1486 = scmp.lt.s32.totalorder %s17, 1
      %s1487 = scalar_select %p1486, %s17, 1
      %s1488 = smul.addr %s1487, 2
      %s1489 = smul.addr %s1488, 2
      %s1490 = scalar_lea.vmem %s5, %s1489
      // Predicated region
      $region37: #{motion_detect_module.6} parent=35 // pred_check
        %p1491 = pneg %p124
      $region38: #{motion_detect_module.6} parent=35 // pred_check_branch
        %1493 = sbr.rel (%p1491) target = $region40
      $region39: #{motion_detect_module.6} parent=35 // pred_region
        _
      $region40: #{motion_detect_module.6} parent=35 // pred_fallthru
        _
      // Predicated region
      $region41: #{motion_detect_module.6} parent=35 // pred_check
        %p1494 = pneg %p150
      $region42: #{motion_detect_module.6} parent=35 // pred_check_branch
        %1496 = sbr.rel (%p1494) target = $region44
      $region43: #{motion_detect_module.6} parent=35 // pred_region
        _
      $region44: #{motion_detect_module.6} parent=35 // pred_fallthru
        _
    $region36: #{motion_detect_module.6} parent=5 // pred_fallthru
      _
    %p1497 = scmp.le.s32.totalorder 2, %s12
    // Predicated region
    $region45: #{motion_detect_module.6} parent=5 // pred_check
      %p1498 = pneg %p1497
    $region46: #{motion_detect_module.6} parent=5 // pred_check_branch
      %1500 = sbr.rel (%p1498) target = $region48
    $region47: #{motion_detect_module.6} parent=5 // pred_region
      %s1501 = ssub.s32 %s12, 2
      // Predicated region
      $region49: #{motion_detect_module.6} parent=47 // pred_check
        %p1502 = pneg %p130
      $region50: #{motion_detect_module.6} parent=47 // pred_check_branch
        %1504 = sbr.rel (%p1502) target = $region52
      $region51: #{motion_detect_module.6} parent=47 // pred_region
        %p1505 = scmp.lt.s32.totalorder %s18, 1
        %s1506 = scalar_select %p1505, %s18, 1
        %s1507 = smul.addr %s1506, 8
        %s1508 = smul.addr %s1507, 4
        %s1509 = scalar_lea.vmem %s4, %s1508
      $region52: #{motion_detect_module.6} parent=47 // pred_fallthru
        _
      // Predicated region
      $region53: #{motion_detect_module.6} parent=47 // pred_check
        %p1510 = pneg %p156
      $region54: #{motion_detect_module.6} parent=47 // pred_check_branch
        %1512 = sbr.rel (%p1510) target = $region56
      $region55: #{motion_detect_module.6} parent=47 // pred_region
        %p1513 = scmp.lt.s32.totalorder %s18, 1
        %s1514 = scalar_select %p1513, %s18, 1
        %s1515 = smul.addr %s1514, 2
        %s1516 = smul.addr %s1515, 2
        %s1517 = scalar_lea.vmem %s5, %s1516
      $region56: #{motion_detect_module.6} parent=47 // pred_fallthru
        _
    $region48: #{motion_detect_module.6} parent=5 // pred_fallthru
      _
  $region6: #{motion_detect_module.6} parent=0 // loop_footer
    %s16 = sadd.s32 1, %s12
  $region7: #{motion_detect_module.6} parent=0 // loop_footer_branch
    %11 = sbr.rel target = $region3
  $region8: #{motion_detect_module.6} parent=0 // loop_exit
    _

// kernel: motion_detect_module.7
$region0: #{motion_detect_module.7}
  #allocation0 [shape = 'u32[]', space=smem, size = 0x4, offset = 0x4, fixed_abs, tag = 'smem constant byte address 0x4 - core index']
  #allocation1 [shape = 'u32[144,128]{1,0:T(1,128)}', space=vmem, size = 0x12000, scoped, tag = 'internal scratch']
  %s0 = inlined_call_operand.vmem [shape: bf16[2,32,256], index: 0, kind: input, shape index: {}]
  %s1 = inlined_call_operand.vmem [shape: f32[1,256], index: 1, kind: input, shape index: {}]
  %s2 = inlined_call_operand.vmem [shape: f32[1,256], index: 2, kind: input, shape index: {}]
  %s3 = inlined_call_operand.vmem [shape: bf16[256,512], index: 3, kind: input, shape index: {}]
  %s4 = inlined_call_operand.vmem [shape: f32[1,512], index: 4, kind: input, shape index: {}]
  %s5 = inlined_call_operand.vmem [shape: f32[2,4,512], index: 5, kind: output, shape index: {}]
  %s6 = sld [smem:[#allocation0]]
  $region53: #{motion_detect_module.7} parent=0
    _
  %s8 = ssub.s32 1, %s6
  %s9 = scalar_select 0, %s8, %s6
  loop: start=0, step=1, limit=4
  $region2: #{motion_detect_module.7} parent=0 // loop_pre_header
    _
  $region3: #{motion_detect_module.7} parent=0 // loop_header
    %s11 = sphi 0, %s15
    %p12 = scmp.ge.s32.totalorder %s11, 4
    %s21 = sphi 0, %s23
    %s24 = sphi 0, %s21
    %s25 = sphi 0, %s24
    %s41 = sphi 0, %s25
    %s45 = sphi 0, %s45
    %s47 = sphi 0, %s45
    %s48 = sphi 0, %s47
    %s62 = sphi 0, %s48
    %s66 = sphi 0, %s66
    %s68 = sphi 0, %s66
    %s69 = sphi 0, %s68
    %s83 = sphi 0, %s69
    %s87 = sphi 0, %s87
    %s89 = sphi 0, %s87
    %s90 = sphi 0, %s89
    %s104 = sphi 0, %s90
    %s108 = sphi 0, %s108
    %s110 = sphi 0, %s108
    %s111 = sphi 0, %s110
    %s125 = sphi 0, %s111
    %s131 = sphi 0, %s133
    %s134 = sphi 0, %s131
    %s135 = sphi 0, %s134
    %s151 = sphi 0, %s135
  $region4: #{motion_detect_module.7} parent=0 // loop_header_branch
    %14 = sbr.rel (%p12) target = $region8
  $region5: #{motion_detect_module.7} parent=0 // loop_body
    %s16 = ssub.s32 %s11, 1
    %s17 = ssub.s32 %s11, 2
    %s18 = sadd.s32 %s11, 1
    %s19 = ssub.s32 %s11, %s18
    %p20 = scmp.eq.s32.totalorder %s19, 0
    %s22 = sadd.s32 %s21, 1
    %s23 = scalar_select %p20, %s21, %s22
    %p26 = pneg %p20
    %p27 = scmp.eq.s32.totalorder %s11, 1
    %p28 = por %p26, %p27
    %p29 = scmp.ne.s32.totalorder %s21, %s24
    %p30 = scmp.eq.s32.totalorder %s11, 0
    %p31 = por %p29, %p30
    %p32 = scmp.ne.s32.totalorder %s21, %s24
    %p33 = scmp.eq.s32.totalorder %s16, 1
    %p34 = por %p32, %p33
    %p35 = scmp.ne.s32.totalorder %s24, %s25
    %p36 = scmp.eq.s32.totalorder %s16, 0
    %p37 = por %p35, %p36
    %p38 = scmp.ne.s32.totalorder %s24, %s25
    %p39 = scmp.eq.s32.totalorder %s17, 1
    %p40 = por %p38, %p39
    %p42 = scmp.ne.s32.totalorder %s25, %s41
    %p43 = scmp.eq.s32.totalorder %s17, 0
    %p44 = por %p42, %p43
    %s46 = sadd.s32 %s45, 1
    %p49 = scmp.eq.s32.totalorder %s11, 1
    %p50 = scmp.ne.s32.totalorder %s45, %s47
    %p51 = scmp.eq.s32.totalorder %s11, 0
    %p52 = por %p50, %p51
    %p53 = scmp.ne.s32.totalorder %s45, %s47
    %p54 = scmp.eq.s32.totalorder %s16, 1
    %p55 = por %p53, %p54
    %p56 = scmp.ne.s32.totalorder %s47, %s48
    %p57 = scmp.eq.s32.totalorder %s16, 0
    %p58 = por %p56, %p57
    %p59 = scmp.ne.s32.totalorder %s47, %s48
    %p60 = scmp.eq.s32.totalorder %s17, 1
    %p61 = por %p59, %p60
    %p63 = scmp.ne.s32.totalorder %s48, %s62
    %p64 = scmp.eq.s32.totalorder %s17, 0
    %p65 = por %p63, %p64
    %s67 = sadd.s32 %s66, 1
    %p70 = scmp.eq.s32.totalorder %s11, 1
    %p71 = scmp.ne.s32.totalorder %s66, %s68
    %p72 = scmp.eq.s32.totalorder %s11, 0
    %p73 = por %p71, %p72
    %p74 = scmp.ne.s32.totalorder %s66, %s68
    %p75 = scmp.eq.s32.totalorder %s16, 1
    %p76 = por %p74, %p75
    %p77 = scmp.ne.s32.totalorder %s68, %s69
    %p78 = scmp.eq.s32.totalorder %s16, 0
    %p79 = por %p77, %p78
    %p80 = scmp.ne.s32.totalorder %s68, %s69
    %p81 = scmp.eq.s32.totalorder %s17, 1
    %p82 = por %p80, %p81
    %p84 = scmp.ne.s32.totalorder %s69, %s83
    %p85 = scmp.eq.s32.totalorder %s17, 0
    %p86 = por %p84, %p85
    %s88 = sadd.s32 %s87, 1
    %p91 = scmp.eq.s32.totalorder %s11, 1
    %p92 = scmp.ne.s32.totalorder %s87, %s89
    %p93 = scmp.eq.s32.totalorder %s11, 0
    %p94 = por %p92, %p93
    %p95 = scmp.ne.s32.totalorder %s87, %s89
    %p96 = scmp.eq.s32.totalorder %s16, 1
    %p97 = por %p95, %p96
    %p98 = scmp.ne.s32.totalorder %s89, %s90
    %p99 = scmp.eq.s32.totalorder %s16, 0
    %p100 = por %p98, %p99
    %p101 = scmp.ne.s32.totalorder %s89, %s90
    %p102 = scmp.eq.s32.totalorder %s17, 1
    %p103 = por %p101, %p102
    %p105 = scmp.ne.s32.totalorder %s90, %s104
    %p106 = scmp.eq.s32.totalorder %s17, 0
    %p107 = por %p105, %p106
    %s109 = sadd.s32 %s108, 1
    %p112 = scmp.eq.s32.totalorder %s11, 1
    %p113 = scmp.ne.s32.totalorder %s108, %s110
    %p114 = scmp.eq.s32.totalorder %s11, 0
    %p115 = por %p113, %p114
    %p116 = scmp.ne.s32.totalorder %s108, %s110
    %p117 = scmp.eq.s32.totalorder %s16, 1
    %p118 = por %p116, %p117
    %p119 = scmp.ne.s32.totalorder %s110, %s111
    %p120 = scmp.eq.s32.totalorder %s16, 0
    %p121 = por %p119, %p120
    %p122 = scmp.ne.s32.totalorder %s110, %s111
    %p123 = scmp.eq.s32.totalorder %s17, 1
    %p124 = por %p122, %p123
    %p126 = scmp.ne.s32.totalorder %s111, %s125
    %p127 = scmp.eq.s32.totalorder %s17, 0
    %p128 = por %p126, %p127
    %s129 = ssub.s32 %s11, %s18
    %p130 = scmp.eq.s32.totalorder %s129, 0
    %s132 = sadd.s32 %s131, 1
    %s133 = scalar_select %p130, %s131, %s132
    %p136 = pneg %p130
    %p137 = scmp.eq.s32.totalorder %s11, 1
    %p138 = por %p136, %p137
    %p139 = scmp.ne.s32.totalorder %s131, %s134
    %p140 = scmp.eq.s32.totalorder %s11, 0
    %p141 = por %p139, %p140
    %p142 = scmp.ne.s32.totalorder %s131, %s134
    %p143 = scmp.eq.s32.totalorder %s16, 1
    %p144 = por %p142, %p143
    %p145 = scmp.ne.s32.totalorder %s134, %s135
    %p146 = scmp.eq.s32.totalorder %s16, 0
    %p147 = por %p145, %p146
    %p148 = scmp.ne.s32.totalorder %s134, %s135
    %p149 = scmp.eq.s32.totalorder %s17, 1
    %p150 = por %p148, %p149
    %p152 = scmp.ne.s32.totalorder %s135, %s151
    %p153 = scmp.eq.s32.totalorder %s17, 0
    %p154 = por %p152, %p153
    %p155 = scmp.le.s32.totalorder 1, %s11
    %p156 = scmp.lt.s32.totalorder %s11, 3
    %p157 = pnand %p155, %p156
    %p158 = pneg %p157
    // Predicated region
    $region9: #{motion_detect_module.7} parent=5 // pred_check
      _
    $region10: #{motion_detect_module.7} parent=5 // pred_check_branch
      %160 = sbr.rel (%p157) target = $region12
    $region11: #{motion_detect_module.7} parent=5 // pred_region
      %s161 = ssub.s32 %s11, 1
      // Predicated region
      $region13: #{motion_detect_module.7} parent=11 // pred_check
        %p162 = pneg %p58
      $region14: #{motion_detect_module.7} parent=11 // pred_check_branch
        %164 = sbr.rel (%p162) target = $region16
      $region15: #{motion_detect_module.7} parent=11 // pred_region
        _
      $region16: #{motion_detect_module.7} parent=11 // pred_fallthru
        _
      // Predicated region
      $region17: #{motion_detect_module.7} parent=11 // pred_check
        %p165 = pneg %p79
      $region18: #{motion_detect_module.7} parent=11 // pred_check_branch
        %167 = sbr.rel (%p165) target = $region20
      $region19: #{motion_detect_module.7} parent=11 // pred_region
        _
      $region20: #{motion_detect_module.7} parent=11 // pred_fallthru
        _
      // Predicated region
      $region21: #{motion_detect_module.7} parent=11 // pred_check
        %p168 = pneg %p100
      $region22: #{motion_detect_module.7} parent=11 // pred_check_branch
        %170 = sbr.rel (%p168) target = $region24
      $region23: #{motion_detect_module.7} parent=11 // pred_region
        _
      $region24: #{motion_detect_module.7} parent=11 // pred_fallthru
        _
      // Predicated region
      $region25: #{motion_detect_module.7} parent=11 // pred_check
        %p171 = pneg %p121
      $region26: #{motion_detect_module.7} parent=11 // pred_check_branch
        %173 = sbr.rel (%p171) target = $region28
      $region27: #{motion_detect_module.7} parent=11 // pred_region
        _
      $region28: #{motion_detect_module.7} parent=11 // pred_fallthru
        _
    $region12: #{motion_detect_module.7} parent=5 // pred_fallthru
      _
    %p174 = scmp.lt.s32.totalorder %s11, 2
    // Predicated region
    $region29: #{motion_detect_module.7} parent=5 // pred_check
      %p175 = pneg %p174
    $region30: #{motion_detect_module.7} parent=5 // pred_check_branch
      %177 = sbr.rel (%p175) target = $region32
    $region31: #{motion_detect_module.7} parent=5 // pred_region
      // Predicated region
      $region33: #{motion_detect_module.7} parent=31 // pred_check
        %p178 = pneg %p31
      $region34: #{motion_detect_module.7} parent=31 // pred_check_branch
        %180 = sbr.rel (%p178) target = $region36
      $region35: #{motion_detect_module.7} parent=31 // pred_region
        %p181 = scmp.lt.s32.totalorder %s11, 1
        %s182 = scalar_select %p181, %s11, 1
        %s183 = smul.addr %s182, 8
        %s184 = smul.addr %s183, 4
        %s185 = scalar_lea.vmem %s0, %s184
      $region36: #{motion_detect_module.7} parent=31 // pred_fallthru
        _
    $region32: #{motion_detect_module.7} parent=5 // pred_fallthru
      _
    %p186 = scmp.le.s32.totalorder 1, %s11
    %p187 = scmp.lt.s32.totalorder %s11, 3
    %p188 = pnand %p186, %p187
    %p189 = pneg %p188
    // Predicated region
    $region37: #{motion_detect_module.7} parent=5 // pred_check
      _
    $region38: #{motion_detect_module.7} parent=5 // pred_check_branch
      %191 = sbr.rel (%p188) target = $region40
    $region39: #{motion_detect_module.7} parent=5 // pred_region
      %s192 = ssub.s32 %s11, 1
      %p193 = scmp.lt.s32.totalorder %s16, 1
      %s194 = scalar_select %p193, %s16, 1
      %s195 = smul.addr %s194, 8
      %s196 = smul.addr %s195, 4
      %s197 = scalar_lea.vmem %s0, %s196
      %p198 = pneg %p37
      %p199 = pneg %p34
      %p200 = pneg %p58
      %p201 = pneg %p55
      %p202 = pneg %p79
      %p203 = pneg %p76
      %p204 = pneg %p100
      %p205 = pneg %p97
      %p206 = pneg %p121
      %p207 = pneg %p118
      %p208 = pneg %p147
      %p209 = pneg %p144
      %p210 = scmp.lt.s32.totalorder %s16, 1
      %s211 = scalar_select %p210, %s16, 1
      %s212 = smul.addr %s211, 4
      %s213 = smul.addr %s212, 4
      %s214 = scalar_lea.vmem %s5, %s213
      %p215 = scmp.lt.s32.totalorder %s16, 1
      %s216 = scalar_select %p215, %s16, 1
      %s217 = smul.addr %s216, 8
      %s218 = smul.addr %s217, 4
      %s219 = scalar_lea.vmem %s0, %s218
      %p220 = scmp.lt.s32.totalorder %s16, 1
      %s221 = scalar_select %p220, %s16, 1
      %s222 = smul.addr %s221, 4
      %s223 = smul.addr %s222, 4
      %s224 = scalar_lea.vmem %s5, %s223
      %v225 = vld [vmem:[%s219] sm:$0xff]
      %v226 = vld [vmem:[%s219 + $0x8] sm:$0xff]
      %v227 = vld [vmem:[%s219 + $0x10] sm:$0xff]
      %v228 = vld [vmem:[%s219 + $0x18] sm:$0xff]
      %v229 = vld [vmem:[%s1] sm:$0x3]
      %v230 = vld [vmem:[%s2] sm:$0x3]
      %vm231 = vcmp.ge.f32.partialorder %v229, 0.0
      %v232 = vunpack.c.l.bf16 %v225
      %v233 = vunpack.c.h.bf16 %v225
      %v234 = vunpack.c.l.bf16 %v226
      %v235 = vunpack.c.h.bf16 %v226
      %v237 = vlaneseq
      %v238 = vshrl.u32 %v237, 7
      %v239 = vsub.s32 0, %v238
      %v240 = vrot.slane %v229, %v239
      %v241 = vlaneseq
      %v242 = vshrl.u32 %v241, 7
      %v243 = vsub.s32 1, %v242
      %v244 = vrot.slane %v229, %v243
      %v247 = vmul.f32 %v240, %v232
      %v248 = vmul.f32 %v244, %v233
      %v249 = vmul.f32 %v240, %v234
      %v250 = vmul.f32 %v244, %v235
      %v251 = vunpack.c.l.bf16 %v227
      %v252 = vunpack.c.h.bf16 %v227
      %v253 = vunpack.c.l.bf16 %v228
      %v254 = vunpack.c.h.bf16 %v228
      %v255 = vmul.f32 %v240, %v251
      %v256 = vmul.f32 %v244, %v252
      %v257 = vmul.f32 %v240, %v253
      %v258 = vmul.f32 %v244, %v254
      %v259 = vsel %vm231, 1, 0
      %v260 = vlaneseq
      %v261 = vshrl.u32 %v260, 7
      %v262 = vsub.s32 0, %v261
      %v263 = vrot.slane %v259, %v262
      %v264 = vlaneseq
      %v265 = vshrl.u32 %v264, 7
      %v266 = vsub.s32 1, %v265
      %v267 = vrot.slane %v259, %v266
      %vm268 = vcmp.eq.s32.totalorder %v263, 1
      %vm269 = vcmp.eq.s32.totalorder %v267, 1
      %v270 = vsel %vm268, %v247, %v255
      %v271 = vsel %vm269, %v248, %v256
      %v272 = vsel %vm268, %v249, %v257
      %v273 = vsel %vm269, %v250, %v258
      %v275 = vlaneseq
      %v276 = vshrl.u32 %v275, 7
      %v277 = vsub.s32 0, %v276
      %v278 = vrot.slane %v230, %v277
      %v279 = vlaneseq
      %v280 = vshrl.u32 %v279, 7
      %v281 = vsub.s32 1, %v280
      %v282 = vrot.slane %v230, %v281
      %v285 = vadd.f32 %v270, %v278
      %v286 = vadd.f32 %v271, %v282
      %v287 = vadd.f32 %v272, %v278
      %v288 = vadd.f32 %v273, %v282
      %vm289 = vcmp.ge.f32.partialorder %v285, 0.0
      %vm290 = vcmp.ge.f32.partialorder %v286, 0.0
      %vm291 = vcmp.ge.f32.partialorder %v287, 0.0
      %vm292 = vcmp.ge.f32.partialorder %v288, 0.0
      %v293 = vmul.f32 %v285, 0.2
      %v294 = vmul.f32 %v286, 0.2
      %v295 = vmul.f32 %v287, 0.2
      %v296 = vmul.f32 %v288, 0.2
      %v297 = vsel %vm289, %v285, %v293
      %v298 = vsel %vm290, %v286, %v294
      %v299 = vsel %vm291, %v287, %v295
      %v300 = vsel %vm292, %v288, %v296
      %v301 = vpack.c.bf16 %v299, %v297
      %v302 = vpack.c.bf16 %v300, %v298
      %v303 = vld [vmem:[%s3] sm:$0xff]
      %v304 = vld [vmem:[%s3 + $0x8] sm:$0xff]
      %v305 = vld [vmem:[%s3 + $0x10] sm:$0xff]
      %v306 = vld [vmem:[%s3 + $0x18] sm:$0xff]
      %v307 = vld [vmem:[%s3 + $0x20] sm:$0xff]
      %v308 = vld [vmem:[%s3 + $0x28] sm:$0xff]
      %v309 = vld [vmem:[%s3 + $0x30] sm:$0xff]
      %v310 = vld [vmem:[%s3 + $0x38] sm:$0xff]
      %v311 = vld [vmem:[%s3 + $0x40] sm:$0xff]
      %v312 = vld [vmem:[%s3 + $0x48] sm:$0xff]
      %v313 = vld [vmem:[%s3 + $0x50] sm:$0xff]
      %v314 = vld [vmem:[%s3 + $0x58] sm:$0xff]
      %v315 = vld [vmem:[%s3 + $0x60] sm:$0xff]
      %v316 = vld [vmem:[%s3 + $0x68] sm:$0xff]
      %v317 = vld [vmem:[%s3 + $0x70] sm:$0xff]
      %v318 = vld [vmem:[%s3 + $0x78] sm:$0xff]
      %v319 = vld [vmem:[%s3 + $0x80] sm:$0xff]
      %v320 = vld [vmem:[%s3 + $0x88] sm:$0xff]
      %v321 = vld [vmem:[%s3 + $0x90] sm:$0xff]
      %v322 = vld [vmem:[%s3 + $0x98] sm:$0xff]
      %v323 = vld [vmem:[%s3 + $0xa0] sm:$0xff]
      %v324 = vld [vmem:[%s3 + $0xa8] sm:$0xff]
      %v325 = vld [vmem:[%s3 + $0xb0] sm:$0xff]
      %v326 = vld [vmem:[%s3 + $0xb8] sm:$0xff]
      %v327 = vld [vmem:[%s3 + $0xc0] sm:$0xff]
      %v328 = vld [vmem:[%s3 + $0xc8] sm:$0xff]
      %v329 = vld [vmem:[%s3 + $0xd0] sm:$0xff]
      %v330 = vld [vmem:[%s3 + $0xd8] sm:$0xff]
      %v331 = vld [vmem:[%s3 + $0xe0] sm:$0xff]
      %v332 = vld [vmem:[%s3 + $0xe8] sm:$0xff]
      %v333 = vld [vmem:[%s3 + $0xf0] sm:$0xff]
      %v334 = vld [vmem:[%s3 + $0xf8] sm:$0xff]
      %v335 = vld [vmem:[%s3 + $0x100] sm:$0xff]
      %v336 = vld [vmem:[%s3 + $0x108] sm:$0xff]
      %v337 = vld [vmem:[%s3 + $0x110] sm:$0xff]
      %v338 = vld [vmem:[%s3 + $0x118] sm:$0xff]
      %v339 = vld [vmem:[%s3 + $0x120] sm:$0xff]
      %v340 = vld [vmem:[%s3 + $0x128] sm:$0xff]
      %v341 = vld [vmem:[%s3 + $0x130] sm:$0xff]
      %v342 = vld [vmem:[%s3 + $0x138] sm:$0xff]
      %v343 = vld [vmem:[%s3 + $0x140] sm:$0xff]
      %v344 = vld [vmem:[%s3 + $0x148] sm:$0xff]
      %v345 = vld [vmem:[%s3 + $0x150] sm:$0xff]
      %v346 = vld [vmem:[%s3 + $0x158] sm:$0xff]
      %v347 = vld [vmem:[%s3 + $0x160] sm:$0xff]
      %v348 = vld [vmem:[%s3 + $0x168] sm:$0xff]
      %v349 = vld [vmem:[%s3 + $0x170] sm:$0xff]
      %v350 = vld [vmem:[%s3 + $0x178] sm:$0xff]
      %v351 = vld [vmem:[%s3 + $0x180] sm:$0xff]
      %v352 = vld [vmem:[%s3 + $0x188] sm:$0xff]
      %v353 = vld [vmem:[%s3 + $0x190] sm:$0xff]
      %v354 = vld [vmem:[%s3 + $0x198] sm:$0xff]
      %v355 = vld [vmem:[%s3 + $0x1a0] sm:$0xff]
      %v356 = vld [vmem:[%s3 + $0x1a8] sm:$0xff]
      %v357 = vld [vmem:[%s3 + $0x1b0] sm:$0xff]
      %v358 = vld [vmem:[%s3 + $0x1b8] sm:$0xff]
      %v359 = vld [vmem:[%s3 + $0x1c0] sm:$0xff]
      %v360 = vld [vmem:[%s3 + $0x1c8] sm:$0xff]
      %v361 = vld [vmem:[%s3 + $0x1d0] sm:$0xff]
      %v362 = vld [vmem:[%s3 + $0x1d8] sm:$0xff]
      %v363 = vld [vmem:[%s3 + $0x1e0] sm:$0xff]
      %v364 = vld [vmem:[%s3 + $0x1e8] sm:$0xff]
      %v365 = vld [vmem:[%s3 + $0x1f0] sm:$0xff]
      %v366 = vld [vmem:[%s3 + $0x1f8] sm:$0xff]
      %v367 = vld [vmem:[%s4] sm:$0xf]
      %v369 = vlaneseq
      %v370 = vshrl.u32 %v369, 7
      %v371 = vsub.s32 0, %v370
      %v372 = vrot.slane %v367, %v371
      %v373 = vlaneseq
      %v374 = vshrl.u32 %v373, 7
      %v375 = vsub.s32 1, %v374
      %v376 = vrot.slane %v367, %v375
      %v377 = vlaneseq
      %v378 = vshrl.u32 %v377, 7
      %v379 = vsub.s32 2, %v378
      %v380 = vrot.slane %v367, %v379
      %v381 = vlaneseq
      %v382 = vshrl.u32 %v381, 7
      %v383 = vsub.s32 3, %v382
      %v384 = vrot.slane %v367, %v383
      %v453 = vunpack.c.l.b16 %v303
      %v454 = vunpack.c.h.b16 %v303
      %v455 = vunpack.c.l.b16 %v304
      %v456 = vunpack.c.h.b16 %v304
      %v457 = vunpack.c.l.b16 %v305
      %v458 = vunpack.c.h.b16 %v305
      %v459 = vunpack.c.l.b16 %v306
      %v460 = vunpack.c.h.b16 %v306
      %v461 = vunpack.c.l.b16 %v307
      %v462 = vunpack.c.h.b16 %v307
      %v463 = vunpack.c.l.b16 %v308
      %v464 = vunpack.c.h.b16 %v308
      %v465 = vunpack.c.l.b16 %v309
      %v466 = vunpack.c.h.b16 %v309
      %v467 = vunpack.c.l.b16 %v310
      %v468 = vunpack.c.h.b16 %v310
      %v469 = vunpack.c.l.b16 %v311
      %v470 = vunpack.c.h.b16 %v311
      %v471 = vunpack.c.l.b16 %v312
      %v472 = vunpack.c.h.b16 %v312
      %v473 = vunpack.c.l.b16 %v313
      %v474 = vunpack.c.h.b16 %v313
      %v475 = vunpack.c.l.b16 %v314
      %v476 = vunpack.c.h.b16 %v314
      %v477 = vunpack.c.l.b16 %v315
      %v478 = vunpack.c.h.b16 %v315
      %v479 = vunpack.c.l.b16 %v316
      %v480 = vunpack.c.h.b16 %v316
      %v481 = vunpack.c.l.b16 %v317
      %v482 = vunpack.c.h.b16 %v317
      %v483 = vunpack.c.l.b16 %v318
      %v484 = vunpack.c.h.b16 %v318
      %v485 = vunpack.c.l.b16 %v319
      %v486 = vunpack.c.h.b16 %v319
      %v487 = vunpack.c.l.b16 %v320
      %v488 = vunpack.c.h.b16 %v320
      %v489 = vunpack.c.l.b16 %v321
      %v490 = vunpack.c.h.b16 %v321
      %v491 = vunpack.c.l.b16 %v322
      %v492 = vunpack.c.h.b16 %v322
      %v493 = vunpack.c.l.b16 %v323
      %v494 = vunpack.c.h.b16 %v323
      %v495 = vunpack.c.l.b16 %v324
      %v496 = vunpack.c.h.b16 %v324
      %v497 = vunpack.c.l.b16 %v325
      %v498 = vunpack.c.h.b16 %v325
      %v499 = vunpack.c.l.b16 %v326
      %v500 = vunpack.c.h.b16 %v326
      %v501 = vunpack.c.l.b16 %v327
      %v502 = vunpack.c.h.b16 %v327
      %v503 = vunpack.c.l.b16 %v328
      %v504 = vunpack.c.h.b16 %v328
      %v505 = vunpack.c.l.b16 %v329
      %v506 = vunpack.c.h.b16 %v329
      %v507 = vunpack.c.l.b16 %v330
      %v508 = vunpack.c.h.b16 %v330
      %v509 = vunpack.c.l.b16 %v331
      %v510 = vunpack.c.h.b16 %v331
      %v511 = vunpack.c.l.b16 %v332
      %v512 = vunpack.c.h.b16 %v332
      %v513 = vunpack.c.l.b16 %v333
      %v514 = vunpack.c.h.b16 %v333
      %v515 = vunpack.c.l.b16 %v334
      %v516 = vunpack.c.h.b16 %v334
      %v517 = vunpack.c.l.b16 %v335
      %v518 = vunpack.c.h.b16 %v335
      %v519 = vunpack.c.l.b16 %v336
      %v520 = vunpack.c.h.b16 %v336
      %v521 = vunpack.c.l.b16 %v337
      %v522 = vunpack.c.h.b16 %v337
      %v523 = vunpack.c.l.b16 %v338
      %v524 = vunpack.c.h.b16 %v338
      %v525 = vunpack.c.l.b16 %v339
      %v526 = vunpack.c.h.b16 %v339
      %v527 = vunpack.c.l.b16 %v340
      %v528 = vunpack.c.h.b16 %v340
      %v529 = vunpack.c.l.b16 %v341
      %v530 = vunpack.c.h.b16 %v341
      %v531 = vunpack.c.l.b16 %v342
      %v532 = vunpack.c.h.b16 %v342
      %v533 = vunpack.c.l.b16 %v343
      %v534 = vunpack.c.h.b16 %v343
      %v535 = vunpack.c.l.b16 %v344
      %v536 = vunpack.c.h.b16 %v344
      %v537 = vunpack.c.l.b16 %v345
      %v538 = vunpack.c.h.b16 %v345
      %v539 = vunpack.c.l.b16 %v346
      %v540 = vunpack.c.h.b16 %v346
      %v541 = vunpack.c.l.b16 %v347
      %v542 = vunpack.c.h.b16 %v347
      %v543 = vunpack.c.l.b16 %v348
      %v544 = vunpack.c.h.b16 %v348
      %v545 = vunpack.c.l.b16 %v349
      %v546 = vunpack.c.h.b16 %v349
      %v547 = vunpack.c.l.b16 %v350
      %v548 = vunpack.c.h.b16 %v350
      %v549 = vunpack.c.l.b16 %v351
      %v550 = vunpack.c.h.b16 %v351
      %v551 = vunpack.c.l.b16 %v352
      %v552 = vunpack.c.h.b16 %v352
      %v553 = vunpack.c.l.b16 %v353
      %v554 = vunpack.c.h.b16 %v353
      %v555 = vunpack.c.l.b16 %v354
      %v556 = vunpack.c.h.b16 %v354
      %v557 = vunpack.c.l.b16 %v355
      %v558 = vunpack.c.h.b16 %v355
      %v559 = vunpack.c.l.b16 %v356
      %v560 = vunpack.c.h.b16 %v356
      %v561 = vunpack.c.l.b16 %v357
      %v562 = vunpack.c.h.b16 %v357
      %v563 = vunpack.c.l.b16 %v358
      %v564 = vunpack.c.h.b16 %v358
      %v565 = vunpack.c.l.b16 %v359
      %v566 = vunpack.c.h.b16 %v359
      %v567 = vunpack.c.l.b16 %v360
      %v568 = vunpack.c.h.b16 %v360
      %v569 = vunpack.c.l.b16 %v361
      %v570 = vunpack.c.h.b16 %v361
      %v571 = vunpack.c.l.b16 %v362
      %v572 = vunpack.c.h.b16 %v362
      %v573 = vunpack.c.l.b16 %v363
      %v574 = vunpack.c.h.b16 %v363
      %v575 = vunpack.c.l.b16 %v364
      %v576 = vunpack.c.h.b16 %v364
      %v577 = vunpack.c.l.b16 %v365
      %v578 = vunpack.c.h.b16 %v365
      %v579 = vunpack.c.l.b16 %v366
      %v580 = vunpack.c.h.b16 %v366
      %v581 = vpack.c.b16 %v457, %v453
      %v582 = vpack.c.b16 %v458, %v454
      %v583 = vpack.c.b16 %v459, %v455
      %v584 = vpack.c.b16 %v460, %v456
      %v585 = vpack.c.b16 %v465, %v461
      %v586 = vpack.c.b16 %v466, %v462
      %v587 = vpack.c.b16 %v467, %v463
      %v588 = vpack.c.b16 %v468, %v464
      %v589 = vpack.c.b16 %v473, %v469
      %v590 = vpack.c.b16 %v474, %v470
      %v591 = vpack.c.b16 %v475, %v471
      %v592 = vpack.c.b16 %v476, %v472
      %v593 = vpack.c.b16 %v481, %v477
      %v594 = vpack.c.b16 %v482, %v478
      %v595 = vpack.c.b16 %v483, %v479
      %v596 = vpack.c.b16 %v484, %v480
      %v597 = vpack.c.b16 %v489, %v485
      %v598 = vpack.c.b16 %v490, %v486
      %v599 = vpack.c.b16 %v491, %v487
      %v600 = vpack.c.b16 %v492, %v488
      %v601 = vpack.c.b16 %v497, %v493
      %v602 = vpack.c.b16 %v498, %v494
      %v603 = vpack.c.b16 %v499, %v495
      %v604 = vpack.c.b16 %v500, %v496
      %v605 = vpack.c.b16 %v505, %v501
      %v606 = vpack.c.b16 %v506, %v502
      %v607 = vpack.c.b16 %v507, %v503
      %v608 = vpack.c.b16 %v508, %v504
      %v609 = vpack.c.b16 %v513, %v509
      %v610 = vpack.c.b16 %v514, %v510
      %v611 = vpack.c.b16 %v515, %v511
      %v612 = vpack.c.b16 %v516, %v512
      %v613 = vpack.c.b16 %v521, %v517
      %v614 = vpack.c.b16 %v522, %v518
      %v615 = vpack.c.b16 %v523, %v519
      %v616 = vpack.c.b16 %v524, %v520
      %v617 = vpack.c.b16 %v529, %v525
      %v618 = vpack.c.b16 %v530, %v526
      %v619 = vpack.c.b16 %v531, %v527
      %v620 = vpack.c.b16 %v532, %v528
      %v621 = vpack.c.b16 %v537, %v533
      %v622 = vpack.c.b16 %v538, %v534
      %v623 = vpack.c.b16 %v539, %v535
      %v624 = vpack.c.b16 %v540, %v536
      %v625 = vpack.c.b16 %v545, %v541
      %v626 = vpack.c.b16 %v546, %v542
      %v627 = vpack.c.b16 %v547, %v543
      %v628 = vpack.c.b16 %v548, %v544
      %v629 = vpack.c.b16 %v553, %v549
      %v630 = vpack.c.b16 %v554, %v550
      %v631 = vpack.c.b16 %v555, %v551
      %v632 = vpack.c.b16 %v556, %v552
      %v633 = vpack.c.b16 %v561, %v557
      %v634 = vpack.c.b16 %v562, %v558
      %v635 = vpack.c.b16 %v563, %v559
      %v636 = vpack.c.b16 %v564, %v560
      %v637 = vpack.c.b16 %v569, %v565
      %v638 = vpack.c.b16 %v570, %v566
      %v639 = vpack.c.b16 %v571, %v567
      %v640 = vpack.c.b16 %v572, %v568
      %v641 = vpack.c.b16 %v577, %v573
      %v642 = vpack.c.b16 %v578, %v574
      %v643 = vpack.c.b16 %v579, %v575
      %v644 = vpack.c.b16 %v580, %v576
      %709 = vmatprep.subr.bf16.mxu0 %v610
      %710 = vmatpush1.bf16.msra.mxu0 %v609
      %711 = vmatprep.subr.bf16.mxu0 %v606
      %712 = vmatpush1.bf16.msra.mxu0 %v605
      %713 = vmatprep.subr.bf16.mxu0 %v602
      %714 = vmatpush1.bf16.msra.mxu0 %v601
      %715 = vmatprep.subr.bf16.mxu0 %v598
      %716 = vmatpush1.bf16.msra.mxu0 %v597
      %717 = vmatprep.subr.bf16.mxu0 %v594
      %718 = vmatpush1.bf16.msra.mxu0 %v593
      %719 = vmatprep.subr.bf16.mxu0 %v590
      %720 = vmatpush1.bf16.msra.mxu0 %v589
      %721 = vmatprep.subr.bf16.mxu0 %v586
      %722 = vmatpush1.bf16.msra.mxu0 %v585
      %723 = vmatprep.subr.bf16.mxu0 %v582
      %724 = vmatpush1.bf16.msra.mxu0 %v581
      %725 = vmatprep.subr.bf16.mxu0 %v642
      %726 = vmatpush2.bf16.msra.mxu0 %v641
      %727 = vmatprep.subr.bf16.mxu0 %v638
      %728 = vmatpush2.bf16.msra.mxu0 %v637
      %729 = vmatprep.subr.bf16.mxu0 %v634
      %730 = vmatpush2.bf16.msra.mxu0 %v633
      %731 = vmatprep.subr.bf16.mxu0 %v630
      %732 = vmatpush2.bf16.msra.mxu0 %v629
      %733 = vmatprep.subr.bf16.mxu0 %v626
      %734 = vmatpush2.bf16.msra.mxu0 %v625
      %735 = vmatprep.subr.bf16.mxu0 %v622
      %736 = vmatpush2.bf16.msra.mxu0 %v621
      %737 = vmatprep.subr.bf16.mxu0 %v618
      %738 = vmatpush2.bf16.msra.mxu0 %v617
      %739 = vmatprep.subr.bf16.mxu0 %v614
      %740 = vmatpush2.bf16.msra.mxu0 %v613
      %741 = vmatprep.mubr.bf16.mxu0 %v302
      %742 = vmatmul.mubr.bf16.gmra.mxu0 %v301
      %v743 = vpop.f32.mrf.mxu0
      %v744 = vadd.f32 %v372, %v743
      %v745 = vpop.f32.mrf.mxu0
      %v746 = vadd.f32 %v376, %v745
      %v747 = vpop.f32.mrf.mxu0
      %v748 = vadd.f32 %v372, %v747
      %v749 = vpop.f32.mrf.mxu0
      %v750 = vadd.f32 %v376, %v749
      %751 = vdwg.mxu0
      %752 = vmatprep.subr.bf16.mxu0 %v612
      %753 = vmatpush1.bf16.msra.mxu0 %v611
      %754 = vmatprep.subr.bf16.mxu0 %v608
      %755 = vmatpush1.bf16.msra.mxu0 %v607
      %756 = vmatprep.subr.bf16.mxu0 %v604
      %757 = vmatpush1.bf16.msra.mxu0 %v603
      %758 = vmatprep.subr.bf16.mxu0 %v600
      %759 = vmatpush1.bf16.msra.mxu0 %v599
      %760 = vmatprep.subr.bf16.mxu0 %v596
      %761 = vmatpush1.bf16.msra.mxu0 %v595
      %762 = vmatprep.subr.bf16.mxu0 %v592
      %763 = vmatpush1.bf16.msra.mxu0 %v591
      %764 = vmatprep.subr.bf16.mxu0 %v588
      %765 = vmatpush1.bf16.msra.mxu0 %v587
      %766 = vmatprep.subr.bf16.mxu0 %v584
      %767 = vmatpush1.bf16.msra.mxu0 %v583
      %768 = vmatprep.subr.bf16.mxu0 %v644
      %769 = vmatpush2.bf16.msra.mxu0 %v643
      %770 = vmatprep.subr.bf16.mxu0 %v640
      %771 = vmatpush2.bf16.msra.mxu0 %v639
      %772 = vmatprep.subr.bf16.mxu0 %v636
      %773 = vmatpush2.bf16.msra.mxu0 %v635
      %774 = vmatprep.subr.bf16.mxu0 %v632
      %775 = vmatpush2.bf16.msra.mxu0 %v631
      %776 = vmatprep.subr.bf16.mxu0 %v628
      %777 = vmatpush2.bf16.msra.mxu0 %v627
      %778 = vmatprep.subr.bf16.mxu0 %v624
      %779 = vmatpush2.bf16.msra.mxu0 %v623
      %780 = vmatprep.subr.bf16.mxu0 %v620
      %781 = vmatpush2.bf16.msra.mxu0 %v619
      %782 = vmatprep.subr.bf16.mxu0 %v616
      %783 = vmatpush2.bf16.msra.mxu0 %v615
      %784 = vmatprep.mubr.bf16.mxu0 %v302
      %785 = vmatmul.mubr.bf16.gmra.mxu0 %v301
      %v786 = vpop.f32.mrf.mxu0
      %v787 = vadd.f32 %v380, %v786
      %v788 = vpop.f32.mrf.mxu0
      %v789 = vadd.f32 %v384, %v788
      %v790 = vpop.f32.mrf.mxu0
      %v791 = vadd.f32 %v380, %v790
      %v792 = vpop.f32.mrf.mxu0
      %v793 = vadd.f32 %v384, %v792
      %794 = vdwg.mxu0
      %vm795 = vcmp.ge.f32.partialorder %v744, 0.0
      %vm796 = vcmp.ge.f32.partialorder %v746, 0.0
      %vm797 = vcmp.ge.f32.partialorder %v787, 0.0
      %vm798 = vcmp.ge.f32.partialorder %v789, 0.0
      %vm799 = vcmp.ge.f32.partialorder %v748, 0.0
      %vm800 = vcmp.ge.f32.partialorder %v750, 0.0
      %vm801 = vcmp.ge.f32.partialorder %v791, 0.0
      %vm802 = vcmp.ge.f32.partialorder %v793, 0.0
      %v803 = vmul.f32 %v744, 0.2
      %v804 = vmul.f32 %v746, 0.2
      %v805 = vmul.f32 %v787, 0.2
      %v806 = vmul.f32 %v789, 0.2
      %v807 = vmul.f32 %v748, 0.2
      %v808 = vmul.f32 %v750, 0.2
      %v809 = vmul.f32 %v791, 0.2
      %v810 = vmul.f32 %v793, 0.2
      %v811 = vsel %vm795, %v744, %v803
      %v812 = vsel %vm796, %v746, %v804
      %v813 = vsel %vm797, %v787, %v805
      %v814 = vsel %vm798, %v789, %v806
      %v815 = vsel %vm799, %v748, %v807
      %v816 = vsel %vm800, %v750, %v808
      %v817 = vsel %vm801, %v791, %v809
      %v818 = vsel %vm802, %v793, %v810
      %v819 = vadd.f32 %v811, %v815
      %v820 = vrot.slane %v819, 4
      %v821 = vadd.f32 %v819, %v820
      %v822 = vrot.slane %v821, 2
      %v823 = vadd.f32 %v821, %v822
      %v824 = vrot.slane %v823, 1
      %v825 = vadd.f32 %v823, %v824
      %v826 = vadd.f32 %v812, %v816
      %v827 = vrot.slane %v826, 4
      %v828 = vadd.f32 %v826, %v827
      %v829 = vrot.slane %v828, 2
      %v830 = vadd.f32 %v828, %v829
      %v831 = vrot.slane %v830, 1
      %v832 = vadd.f32 %v830, %v831
      %v833 = vadd.f32 %v813, %v817
      %v834 = vrot.slane %v833, 4
      %v835 = vadd.f32 %v833, %v834
      %v836 = vrot.slane %v835, 2
      %v837 = vadd.f32 %v835, %v836
      %v838 = vrot.slane %v837, 1
      %v839 = vadd.f32 %v837, %v838
      %v840 = vadd.f32 %v814, %v818
      %v841 = vrot.slane %v840, 4
      %v842 = vadd.f32 %v840, %v841
      %v843 = vrot.slane %v842, 2
      %v844 = vadd.f32 %v842, %v843
      %v845 = vrot.slane %v844, 1
      %v846 = vadd.f32 %v844, %v845
      %v851 = vcombine.low %v825, %v832
      %v852 = vcombine.low %v839, %v846
      %v854 = vunpack.c.l.s4 1966171168
      %v855 = vunpack.c.0.s8 %v854
      %v856 = vlaneseq
      %v857 = vshrl.u32 %v856, 7
      %v858 = vsub.s32 %v855, %v857
      %v859 = vrot.slane %v851, %v858
      %v861 = vunpack.c.l.s4 1966171168
      %v862 = vunpack.c.0.s8 %v861
      %v863 = vlaneseq
      %v864 = vshrl.u32 %v863, 7
      %v865 = vsub.s32 %v862, %v864
      %v866 = vrot.slane %v852, %v865
      %v867 = vcombine.low %v859, %v866
      %v869 = vunpack.c.l.s4 1966171168
      %v870 = vunpack.c.0.s8 %v869
      %v871 = vlaneseq
      %v872 = vshrl.u32 %v871, 7
      %v873 = vsub.s32 %v870, %v872
      %v874 = vrot.slane %v867, %v873
      %v876 = vlaneseq
      %vm877 = vcmp.ge.s32.totalorder %v876, 0
      %vm878 = vcmp.lt.s32.totalorder %v876, 512
      %vm879 = vmand %vm877, %vm878
      %880 = vst.msk [vmem:[%s224] ss:$4 sm:$0xf] %vm879, %v874
      %v881 = vmul.f32 %v811, %v811
      %v882 = vmul.f32 %v812, %v812
      %v883 = vmul.f32 %v813, %v813
      %v884 = vmul.f32 %v814, %v814
      %v885 = vmul.f32 %v815, %v815
      %v886 = vmul.f32 %v816, %v816
      %v887 = vmul.f32 %v817, %v817
      %v888 = vmul.f32 %v818, %v818
      %v889 = vadd.f32 %v881, %v885
      %v890 = vrot.slane %v889, 4
      %v891 = vadd.f32 %v889, %v890
      %v892 = vrot.slane %v891, 2
      %v893 = vadd.f32 %v891, %v892
      %v894 = vrot.slane %v893, 1
      %v895 = vadd.f32 %v893, %v894
      %v896 = vadd.f32 %v882, %v886
      %v897 = vrot.slane %v896, 4
      %v898 = vadd.f32 %v896, %v897
      %v899 = vrot.slane %v898, 2
      %v900 = vadd.f32 %v898, %v899
      %v901 = vrot.slane %v900, 1
      %v902 = vadd.f32 %v900, %v901
      %v903 = vadd.f32 %v883, %v887
      %v904 = vrot.slane %v903, 4
      %v905 = vadd.f32 %v903, %v904
      %v906 = vrot.slane %v905, 2
      %v907 = vadd.f32 %v905, %v906
      %v908 = vrot.slane %v907, 1
      %v909 = vadd.f32 %v907, %v908
      %v910 = vadd.f32 %v884, %v888
      %v911 = vrot.slane %v910, 4
      %v912 = vadd.f32 %v910, %v911
      %v913 = vrot.slane %v912, 2
      %v914 = vadd.f32 %v912, %v913
      %v915 = vrot.slane %v914, 1
      %v916 = vadd.f32 %v914, %v915
      %v921 = vcombine.low %v895, %v902
      %v922 = vcombine.low %v909, %v916
      %v924 = vunpack.c.l.s4 1966171168
      %v925 = vunpack.c.0.s8 %v924
      %v926 = vlaneseq
      %v927 = vshrl.u32 %v926, 7
      %v928 = vsub.s32 %v925, %v927
      %v929 = vrot.slane %v921, %v928
      %v931 = vunpack.c.l.s4 1966171168
      %v932 = vunpack.c.0.s8 %v931
      %v933 = vlaneseq
      %v934 = vshrl.u32 %v933, 7
      %v935 = vsub.s32 %v932, %v934
      %v936 = vrot.slane %v922, %v935
      %v937 = vcombine.low %v929, %v936
      %v939 = vunpack.c.l.s4 1966171168
      %v940 = vunpack.c.0.s8 %v939
      %v941 = vlaneseq
      %v942 = vshrl.u32 %v941, 7
      %v943 = vsub.s32 %v940, %v942
      %v944 = vrot.slane %v937, %v943
      %s946 = scalar_lea.vmem %s224, 1
      %947 = vst.msk [vmem:[%s946] ss:$4 sm:$0xf] %vm879, %v944
      %v948 = vmax.f32 %v811, %v815
      %v949 = vrot.slane %v948, 4
      %v950 = vmax.f32 %v948, %v949
      %v951 = vrot.slane %v950, 2
      %v952 = vmax.f32 %v950, %v951
      %v953 = vrot.slane %v952, 1
      %v954 = vmax.f32 %v952, %v953
      %v955 = vmax.f32 %v812, %v816
      %v956 = vrot.slane %v955, 4
      %v957 = vmax.f32 %v955, %v956
      %v958 = vrot.slane %v957, 2
      %v959 = vmax.f32 %v957, %v958
      %v960 = vrot.slane %v959, 1
      %v961 = vmax.f32 %v959, %v960
      %v962 = vmax.f32 %v813, %v817
      %v963 = vrot.slane %v962, 4
      %v964 = vmax.f32 %v962, %v963
      %v965 = vrot.slane %v964, 2
      %v966 = vmax.f32 %v964, %v965
      %v967 = vrot.slane %v966, 1
      %v968 = vmax.f32 %v966, %v967
      %v969 = vmax.f32 %v814, %v818
      %v970 = vrot.slane %v969, 4
      %v971 = vmax.f32 %v969, %v970
      %v972 = vrot.slane %v971, 2
      %v973 = vmax.f32 %v971, %v972
      %v974 = vrot.slane %v973, 1
      %v975 = vmax.f32 %v973, %v974
      %v980 = vcombine.low %v954, %v961
      %v981 = vcombine.low %v968, %v975
      %v983 = vunpack.c.l.s4 1966171168
      %v984 = vunpack.c.0.s8 %v983
      %v985 = vlaneseq
      %v986 = vshrl.u32 %v985, 7
      %v987 = vsub.s32 %v984, %v986
      %v988 = vrot.slane %v980, %v987
      %v990 = vunpack.c.l.s4 1966171168
      %v991 = vunpack.c.0.s8 %v990
      %v992 = vlaneseq
      %v993 = vshrl.u32 %v992, 7
      %v994 = vsub.s32 %v991, %v993
      %v995 = vrot.slane %v981, %v994
      %v996 = vcombine.low %v988, %v995
      %v998 = vunpack.c.l.s4 1966171168
      %v999 = vunpack.c.0.s8 %v998
      %v1000 = vlaneseq
      %v1001 = vshrl.u32 %v1000, 7
      %v1002 = vsub.s32 %v999, %v1001
      %v1003 = vrot.slane %v996, %v1002
      %s1005 = scalar_lea.vmem %s224, 2
      %1006 = vst.msk [vmem:[%s1005] ss:$4 sm:$0xf] %vm879, %v1003
      %v1007 = vmin.f32 %v811, %v815
      %v1008 = vrot.slane %v1007, 4
      %v1009 = vmin.f32 %v1007, %v1008
      %v1010 = vrot.slane %v1009, 2
      %v1011 = vmin.f32 %v1009, %v1010
      %v1012 = vrot.slane %v1011, 1
      %v1013 = vmin.f32 %v1011, %v1012
      %v1014 = vmin.f32 %v812, %v816
      %v1015 = vrot.slane %v1014, 4
      %v1016 = vmin.f32 %v1014, %v1015
      %v1017 = vrot.slane %v1016, 2
      %v1018 = vmin.f32 %v1016, %v1017
      %v1019 = vrot.slane %v1018, 1
      %v1020 = vmin.f32 %v1018, %v1019
      %v1021 = vmin.f32 %v813, %v817
      %v1022 = vrot.slane %v1021, 4
      %v1023 = vmin.f32 %v1021, %v1022
      %v1024 = vrot.slane %v1023, 2
      %v1025 = vmin.f32 %v1023, %v1024
      %v1026 = vrot.slane %v1025, 1
      %v1027 = vmin.f32 %v1025, %v1026
      %v1028 = vmin.f32 %v814, %v818
      %v1029 = vrot.slane %v1028, 4
      %v1030 = vmin.f32 %v1028, %v1029
      %v1031 = vrot.slane %v1030, 2
      %v1032 = vmin.f32 %v1030, %v1031
      %v1033 = vrot.slane %v1032, 1
      %v1034 = vmin.f32 %v1032, %v1033
      %v1039 = vcombine.low %v1013, %v1020
      %v1040 = vcombine.low %v1027, %v1034
      %v1042 = vunpack.c.l.s4 1966171168
      %v1043 = vunpack.c.0.s8 %v1042
      %v1044 = vlaneseq
      %v1045 = vshrl.u32 %v1044, 7
      %v1046 = vsub.s32 %v1043, %v1045
      %v1047 = vrot.slane %v1039, %v1046
      %v1049 = vunpack.c.l.s4 1966171168
      %v1050 = vunpack.c.0.s8 %v1049
      %v1051 = vlaneseq
      %v1052 = vshrl.u32 %v1051, 7
      %v1053 = vsub.s32 %v1050, %v1052
      %v1054 = vrot.slane %v1040, %v1053
      %v1055 = vcombine.low %v1047, %v1054
      %v1057 = vunpack.c.l.s4 1966171168
      %v1058 = vunpack.c.0.s8 %v1057
      %v1059 = vlaneseq
      %v1060 = vshrl.u32 %v1059, 7
      %v1061 = vsub.s32 %v1058, %v1060
      %v1062 = vrot.slane %v1055, %v1061
      %s1064 = scalar_lea.vmem %s224, 3
      %1065 = vst.msk [vmem:[%s1064] ss:$4 sm:$0xf] %vm879, %v1062
      %p1066 = scmp.lt.s32.totalorder %s16, 1
      %s1067 = scalar_select %p1066, %s16, 1
      %s1068 = smul.addr %s1067, 4
      %s1069 = smul.addr %s1068, 4
      %s1070 = scalar_lea.vmem %s5, %s1069
      // Predicated region
      $region41: #{motion_detect_module.7} parent=39 // pred_check
        %p1071 = pneg %p144
      $region42: #{motion_detect_module.7} parent=39 // pred_check_branch
        %1073 = sbr.rel (%p1071) target = $region44
      $region43: #{motion_detect_module.7} parent=39 // pred_region
        _
      $region44: #{motion_detect_module.7} parent=39 // pred_fallthru
        _
    $region40: #{motion_detect_module.7} parent=5 // pred_fallthru
      _
    %p1074 = scmp.le.s32.totalorder 2, %s11
    // Predicated region
    $region45: #{motion_detect_module.7} parent=5 // pred_check
      %p1075 = pneg %p1074
    $region46: #{motion_detect_module.7} parent=5 // pred_check_branch
      %1077 = sbr.rel (%p1075) target = $region48
    $region47: #{motion_detect_module.7} parent=5 // pred_region
      %s1078 = ssub.s32 %s11, 2
      // Predicated region
      $region49: #{motion_detect_module.7} parent=47 // pred_check
        %p1079 = pneg %p150
      $region50: #{motion_detect_module.7} parent=47 // pred_check_branch
        %1081 = sbr.rel (%p1079) target = $region52
      $region51: #{motion_detect_module.7} parent=47 // pred_region
        %p1082 = scmp.lt.s32.totalorder %s17, 1
        %s1083 = scalar_select %p1082, %s17, 1
        %s1084 = smul.addr %s1083, 4
        %s1085 = smul.addr %s1084, 4
        %s1086 = scalar_lea.vmem %s5, %s1085
      $region52: #{motion_detect_module.7} parent=47 // pred_fallthru
        _
    $region48: #{motion_detect_module.7} parent=5 // pred_fallthru
      _
  $region6: #{motion_detect_module.7} parent=0 // loop_footer
    %s15 = sadd.s32 1, %s11
  $region7: #{motion_detect_module.7} parent=0 // loop_footer_branch
    %10 = sbr.rel target = $region3
  $region8: #{motion_detect_module.7} parent=0 // loop_exit
    _

</llo_original>
